<compile_context>
chip_gen: v7x
topology: tpu7x:2x2x1
jax: 0.10.0
libtpu: 0.0.40
codegen_flags: <defaults>
</compile_context>

<pallas_src>
import jax
import jax.numpy as jnp
from jax.experimental import pallas as pl
from jax.experimental.pallas import tpu as pltpu


# ------------- kernel 1: conv stack (channel-major) + max-pool ------------- #
def _conv_pool_kernel(x_ref,                     # (1, K, TN)   f32
                      w1t_ref, s1_ref, b1_ref,   # (64, K) bf16, (64, 1) f32 x2
                      w2t_ref, s2_ref, b2_ref,   # (128, 64) bf16, (128, 1) f32 x2
                      w3t_ref, s3_ref, b3_ref,   # (1024, 128) bf16, (1024, 1) f32 x2
                      g_ref,                     # (1, 1024, 1) f32  (pooled out)
                      acc_ref):                  # (1024, 1)    f32 scratch
    nt = pl.program_id(1)

    @pl.when(nt == 0)
    def _():
        acc_ref[...] = jnp.full(acc_ref.shape, -jnp.inf, dtype=acc_ref.dtype)

    x = x_ref[0].astype(jnp.bfloat16)                               # (K, TN)

    # conv1 -> bn1 -> relu   (channel-major: out = W^T @ x, f32 accumulate)
    h = jnp.dot(w1t_ref[...], x, preferred_element_type=jnp.float32)
    h = jnp.maximum(h * s1_ref[...] + b1_ref[...], 0.0)             # (64, TN)
    # conv2 -> bn2 -> relu
    h = jnp.dot(w2t_ref[...], h.astype(jnp.bfloat16),
                preferred_element_type=jnp.float32)
    h = jnp.maximum(h * s2_ref[...] + b2_ref[...], 0.0)             # (128, TN)
    # conv3 -> bn3 -> relu
    h = jnp.dot(w3t_ref[...], h.astype(jnp.bfloat16),
                preferred_element_type=jnp.float32)
    h = jnp.maximum(h * s3_ref[...] + b3_ref[...], 0.0)             # (1024, TN)

    # running global max over the point tiles (== torch.max(x, 2))
    acc_ref[...] = jnp.maximum(acc_ref[...],
                               jnp.max(h, axis=1, keepdims=True))

    @pl.when(nt == pl.num_programs(1) - 1)
    def _():
        g_ref[0] = acc_ref[...]


# ----------------------- kernel 2: batched FC head ------------------------- #
def _head_kernel(g_ref,                          # (B, 1024) bf16
                 wf1_ref, sf1_ref, bf1_ref,      # (1024, 512) bf16, (1, 512) f32 x2
                 wf2_ref, sf2_ref, bf2_ref,      # (512, 256) bf16, (1, 256) f32 x2
                 wf3_ref, bf3_ref,               # (256, K*K) bf16, (1, K*K) f32 (+iden)
                 out_ref):                       # (B, K*K)   f32
    # fc1 -> bn4 -> relu
    f = jnp.dot(g_ref[...], wf1_ref[...], preferred_element_type=jnp.float32)
    f = jnp.maximum(f * sf1_ref[...] + bf1_ref[...], 0.0)           # (B, 512)
    # fc2 -> bn5 -> relu
    f = jnp.dot(f.astype(jnp.bfloat16), wf2_ref[...],
                preferred_element_type=jnp.float32)
    f = jnp.maximum(f * sf2_ref[...] + bf2_ref[...], 0.0)           # (B, 256)
    # fc3 (+ identity, folded into the bias)
    f = jnp.dot(f.astype(jnp.bfloat16), wf3_ref[...],
                preferred_element_type=jnp.float32)
    out_ref[...] = f + bf3_ref[...]                                 # (B, K*K)


# --------------------------------- wrapper --------------------------------- #
def stnkd_forward(x_bkn, params, *, tile_n=None):
    """x_bkn: (B, K, N) float32 (PyTorch Conv1d layout).  Returns (B, K, K)."""
    (w1t, s1, b1, w2t, s2, b2, w3t, s3, b3,
     wf1, sf1, bf1, wf2, sf2, bf2, wf3, bf3) = params
    B, K, N = x_bkn.shape

    if tile_n is None:
        # (TN, 1024) f32 tile of ~2 MiB keeps the pipelined working set well
        # inside the default scoped VMEM on v5e/v6e (32/128 MiB) and v7x (32/64).
        tile_n = min(N, 512)
    assert N % tile_n == 0, "N must be a multiple of tile_n"
    n_tiles = N // tile_n

    conv_params = (w1t, s1, b1, w2t, s2, b2, w3t, s3, b3)
    conv_in_specs = [pl.BlockSpec((1, K, tile_n), lambda b, n: (b, 0, n))]
    conv_in_specs += [pl.BlockSpec(p.shape, lambda b, n: (0, 0))
                      for p in conv_params]

    pooled = pl.pallas_call(
        _conv_pool_kernel,
        out_shape=jax.ShapeDtypeStruct((B, 1024, 1), jnp.float32),
        grid=(B, n_tiles),
        in_specs=conv_in_specs,
        out_specs=pl.BlockSpec((1, 1024, 1), lambda b, n: (b, 0, 0)),
        scratch_shapes=[pltpu.VMEM((1024, 1), jnp.float32)],
        compiler_params=pltpu.CompilerParams(
            dimension_semantics=("parallel", "arbitrary")),
    )(x_bkn, *conv_params)

    g = pooled.reshape(B, 1024).astype(jnp.bfloat16)

    head_params = (wf1, sf1, bf1, wf2, sf2, bf2, wf3, bf3)
    head_in_specs = [pl.BlockSpec(g.shape, lambda i: (0, 0))]
    head_in_specs += [pl.BlockSpec(p.shape, lambda i: (0, 0))
                      for p in head_params]

    out = pl.pallas_call(
        _head_kernel,
        out_shape=jax.ShapeDtypeStruct((B, K * K), jnp.float32),
        grid=(1,),
        in_specs=head_in_specs,
        out_specs=pl.BlockSpec((B, K * K), lambda i: (0, 0)),
    )(g, *head_params)
    return out.reshape(B, K, K)


# ------------------------------ parameter setup ----------------------------- #
def init_params(key, K):
    """Eval-mode parameters, already BN-folded and laid out for the kernels."""
    eps = 1e-5
    ks = iter(jax.random.split(key, 40))

    def linear(fan_in, fan_out):
        w = jax.random.normal(next(ks), (fan_in, fan_out), jnp.float32)
        w = w / jnp.sqrt(jnp.float32(fan_in))
        b = 0.1 * jax.random.normal(next(ks), (1, fan_out), jnp.float32)
        return w, b

    def bn(c):
        gamma = 1.0 + 0.1 * jax.random.normal(next(ks), (1, c), jnp.float32)
        beta = 0.1 * jax.random.normal(next(ks), (1, c), jnp.float32)
        mean = 0.1 * jax.random.normal(next(ks), (1, c), jnp.float32)
        var = 1.0 + 0.1 * jax.random.uniform(next(ks), (1, c), jnp.float32)
        return gamma, beta, mean, var

    def fold(lin_b, gamma, beta, mean, var):
        scale = gamma / jnp.sqrt(var + eps)
        bias = (lin_b - mean) * scale + beta
        return scale, bias

    params = []
    # conv1/2/3 + bn1/2/3: channel-major weights (out, in) bf16; (out, 1) f32
    # scale/bias columns (broadcast over the TN lane axis in the kernel).
    for fan_in, fan_out in ((K, 64), (64, 128), (128, 1024)):
        w, b = linear(fan_in, fan_out)
        s, bb = fold(b, *bn(fan_out))
        params += [w.T.astype(jnp.bfloat16),
                   s.reshape(fan_out, 1), bb.reshape(fan_out, 1)]
    # fc1 + bn4, fc2 + bn5: (in, out) bf16 weights; (1, out) f32 scale/bias.
    for fan_in, fan_out in ((1024, 512), (512, 256)):
        w, b = linear(fan_in, fan_out)
        s, bb = fold(b, *bn(fan_out))
        params += [w.astype(jnp.bfloat16), s, bb]
    # fc3 (no BN); identity matrix folded into the bias.
    wf3, bf3 = linear(256, K * K)
    iden = jnp.eye(K, dtype=jnp.float32).reshape(1, K * K)
    params += [wf3.astype(jnp.bfloat16), bf3 + iden]
    return tuple(params)


# ----------------------------- plain-JAX reference -------------------------- #
def stnkd_reference(x_bkn, params):
    """Mirrors the kernel numerics: bf16 matmul inputs, f32 accumulate/affine."""
    (w1t, s1, b1, w2t, s2, b2, w3t, s3, b3,
     wf1, sf1, bf1, wf2, sf2, bf2, wf3, bf3) = params
    B, K, N = x_bkn.shape

    def mm(a, w):
        return jnp.einsum('bnc,cd->bnd', a.astype(jnp.bfloat16), w,
                          preferred_element_type=jnp.float32)

    def fm(a, w):
        return jnp.dot(a.astype(jnp.bfloat16), w,
                       preferred_element_type=jnp.float32)

    x = jnp.transpose(x_bkn, (0, 2, 1))                       # (B, N, K)
    h = jnp.maximum(mm(x, w1t.T) * s1.T + b1.T, 0.0)          # (B, N, 64)
    h = jnp.maximum(mm(h, w2t.T) * s2.T + b2.T, 0.0)          # (B, N, 128)
    h = jnp.maximum(mm(h, w3t.T) * s3.T + b3.T, 0.0)          # (B, N, 1024)
    g = jnp.max(h, axis=1)                                    # (B, 1024)
    f = jnp.maximum(fm(g, wf1) * sf1 + bf1, 0.0)              # (B, 512)
    f = jnp.maximum(fm(f, wf2) * sf2 + bf2, 0.0)              # (B, 256)
    f = fm(f, wf3) + bf3                                      # (B, K*K) (iden folded)
    return f.reshape(B, K, K)


# ----------------------------------- main ----------------------------------- #
if __name__ == "__main__":
    B, K, N = 2, 16, 256        # small STNkd(k=16), 256 points per cloud
    TILE_N = 128                # 2 point tiles -> exercises the running max

    key = jax.random.PRNGKey(0)
    kx, kp = jax.random.split(key)

    # PyTorch Conv1d layout (B, K, N) -- consumed directly, no wrapper transpose.
    x_bkn = jax.random.normal(kx, (B, K, N), jnp.float32)
    params = init_params(kp, K)

    out = stnkd_forward(x_bkn, params, tile_n=TILE_N)
    out = jax.block_until_ready(out)

    ref = stnkd_reference(x_bkn, params)
    assert out.shape == (B, K, K)
    max_err = float(jnp.max(jnp.abs(out - ref)))
    assert jnp.allclose(out, ref, rtol=2e-2, atol=2e-2), max_err

    print("KERNEL_OK")
</pallas_src>

<mosaic_0001>
module attributes {stable_mosaic.version = 11 : i64} {
  func.func @_conv_pool_kernel(%arg0: i32, %arg1: i32, %arg2: memref<1x16x128xf32, #tpu.memory_space<vmem>>, %arg3: memref<64x16xbf16, #tpu.memory_space<vmem>>, %arg4: memref<64x1xf32, #tpu.memory_space<vmem>>, %arg5: memref<64x1xf32, #tpu.memory_space<vmem>>, %arg6: memref<128x64xbf16, #tpu.memory_space<vmem>>, %arg7: memref<128x1xf32, #tpu.memory_space<vmem>>, %arg8: memref<128x1xf32, #tpu.memory_space<vmem>>, %arg9: memref<1024x128xbf16, #tpu.memory_space<vmem>>, %arg10: memref<1024x1xf32, #tpu.memory_space<vmem>>, %arg11: memref<1024x1xf32, #tpu.memory_space<vmem>>, %arg12: memref<1x1024x1xf32, #tpu.memory_space<vmem>>, %arg13: memref<1024x1xf32, #tpu.memory_space<vmem>>) attributes {dimension_semantics = [#tpu.dimension_semantics<parallel>, #tpu.dimension_semantics<arbitrary>], iteration_bounds = array<i64: 2, 2>, scalar_prefetch = 0 : i64, scratch_operands = 1 : i64, tpu.core_type = #tpu.core_type<tc>, window_params = [{transform_indices = @transform_0, window_bounds = array<i64: 1, 16, 128>}, {pipeline_mode = #tpu.pipeline_mode<synchronous>, transform_indices = @transform_1, window_bounds = array<i64: 64, 16>}, {pipeline_mode = #tpu.pipeline_mode<synchronous>, transform_indices = @transform_2, window_bounds = array<i64: 64, 1>}, {pipeline_mode = #tpu.pipeline_mode<synchronous>, transform_indices = @transform_3, window_bounds = array<i64: 64, 1>}, {pipeline_mode = #tpu.pipeline_mode<synchronous>, transform_indices = @transform_4, window_bounds = array<i64: 128, 64>}, {pipeline_mode = #tpu.pipeline_mode<synchronous>, transform_indices = @transform_5, window_bounds = array<i64: 128, 1>}, {pipeline_mode = #tpu.pipeline_mode<synchronous>, transform_indices = @transform_6, window_bounds = array<i64: 128, 1>}, {pipeline_mode = #tpu.pipeline_mode<synchronous>, transform_indices = @transform_7, window_bounds = array<i64: 1024, 128>}, {pipeline_mode = #tpu.pipeline_mode<synchronous>, transform_indices = @transform_8, window_bounds = array<i64: 1024, 1>}, {pipeline_mode = #tpu.pipeline_mode<synchronous>, transform_indices = @transform_9, window_bounds = array<i64: 1024, 1>}, {transform_indices = @transform_10, window_bounds = array<i64: 1, 1024, 1>}]} {
    %c0_i32 = arith.constant 0 : i32
    %0 = arith.cmpi eq, %arg1, %c0_i32 : i32
    %1 = arith.extui %0 : i1 to i32
    %c0_i32_0 = arith.constant 0 : i32
    %2 = arith.cmpi ne, %1, %c0_i32_0 : i32
    scf.if %2 {
      %cst_32 = arith.constant 0xFF800000 : f32
      %46 = vector.broadcast %cst_32 : f32 to vector<1024x1xf32>
      %c0_33 = arith.constant 0 : index
      %c0_34 = arith.constant 0 : index
      %47 = vector.load %arg13[%c0_33, %c0_34] : memref<1024x1xf32, #tpu.memory_space<vmem>>, vector<1024x1xf32>
      tpu.vector_store %arg13[%c0_33, %c0_34], %46 {strides = array<i32>} : memref<1024x1xf32, #tpu.memory_space<vmem>>, vector<1024x1xf32>,
    } else {
    }
    %c0 = arith.constant 0 : index
    %c0_1 = arith.constant 0 : index
    %c0_2 = arith.constant 0 : index
    %3 = vector.load %arg2[%c0, %c0_1, %c0_2] : memref<1x16x128xf32, #tpu.memory_space<vmem>>, vector<1x16x128xf32>
    %4 = vector.shape_cast %3 : vector<1x16x128xf32> to vector<16x128xf32>
    %5 = arith.truncf %4 : vector<16x128xf32> to vector<16x128xbf16>
    %c0_3 = arith.constant 0 : index
    %c0_4 = arith.constant 0 : index
    %6 = vector.load %arg3[%c0_3, %c0_4] : memref<64x16xbf16, #tpu.memory_space<vmem>>, vector<64x16xbf16>
    %cst = arith.constant dense<0.000000e+00> : vector<64x128xf32>
    %7 = tpu.matmul %6, %5, %cst {dimension_numbers = #tpu.dot_dimension_numbers<[1], [0], [0], [1], [0, 0, 1, 1], [], []>} : vector<64x16xbf16>, vector<16x128xbf16>, vector<64x128xf32> -> vector<64x128xf32>
    %c0_5 = arith.constant 0 : index
    %c0_6 = arith.constant 0 : index
    %8 = vector.load %arg4[%c0_5, %c0_6] : memref<64x1xf32, #tpu.memory_space<vmem>>, vector<64x1xf32>
    %9 = vector.broadcast %8 : vector<64x1xf32> to vector<64x128xf32>
    %10 = arith.mulf %7, %9 : vector<64x128xf32>
    %c0_7 = arith.constant 0 : index
    %c0_8 = arith.constant 0 : index
    %11 = vector.load %arg5[%c0_7, %c0_8] : memref<64x1xf32, #tpu.memory_space<vmem>>, vector<64x1xf32>
    %12 = vector.broadcast %11 : vector<64x1xf32> to vector<64x128xf32>
    %13 = arith.addf %10, %12 : vector<64x128xf32>
    %cst_9 = arith.constant 0.000000e+00 : f32
    %14 = vector.broadcast %cst_9 : f32 to vector<64x128xf32>
    %15 = arith.maximumf %13, %14 : vector<64x128xf32>
    %c0_10 = arith.constant 0 : index
    %c0_11 = arith.constant 0 : index
    %16 = vector.load %arg6[%c0_10, %c0_11] : memref<128x64xbf16, #tpu.memory_space<vmem>>, vector<128x64xbf16>
    %17 = arith.truncf %15 : vector<64x128xf32> to vector<64x128xbf16>
    %cst_12 = arith.constant dense<0.000000e+00> : vector<128x128xf32>
    %18 = tpu.matmul %16, %17, %cst_12 {dimension_numbers = #tpu.dot_dimension_numbers<[1], [0], [0], [1], [0, 0, 1, 1], [], []>} : vector<128x64xbf16>, vector<64x128xbf16>, vector<128x128xf32> -> vector<128x128xf32>
    %c0_13 = arith.constant 0 : index
    %c0_14 = arith.constant 0 : index
    %19 = vector.load %arg7[%c0_13, %c0_14] : memref<128x1xf32, #tpu.memory_space<vmem>>, vector<128x1xf32>
    %20 = vector.broadcast %19 : vector<128x1xf32> to vector<128x128xf32>
    %21 = arith.mulf %18, %20 : vector<128x128xf32>
    %c0_15 = arith.constant 0 : index
    %c0_16 = arith.constant 0 : index
    %22 = vector.load %arg8[%c0_15, %c0_16] : memref<128x1xf32, #tpu.memory_space<vmem>>, vector<128x1xf32>
    %23 = vector.broadcast %22 : vector<128x1xf32> to vector<128x128xf32>
    %24 = arith.addf %21, %23 : vector<128x128xf32>
    %cst_17 = arith.constant 0.000000e+00 : f32
    %25 = vector.broadcast %cst_17 : f32 to vector<128x128xf32>
    %26 = arith.maximumf %24, %25 : vector<128x128xf32>
    %c0_18 = arith.constant 0 : index
    %c0_19 = arith.constant 0 : index
    %27 = vector.load %arg9[%c0_18, %c0_19] : memref<1024x128xbf16, #tpu.memory_space<vmem>>, vector<1024x128xbf16>
    %28 = arith.truncf %26 : vector<128x128xf32> to vector<128x128xbf16>
    %cst_20 = arith.constant dense<0.000000e+00> : vector<1024x128xf32>
    %29 = tpu.matmul %27, %28, %cst_20 {dimension_numbers = #tpu.dot_dimension_numbers<[1], [0], [0], [1], [0, 0, 1, 1], [], []>} : vector<1024x128xbf16>, vector<128x128xbf16>, vector<1024x128xf32> -> vector<1024x128xf32>
    %c0_21 = arith.constant 0 : index
    %c0_22 = arith.constant 0 : index
    %30 = vector.load %arg10[%c0_21, %c0_22] : memref<1024x1xf32, #tpu.memory_space<vmem>>, vector<1024x1xf32>
    %31 = vector.broadcast %30 : vector<1024x1xf32> to vector<1024x128xf32>
    %32 = arith.mulf %29, %31 : vector<1024x128xf32>
    %c0_23 = arith.constant 0 : index
    %c0_24 = arith.constant 0 : index
    %33 = vector.load %arg11[%c0_23, %c0_24] : memref<1024x1xf32, #tpu.memory_space<vmem>>, vector<1024x1xf32>
    %34 = vector.broadcast %33 : vector<1024x1xf32> to vector<1024x128xf32>
    %35 = arith.addf %32, %34 : vector<1024x128xf32>
    %cst_25 = arith.constant 0.000000e+00 : f32
    %36 = vector.broadcast %cst_25 : f32 to vector<1024x128xf32>
    %37 = arith.maximumf %35, %36 : vector<1024x128xf32>
    %c0_26 = arith.constant 0 : index
    %c0_27 = arith.constant 0 : index
    %38 = vector.load %arg13[%c0_26, %c0_27] : memref<1024x1xf32, #tpu.memory_space<vmem>>, vector<1024x1xf32>
    %cst_28 = arith.constant dense<0xFF800000> : vector<1024xf32>
    %39 = vector.multi_reduction <maximumf>, %37, %cst_28 [1] : vector<1024x128xf32> to vector<1024xf32>
    %40 = vector.shape_cast %39 : vector<1024xf32> to vector<1024x1xf32>
    %41 = arith.maximumf %38, %40 : vector<1024x1xf32>
    %c0_29 = arith.constant 0 : index
    %c0_30 = arith.constant 0 : index
    %42 = vector.load %arg13[%c0_29, %c0_30] : memref<1024x1xf32, #tpu.memory_space<vmem>>, vector<1024x1xf32>
    tpu.vector_store %arg13[%c0_29, %c0_30], %41 {strides = array<i32>} : memref<1024x1xf32, #tpu.memory_space<vmem>>, vector<1024x1xf32>,
    %c1_i32 = arith.constant 1 : i32
    %43 = arith.cmpi eq, %arg1, %c1_i32 : i32
    %44 = arith.extui %43 : i1 to i32
    %c0_i32_31 = arith.constant 0 : i32
    %45 = arith.cmpi ne, %44, %c0_i32_31 : i32
    scf.if %45 {
      %c0_32 = arith.constant 0 : index
      %c0_33 = arith.constant 0 : index
      %46 = vector.load %arg13[%c0_32, %c0_33] : memref<1024x1xf32, #tpu.memory_space<vmem>>, vector<1024x1xf32>
      %c0_34 = arith.constant 0 : index
      %c0_35 = arith.constant 0 : index
      %c0_36 = arith.constant 0 : index
      %47 = vector.load %arg12[%c0_34, %c0_35, %c0_36] : memref<1x1024x1xf32, #tpu.memory_space<vmem>>, vector<1x1024x1xf32>
      %48 = vector.shape_cast %47 : vector<1x1024x1xf32> to vector<1024x1xf32>
      %49 = vector.shape_cast %46 : vector<1024x1xf32> to vector<1x1024x1xf32>
      tpu.vector_store %arg12[%c0_34, %c0_35, %c0_36], %49 {strides = array<i32>} : memref<1x1024x1xf32, #tpu.memory_space<vmem>>, vector<1x1024x1xf32>,
    } else {
    }
    return
  }
  func.func @transform_0(%arg0: i32, %arg1: i32) -> (i32, i32, i32) {
    %c0_i32 = arith.constant 0 : i32
    %c0_i32_0 = arith.constant 0 : i32
    return %arg0, %c0_i32, %arg1 : i32, i32, i32
  }
  func.func @transform_1(%arg0: i32, %arg1: i32) -> (i32, i32) {
    %c0_i32 = arith.constant 0 : i32
    %c0_i32_0 = arith.constant 0 : i32
    %c0_i32_1 = arith.constant 0 : i32
    return %c0_i32, %c0_i32_0 : i32, i32
  }
  func.func @transform_2(%arg0: i32, %arg1: i32) -> (i32, i32) {
    %c0_i32 = arith.constant 0 : i32
    %c0_i32_0 = arith.constant 0 : i32
    %c0_i32_1 = arith.constant 0 : i32
    return %c0_i32, %c0_i32_0 : i32, i32
  }
  func.func @transform_3(%arg0: i32, %arg1: i32) -> (i32, i32) {
    %c0_i32 = arith.constant 0 : i32
    %c0_i32_0 = arith.constant 0 : i32
    %c0_i32_1 = arith.constant 0 : i32
    return %c0_i32, %c0_i32_0 : i32, i32
  }
  func.func @transform_4(%arg0: i32, %arg1: i32) -> (i32, i32) {
    %c0_i32 = arith.constant 0 : i32
    %c0_i32_0 = arith.constant 0 : i32
    %c0_i32_1 = arith.constant 0 : i32
    return %c0_i32, %c0_i32_0 : i32, i32
  }
  func.func @transform_5(%arg0: i32, %arg1: i32) -> (i32, i32) {
    %c0_i32 = arith.constant 0 : i32
    %c0_i32_0 = arith.constant 0 : i32
    %c0_i32_1 = arith.constant 0 : i32
    return %c0_i32, %c0_i32_0 : i32, i32
  }
  func.func @transform_6(%arg0: i32, %arg1: i32) -> (i32, i32) {
    %c0_i32 = arith.constant 0 : i32
    %c0_i32_0 = arith.constant 0 : i32
    %c0_i32_1 = arith.constant 0 : i32
    return %c0_i32, %c0_i32_0 : i32, i32
  }
  func.func @transform_7(%arg0: i32, %arg1: i32) -> (i32, i32) {
    %c0_i32 = arith.constant 0 : i32
    %c0_i32_0 = arith.constant 0 : i32
    %c0_i32_1 = arith.constant 0 : i32
    return %c0_i32, %c0_i32_0 : i32, i32
  }
  func.func @transform_8(%arg0: i32, %arg1: i32) -> (i32, i32) {
    %c0_i32 = arith.constant 0 : i32
    %c0_i32_0 = arith.constant 0 : i32
    %c0_i32_1 = arith.constant 0 : i32
    return %c0_i32, %c0_i32_0 : i32, i32
  }
  func.func @transform_9(%arg0: i32, %arg1: i32) -> (i32, i32) {
    %c0_i32 = arith.constant 0 : i32
    %c0_i32_0 = arith.constant 0 : i32
    %c0_i32_1 = arith.constant 0 : i32
    return %c0_i32, %c0_i32_0 : i32, i32
  }
  func.func @transform_10(%arg0: i32, %arg1: i32) -> (i32, i32, i32) {
    %c0_i32 = arith.constant 0 : i32
    %c0_i32_0 = arith.constant 0 : i32
    %c0_i32_1 = arith.constant 0 : i32
    return %arg0, %c0_i32, %c0_i32_0 : i32, i32, i32
  }
}

</mosaic_0001>

<llo_original>
// kernel: tpu_custom_call.1
$region0: #{tpu_custom_call.1}
  #allocation0 [shape = 'u32[]', space=smem, size = 0x4, offset = 0x4, fixed_abs, tag = 'smem constant byte address 0x4 - core index']
  #allocation1 [shape = 'u32[144,128]{1,0:T(1,128)}', space=vmem, size = 0x12000, scoped, tag = 'internal scratch']
  #allocation2 [shape = 'f32[1024,1]{1,0:T(8,128)}', space=vmem, size = 0x80000, scoped, tag = 'scratch operand']
  %s0 = inlined_call_operand.vmem [shape: f32[2,16,256], index: 0, kind: input, shape index: {}]
  %s1 = inlined_call_operand.vmem [shape: bf16[64,16], index: 1, kind: input, shape index: {}]
  %s2 = inlined_call_operand.vmem [shape: f32[64,1], index: 2, kind: input, shape index: {}]
  %s3 = inlined_call_operand.vmem [shape: f32[64,1], index: 3, kind: input, shape index: {}]
  %s4 = inlined_call_operand.vmem [shape: bf16[128,64], index: 4, kind: input, shape index: {}]
  %s5 = inlined_call_operand.vmem [shape: f32[128,1], index: 5, kind: input, shape index: {}]
  %s6 = inlined_call_operand.vmem [shape: f32[128,1], index: 6, kind: input, shape index: {}]
  %s7 = inlined_call_operand.vmem [shape: bf16[1024,128], index: 7, kind: input, shape index: {}]
  %s8 = inlined_call_operand.vmem [shape: f32[1024,1], index: 8, kind: input, shape index: {}]
  %s9 = inlined_call_operand.vmem [shape: f32[1024,1], index: 9, kind: input, shape index: {}]
  %s10 = inlined_call_operand.vmem [shape: f32[2,1024,1], index: 10, kind: output, shape index: {}]
  %s11 = sld [smem:[#allocation0]]
  $region119: #{tpu_custom_call.1} parent=0
    _
  %s13 = ssub.s32 1, %s11
  %s14 = scalar_select 0, %s13, %s11
  $region1: #{tpu_custom_call.1} parent=0
    #allocation3 [shape = 'u8[16384]{0}', space=vmem, size = 0x4000, scoped, tag = 'input window, operand 0']
    loop: start=0, step=1, limit=6
    $region2: #{tpu_custom_call.1} parent=1 // loop_pre_header
      _
    $region3: #{tpu_custom_call.1} parent=1 // loop_header
      %s16 = sphi 0, %s20
      %p17 = scmp.ge.s32.totalorder %s16, 6
      %s23 = sphi 0, %s35
      %s24 = sphi 0, %s31
      %s25 = sphi 0, %s23
      %s26 = sphi 0, %s24
      %s27 = sphi 0, %s25
      %s28 = sphi 0, %s26
      %s40 = sphi 0, %s42
      %s43 = sphi 0, %s40
      %s44 = sphi 0, %s43
      %s60 = sphi 0, %s44
      %s64 = sphi 0, %s64
      %s66 = sphi 0, %s64
      %s67 = sphi 0, %s66
      %s81 = sphi 0, %s67
      %s85 = sphi 0, %s85
      %s87 = sphi 0, %s85
      %s88 = sphi 0, %s87
      %s102 = sphi 0, %s88
      %s106 = sphi 0, %s106
      %s108 = sphi 0, %s106
      %s109 = sphi 0, %s108
      %s123 = sphi 0, %s109
      %s127 = sphi 0, %s127
      %s129 = sphi 0, %s127
      %s130 = sphi 0, %s129
      %s144 = sphi 0, %s130
      %s148 = sphi 0, %s148
      %s150 = sphi 0, %s148
      %s151 = sphi 0, %s150
      %s165 = sphi 0, %s151
      %s169 = sphi 0, %s169
      %s171 = sphi 0, %s169
      %s172 = sphi 0, %s171
      %s186 = sphi 0, %s172
      %s190 = sphi 0, %s190
      %s192 = sphi 0, %s190
      %s193 = sphi 0, %s192
      %s207 = sphi 0, %s193
      %s211 = sphi 0, %s211
      %s213 = sphi 0, %s211
      %s214 = sphi 0, %s213
      %s228 = sphi 0, %s214
      %s232 = sphi 0, %s232
      %s234 = sphi 0, %s232
      %s235 = sphi 0, %s234
      %s249 = sphi 0, %s235
      %s255 = sphi 0, %s257
      %s258 = sphi 0, %s255
      %s259 = sphi 0, %s258
      %s275 = sphi 0, %s259
    $region4: #{tpu_custom_call.1} parent=1 // loop_header_branch
      %19 = sbr.rel (%p17) target = $region8
    $region5: #{tpu_custom_call.1} parent=1 // loop_body
      %s21 = ssub.s32 %s16, 1
      %s22 = ssub.s32 %s16, 2
      %s29 = sadd.s32 1, %s24
      %p30 = scmp.ge.s32.totalorder %s29, 2
      %s31 = scalar_select %p30, 0, %s29
      %s32 = sadd.s32 1, %s23
      %s33 = scalar_select %p30, %s32, %s23
      %p34 = scmp.ge.s32.totalorder %s33, 2
      %s35 = scalar_select %p34, 0, %s33
      %s36 = ssub.s32 %s23, %s35
      %s37 = ssub.s32 %s24, %s31
      %s38 = sor.u32 %s36, %s37
      %p39 = scmp.eq.s32.totalorder %s38, 0
      %s41 = sadd.s32 %s40, 1
      %s42 = scalar_select %p39, %s40, %s41
      %p45 = pneg %p39
      %p46 = scmp.eq.s32.totalorder %s16, 3
      %p47 = por %p45, %p46
      %p48 = scmp.ne.s32.totalorder %s40, %s43
      %p49 = scmp.eq.s32.totalorder %s16, 0
      %p50 = por %p48, %p49
      %p51 = scmp.ne.s32.totalorder %s40, %s43
      %p52 = scmp.eq.s32.totalorder %s21, 3
      %p53 = por %p51, %p52
      %p54 = scmp.ne.s32.totalorder %s43, %s44
      %p55 = scmp.eq.s32.totalorder %s21, 0
      %p56 = por %p54, %p55
      %p57 = scmp.ne.s32.totalorder %s43, %s44
      %p58 = scmp.eq.s32.totalorder %s22, 3
      %p59 = por %p57, %p58
      %p61 = scmp.ne.s32.totalorder %s44, %s60
      %p62 = scmp.eq.s32.totalorder %s22, 0
      %p63 = por %p61, %p62
      %s65 = sadd.s32 %s64, 1
      %p68 = scmp.eq.s32.totalorder %s16, 3
      %p69 = scmp.ne.s32.totalorder %s64, %s66
      %p70 = scmp.eq.s32.totalorder %s16, 0
      %p71 = por %p69, %p70
      %p72 = scmp.ne.s32.totalorder %s64, %s66
      %p73 = scmp.eq.s32.totalorder %s21, 3
      %p74 = por %p72, %p73
      %p75 = scmp.ne.s32.totalorder %s66, %s67
      %p76 = scmp.eq.s32.totalorder %s21, 0
      %p77 = por %p75, %p76
      %p78 = scmp.ne.s32.totalorder %s66, %s67
      %p79 = scmp.eq.s32.totalorder %s22, 3
      %p80 = por %p78, %p79
      %p82 = scmp.ne.s32.totalorder %s67, %s81
      %p83 = scmp.eq.s32.totalorder %s22, 0
      %p84 = por %p82, %p83
      %s86 = sadd.s32 %s85, 1
      %p89 = scmp.eq.s32.totalorder %s16, 3
      %p90 = scmp.ne.s32.totalorder %s85, %s87
      %p91 = scmp.eq.s32.totalorder %s16, 0
      %p92 = por %p90, %p91
      %p93 = scmp.ne.s32.totalorder %s85, %s87
      %p94 = scmp.eq.s32.totalorder %s21, 3
      %p95 = por %p93, %p94
      %p96 = scmp.ne.s32.totalorder %s87, %s88
      %p97 = scmp.eq.s32.totalorder %s21, 0
      %p98 = por %p96, %p97
      %p99 = scmp.ne.s32.totalorder %s87, %s88
      %p100 = scmp.eq.s32.totalorder %s22, 3
      %p101 = por %p99, %p100
      %p103 = scmp.ne.s32.totalorder %s88, %s102
      %p104 = scmp.eq.s32.totalorder %s22, 0
      %p105 = por %p103, %p104
      %s107 = sadd.s32 %s106, 1
      %p110 = scmp.eq.s32.totalorder %s16, 3
      %p111 = scmp.ne.s32.totalorder %s106, %s108
      %p112 = scmp.eq.s32.totalorder %s16, 0
      %p113 = por %p111, %p112
      %p114 = scmp.ne.s32.totalorder %s106, %s108
      %p115 = scmp.eq.s32.totalorder %s21, 3
      %p116 = por %p114, %p115
      %p117 = scmp.ne.s32.totalorder %s108, %s109
      %p118 = scmp.eq.s32.totalorder %s21, 0
      %p119 = por %p117, %p118
      %p120 = scmp.ne.s32.totalorder %s108, %s109
      %p121 = scmp.eq.s32.totalorder %s22, 3
      %p122 = por %p120, %p121
      %p124 = scmp.ne.s32.totalorder %s109, %s123
      %p125 = scmp.eq.s32.totalorder %s22, 0
      %p126 = por %p124, %p125
      %s128 = sadd.s32 %s127, 1
      %p131 = scmp.eq.s32.totalorder %s16, 3
      %p132 = scmp.ne.s32.totalorder %s127, %s129
      %p133 = scmp.eq.s32.totalorder %s16, 0
      %p134 = por %p132, %p133
      %p135 = scmp.ne.s32.totalorder %s127, %s129
      %p136 = scmp.eq.s32.totalorder %s21, 3
      %p137 = por %p135, %p136
      %p138 = scmp.ne.s32.totalorder %s129, %s130
      %p139 = scmp.eq.s32.totalorder %s21, 0
      %p140 = por %p138, %p139
      %p141 = scmp.ne.s32.totalorder %s129, %s130
      %p142 = scmp.eq.s32.totalorder %s22, 3
      %p143 = por %p141, %p142
      %p145 = scmp.ne.s32.totalorder %s130, %s144
      %p146 = scmp.eq.s32.totalorder %s22, 0
      %p147 = por %p145, %p146
      %s149 = sadd.s32 %s148, 1
      %p152 = scmp.eq.s32.totalorder %s16, 3
      %p153 = scmp.ne.s32.totalorder %s148, %s150
      %p154 = scmp.eq.s32.totalorder %s16, 0
      %p155 = por %p153, %p154
      %p156 = scmp.ne.s32.totalorder %s148, %s150
      %p157 = scmp.eq.s32.totalorder %s21, 3
      %p158 = por %p156, %p157
      %p159 = scmp.ne.s32.totalorder %s150, %s151
      %p160 = scmp.eq.s32.totalorder %s21, 0
      %p161 = por %p159, %p160
      %p162 = scmp.ne.s32.totalorder %s150, %s151
      %p163 = scmp.eq.s32.totalorder %s22, 3
      %p164 = por %p162, %p163
      %p166 = scmp.ne.s32.totalorder %s151, %s165
      %p167 = scmp.eq.s32.totalorder %s22, 0
      %p168 = por %p166, %p167
      %s170 = sadd.s32 %s169, 1
      %p173 = scmp.eq.s32.totalorder %s16, 3
      %p174 = scmp.ne.s32.totalorder %s169, %s171
      %p175 = scmp.eq.s32.totalorder %s16, 0
      %p176 = por %p174, %p175
      %p177 = scmp.ne.s32.totalorder %s169, %s171
      %p178 = scmp.eq.s32.totalorder %s21, 3
      %p179 = por %p177, %p178
      %p180 = scmp.ne.s32.totalorder %s171, %s172
      %p181 = scmp.eq.s32.totalorder %s21, 0
      %p182 = por %p180, %p181
      %p183 = scmp.ne.s32.totalorder %s171, %s172
      %p184 = scmp.eq.s32.totalorder %s22, 3
      %p185 = por %p183, %p184
      %p187 = scmp.ne.s32.totalorder %s172, %s186
      %p188 = scmp.eq.s32.totalorder %s22, 0
      %p189 = por %p187, %p188
      %s191 = sadd.s32 %s190, 1
      %p194 = scmp.eq.s32.totalorder %s16, 3
      %p195 = scmp.ne.s32.totalorder %s190, %s192
      %p196 = scmp.eq.s32.totalorder %s16, 0
      %p197 = por %p195, %p196
      %p198 = scmp.ne.s32.totalorder %s190, %s192
      %p199 = scmp.eq.s32.totalorder %s21, 3
      %p200 = por %p198, %p199
      %p201 = scmp.ne.s32.totalorder %s192, %s193
      %p202 = scmp.eq.s32.totalorder %s21, 0
      %p203 = por %p201, %p202
      %p204 = scmp.ne.s32.totalorder %s192, %s193
      %p205 = scmp.eq.s32.totalorder %s22, 3
      %p206 = por %p204, %p205
      %p208 = scmp.ne.s32.totalorder %s193, %s207
      %p209 = scmp.eq.s32.totalorder %s22, 0
      %p210 = por %p208, %p209
      %s212 = sadd.s32 %s211, 1
      %p215 = scmp.eq.s32.totalorder %s16, 3
      %p216 = scmp.ne.s32.totalorder %s211, %s213
      %p217 = scmp.eq.s32.totalorder %s16, 0
      %p218 = por %p216, %p217
      %p219 = scmp.ne.s32.totalorder %s211, %s213
      %p220 = scmp.eq.s32.totalorder %s21, 3
      %p221 = por %p219, %p220
      %p222 = scmp.ne.s32.totalorder %s213, %s214
      %p223 = scmp.eq.s32.totalorder %s21, 0
      %p224 = por %p222, %p223
      %p225 = scmp.ne.s32.totalorder %s213, %s214
      %p226 = scmp.eq.s32.totalorder %s22, 3
      %p227 = por %p225, %p226
      %p229 = scmp.ne.s32.totalorder %s214, %s228
      %p230 = scmp.eq.s32.totalorder %s22, 0
      %p231 = por %p229, %p230
      %s233 = sadd.s32 %s232, 1
      %p236 = scmp.eq.s32.totalorder %s16, 3
      %p237 = scmp.ne.s32.totalorder %s232, %s234
      %p238 = scmp.eq.s32.totalorder %s16, 0
      %p239 = por %p237, %p238
      %p240 = scmp.ne.s32.totalorder %s232, %s234
      %p241 = scmp.eq.s32.totalorder %s21, 3
      %p242 = por %p240, %p241
      %p243 = scmp.ne.s32.totalorder %s234, %s235
      %p244 = scmp.eq.s32.totalorder %s21, 0
      %p245 = por %p243, %p244
      %p246 = scmp.ne.s32.totalorder %s234, %s235
      %p247 = scmp.eq.s32.totalorder %s22, 3
      %p248 = por %p246, %p247
      %p250 = scmp.ne.s32.totalorder %s235, %s249
      %p251 = scmp.eq.s32.totalorder %s22, 0
      %p252 = por %p250, %p251
      %s253 = ssub.s32 %s23, %s35
      %p254 = scmp.eq.s32.totalorder %s253, 0
      %s256 = sadd.s32 %s255, 1
      %s257 = scalar_select %p254, %s255, %s256
      %p260 = pneg %p254
      %p261 = scmp.eq.s32.totalorder %s16, 3
      %p262 = por %p260, %p261
      %p263 = scmp.ne.s32.totalorder %s255, %s258
      %p264 = scmp.eq.s32.totalorder %s16, 0
      %p265 = por %p263, %p264
      %p266 = scmp.ne.s32.totalorder %s255, %s258
      %p267 = scmp.eq.s32.totalorder %s21, 3
      %p268 = por %p266, %p267
      %p269 = scmp.ne.s32.totalorder %s258, %s259
      %p270 = scmp.eq.s32.totalorder %s21, 0
      %p271 = por %p269, %p270
      %p272 = scmp.ne.s32.totalorder %s258, %s259
      %p273 = scmp.eq.s32.totalorder %s22, 3
      %p274 = por %p272, %p273
      %p276 = scmp.ne.s32.totalorder %s259, %s275
      %p277 = scmp.eq.s32.totalorder %s22, 0
      %p278 = por %p276, %p277
      %p279 = scmp.le.s32.totalorder 1, %s16
      %p280 = scmp.lt.s32.totalorder %s16, 5
      %p281 = pnand %p279, %p280
      %p282 = pneg %p281
      // Predicated region
      $region9: #{tpu_custom_call.1} parent=5 // pred_check
        _
      $region10: #{tpu_custom_call.1} parent=5 // pred_check_branch
        %284 = sbr.rel (%p281) target = $region12
      $region11: #{tpu_custom_call.1} parent=5 // pred_region
        %s285 = ssub.s32 %s16, 1
        // Predicated region
        $region13: #{tpu_custom_call.1} parent=11 // pred_check
          %p286 = pneg %p77
        $region14: #{tpu_custom_call.1} parent=11 // pred_check_branch
          %288 = sbr.rel (%p286) target = $region16
        $region15: #{tpu_custom_call.1} parent=11 // pred_region
          _
        $region16: #{tpu_custom_call.1} parent=11 // pred_fallthru
          _
        // Predicated region
        $region17: #{tpu_custom_call.1} parent=11 // pred_check
          %p289 = pneg %p98
        $region18: #{tpu_custom_call.1} parent=11 // pred_check_branch
          %291 = sbr.rel (%p289) target = $region20
        $region19: #{tpu_custom_call.1} parent=11 // pred_region
          _
        $region20: #{tpu_custom_call.1} parent=11 // pred_fallthru
          _
        // Predicated region
        $region21: #{tpu_custom_call.1} parent=11 // pred_check
          %p292 = pneg %p119
        $region22: #{tpu_custom_call.1} parent=11 // pred_check_branch
          %294 = sbr.rel (%p292) target = $region24
        $region23: #{tpu_custom_call.1} parent=11 // pred_region
          _
        $region24: #{tpu_custom_call.1} parent=11 // pred_fallthru
          _
        // Predicated region
        $region25: #{tpu_custom_call.1} parent=11 // pred_check
          %p295 = pneg %p140
        $region26: #{tpu_custom_call.1} parent=11 // pred_check_branch
          %297 = sbr.rel (%p295) target = $region28
        $region27: #{tpu_custom_call.1} parent=11 // pred_region
          _
        $region28: #{tpu_custom_call.1} parent=11 // pred_fallthru
          _
        // Predicated region
        $region29: #{tpu_custom_call.1} parent=11 // pred_check
          %p298 = pneg %p161
        $region30: #{tpu_custom_call.1} parent=11 // pred_check_branch
          %300 = sbr.rel (%p298) target = $region32
        $region31: #{tpu_custom_call.1} parent=11 // pred_region
          _
        $region32: #{tpu_custom_call.1} parent=11 // pred_fallthru
          _
        // Predicated region
        $region33: #{tpu_custom_call.1} parent=11 // pred_check
          %p301 = pneg %p182
        $region34: #{tpu_custom_call.1} parent=11 // pred_check_branch
          %303 = sbr.rel (%p301) target = $region36
        $region35: #{tpu_custom_call.1} parent=11 // pred_region
          _
        $region36: #{tpu_custom_call.1} parent=11 // pred_fallthru
          _
        // Predicated region
        $region37: #{tpu_custom_call.1} parent=11 // pred_check
          %p304 = pneg %p203
        $region38: #{tpu_custom_call.1} parent=11 // pred_check_branch
          %306 = sbr.rel (%p304) target = $region40
        $region39: #{tpu_custom_call.1} parent=11 // pred_region
          _
        $region40: #{tpu_custom_call.1} parent=11 // pred_fallthru
          _
        // Predicated region
        $region41: #{tpu_custom_call.1} parent=11 // pred_check
          %p307 = pneg %p224
        $region42: #{tpu_custom_call.1} parent=11 // pred_check_branch
          %309 = sbr.rel (%p307) target = $region44
        $region43: #{tpu_custom_call.1} parent=11 // pred_region
          _
        $region44: #{tpu_custom_call.1} parent=11 // pred_fallthru
          _
        // Predicated region
        $region45: #{tpu_custom_call.1} parent=11 // pred_check
          %p310 = pneg %p245
        $region46: #{tpu_custom_call.1} parent=11 // pred_check_branch
          %312 = sbr.rel (%p310) target = $region48
        $region47: #{tpu_custom_call.1} parent=11 // pred_region
          _
        $region48: #{tpu_custom_call.1} parent=11 // pred_fallthru
          _
      $region12: #{tpu_custom_call.1} parent=5 // pred_fallthru
        _
      %p313 = scmp.lt.s32.totalorder %s16, 4
      // Predicated region
      $region49: #{tpu_custom_call.1} parent=5 // pred_check
        %p314 = pneg %p313
      $region50: #{tpu_custom_call.1} parent=5 // pred_check_branch
        %316 = sbr.rel (%p314) target = $region52
      $region51: #{tpu_custom_call.1} parent=5 // pred_region
        // Predicated region
        $region53: #{tpu_custom_call.1} parent=51 // pred_check
          %p317 = pneg %p50
        $region54: #{tpu_custom_call.1} parent=51 // pred_check_branch
          %319 = sbr.rel (%p317) target = $region56
        $region55: #{tpu_custom_call.1} parent=51 // pred_region
          %s320 = sand.u32 %s40, 1
          %s321 = sand.u32 %s40, 1
          %s322 = smul.addr %s321, 16
          %s323 = scalar_lea.vmem [#allocation3], %s322
          %s324 = smul.addr %s23, 4
          %s325 = sadd.s32 %s24, %s324
          %s326 = smul.addr %s325, 8
          %s327 = scalar_lea.vmem %s0, %s326
          // Predicated region
          $region57: #{tpu_custom_call.1} parent=55 // pred_check
            _
          $region58: #{tpu_custom_call.1} parent=55 // pred_check_branch
            %329 = sbr.rel (0) target = $region60
          $region59: #{tpu_custom_call.1} parent=55 // pred_region
            // Predicated region
            $region61: #{tpu_custom_call.1} parent=59 // pred_check
              _
            $region62: #{tpu_custom_call.1} parent=59 // pred_check_branch
              %331 = sbr.rel (0) target = $region64
            $region63: #{tpu_custom_call.1} parent=59 // pred_region
              // Predicated region
              $region76: #{tpu_custom_call.1} parent=63 // pred_check
                _
              $region77: #{tpu_custom_call.1} parent=63 // pred_check_branch
                %348 = sbr.rel (0) target = $region79
              $region78: #{tpu_custom_call.1} parent=63 // pred_region
                loop: start=0, step=1, limit=1
                $region80: #{tpu_custom_call.1} parent=78 // loop_pre_header
                  _
                $region81: #{tpu_custom_call.1} parent=78 // loop_header
                  %s350 = sphi 0, %s354
                  %p351 = scmp.ge.s32.totalorder %s350, 1
                  %s355 = sphi %s327, %s327
                  %s356 = sphi %s323, %s323
                $region82: #{tpu_custom_call.1} parent=78 // loop_header_branch
                  %353 = sbr.rel (%p351) target = $region86
                $region83: #{tpu_custom_call.1} parent=78 // loop_body
                  %v357 = vld [vmem:[%s355] sm:$0xff]
                  %358 = vst [vmem:[%s356] sm:$0xff] %v357
                  %v359 = vld [vmem:[%s355 + $0x10] sm:$0xff]
                  %360 = vst [vmem:[%s356 + $0x8] sm:$0xff] %v359
                $region84: #{tpu_custom_call.1} parent=78 // loop_footer
                  %s354 = sadd.s32 1, %s350
                $region85: #{tpu_custom_call.1} parent=78 // loop_footer_branch
                  %349 = sbr.rel target = $region81
                $region86: #{tpu_custom_call.1} parent=78 // loop_exit
                  _
              $region79: #{tpu_custom_call.1} parent=63 // pred_fallthru
                _
              // Predicated region
              $region87: #{tpu_custom_call.1} parent=63 // pred_check
                _
              $region88: #{tpu_custom_call.1} parent=63 // pred_check_branch
                %362 = sbr.rel target = $region90
              $region89: #{tpu_custom_call.1} parent=63 // pred_region
                _
              $region90: #{tpu_custom_call.1} parent=63 // pred_fallthru
                _
            $region64: #{tpu_custom_call.1} parent=59 // pred_fallthru
              _
            // Predicated region
            $region65: #{tpu_custom_call.1} parent=59 // pred_check
              _
            $region66: #{tpu_custom_call.1} parent=59 // pred_check_branch
              %333 = sbr.rel target = $region68
            $region67: #{tpu_custom_call.1} parent=59 // pred_region
              loop: start=0, step=1, limit=1
              $region69: #{tpu_custom_call.1} parent=67 // loop_pre_header
                _
              $region70: #{tpu_custom_call.1} parent=67 // loop_header
                %s336 = sphi 0, %s340
                %p337 = scmp.ge.s32.totalorder %s336, 1
                %s341 = sphi %s327, %s327
                %s342 = sphi %s323, %s323
              $region71: #{tpu_custom_call.1} parent=67 // loop_header_branch
                %339 = sbr.rel (%p337) target = $region75
              $region72: #{tpu_custom_call.1} parent=67 // loop_body
                %v343 = vld [vmem:[%s341] sm:$0xff]
                %344 = vst [vmem:[%s342] sm:$0xff] %v343
                %v345 = vld [vmem:[%s341 + $0x10] sm:$0xff]
                %346 = vst [vmem:[%s342 + $0x8] sm:$0xff] %v345
              $region73: #{tpu_custom_call.1} parent=67 // loop_footer
                %s340 = sadd.s32 1, %s336
              $region74: #{tpu_custom_call.1} parent=67 // loop_footer_branch
                %335 = sbr.rel target = $region70
              $region75: #{tpu_custom_call.1} parent=67 // loop_exit
                _
            $region68: #{tpu_custom_call.1} parent=59 // pred_fallthru
              _
          $region60: #{tpu_custom_call.1} parent=55 // pred_fallthru
            _
          %363 = vnop
        $region56: #{tpu_custom_call.1} parent=51 // pred_fallthru
          _
      $region52: #{tpu_custom_call.1} parent=5 // pred_fallthru
        _
      %p364 = scmp.le.s32.totalorder 1, %s16
      %p365 = scmp.lt.s32.totalorder %s16, 5
      %p366 = pnand %p364, %p365
      %p367 = pneg %p366
      // Predicated region
      $region91: #{tpu_custom_call.1} parent=5 // pred_check
        _
      $region92: #{tpu_custom_call.1} parent=5 // pred_check_branch
        %369 = sbr.rel (%p366) target = $region94
      $region93: #{tpu_custom_call.1} parent=5 // pred_region
        %s370 = ssub.s32 %s16, 1
        %s371 = sand.u32 %s43, 1
        %s372 = sand.u32 %s43, 1
        %s373 = smul.addr %s372, 16
        %s374 = scalar_lea.vmem [#allocation3], %s373
        // Predicated region
        $region95: #{tpu_custom_call.1} parent=93 // pred_check
          %p375 = pneg %p56
        $region96: #{tpu_custom_call.1} parent=93 // pred_check_branch
          %377 = sbr.rel (%p375) target = $region98
        $region97: #{tpu_custom_call.1} parent=93 // pred_region
          _
        $region98: #{tpu_custom_call.1} parent=93 // pred_fallthru
          _
        %s378 = sand.u32 %s43, 1
        %s379 = sand.u32 %s43, 1
        %s380 = smul.addr %s379, 16
        %s381 = scalar_lea.vmem [#allocation3], %s380
        %p382 = pneg %p56
        %p383 = pneg %p53
        %p384 = pneg %p77
        %p385 = pneg %p74
        %p386 = pneg %p98
        %p387 = pneg %p95
        %p388 = pneg %p119
        %p389 = pneg %p116
        %p390 = pneg %p140
        %p391 = pneg %p137
        %p392 = pneg %p161
        %p393 = pneg %p158
        %p394 = pneg %p182
        %p395 = pneg %p179
        %p396 = pneg %p203
        %p397 = pneg %p200
        %p398 = pneg %p224
        %p399 = pneg %p221
        %p400 = pneg %p245
        %p401 = pneg %p242
        %p402 = pneg %p271
        %p403 = pneg %p268
        %p404 = scmp.lt.s32.totalorder %s25, 1
        %s405 = scalar_select %p404, %s25, 1
        %s406 = smul.addr %s405, 128
        %s407 = smul.addr %s406, 8
        %s408 = scalar_lea.vmem %s10, %s407
        %p409 = scmp.lt.s32.totalorder %s25, 1
        %s410 = scalar_select %p409, %s25, 1
        %s411 = smul.addr %s410, 128
        %s412 = smul.addr %s411, 8
        %s413 = scalar_lea.vmem %s10, %s412
        %p415 = scmp.eq.s32.totalorder %s26, 0
        // Predicated region
        $region99: #{tpu_custom_call.1} parent=93 // pred_check
          %p416 = pneg %p415
        $region100: #{tpu_custom_call.1} parent=93 // pred_check_branch
          %418 = sbr.rel (%p416) target = $region102
        $region101: #{tpu_custom_call.1} parent=93 // pred_region
          %vm419 = vcmask 7168
          %420 = vst.msk [vmem:[#allocation2] sm:$0xff] %vm419, -inf
          %421 = vst.msk [vmem:[#allocation2 + $0x8] sm:$0xff] %vm419, -inf
          %422 = vst.msk [vmem:[#allocation2 + $0x10] sm:$0xff] %vm419, -inf
          %423 = vst.msk [vmem:[#allocation2 + $0x18] sm:$0xff] %vm419, -inf
          %424 = vst.msk [vmem:[#allocation2 + $0x20] sm:$0xff] %vm419, -inf
          %425 = vst.msk [vmem:[#allocation2 + $0x28] sm:$0xff] %vm419, -inf
          %426 = vst.msk [vmem:[#allocation2 + $0x30] sm:$0xff] %vm419, -inf
          %427 = vst.msk [vmem:[#allocation2 + $0x38] sm:$0xff] %vm419, -inf
          %428 = vst.msk [vmem:[#allocation2 + $0x40] sm:$0xff] %vm419, -inf
          %429 = vst.msk [vmem:[#allocation2 + $0x48] sm:$0xff] %vm419, -inf
          %430 = vst.msk [vmem:[#allocation2 + $0x50] sm:$0xff] %vm419, -inf
          %431 = vst.msk [vmem:[#allocation2 + $0x58] sm:$0xff] %vm419, -inf
          %432 = vst.msk [vmem:[#allocation2 + $0x60] sm:$0xff] %vm419, -inf
          %433 = vst.msk [vmem:[#allocation2 + $0x68] sm:$0xff] %vm419, -inf
          %434 = vst.msk [vmem:[#allocation2 + $0x70] sm:$0xff] %vm419, -inf
          %435 = vst.msk [vmem:[#allocation2 + $0x78] sm:$0xff] %vm419, -inf
          %436 = vst.msk [vmem:[#allocation2 + $0x80] sm:$0xff] %vm419, -inf
          %437 = vst.msk [vmem:[#allocation2 + $0x88] sm:$0xff] %vm419, -inf
          %438 = vst.msk [vmem:[#allocation2 + $0x90] sm:$0xff] %vm419, -inf
          %439 = vst.msk [vmem:[#allocation2 + $0x98] sm:$0xff] %vm419, -inf
          %440 = vst.msk [vmem:[#allocation2 + $0xa0] sm:$0xff] %vm419, -inf
          %441 = vst.msk [vmem:[#allocation2 + $0xa8] sm:$0xff] %vm419, -inf
          %442 = vst.msk [vmem:[#allocation2 + $0xb0] sm:$0xff] %vm419, -inf
          %443 = vst.msk [vmem:[#allocation2 + $0xb8] sm:$0xff] %vm419, -inf
          %444 = vst.msk [vmem:[#allocation2 + $0xc0] sm:$0xff] %vm419, -inf
          %445 = vst.msk [vmem:[#allocation2 + $0xc8] sm:$0xff] %vm419, -inf
          %446 = vst.msk [vmem:[#allocation2 + $0xd0] sm:$0xff] %vm419, -inf
          %447 = vst.msk [vmem:[#allocation2 + $0xd8] sm:$0xff] %vm419, -inf
          %448 = vst.msk [vmem:[#allocation2 + $0xe0] sm:$0xff] %vm419, -inf
          %449 = vst.msk [vmem:[#allocation2 + $0xe8] sm:$0xff] %vm419, -inf
          %450 = vst.msk [vmem:[#allocation2 + $0xf0] sm:$0xff] %vm419, -inf
          %451 = vst.msk [vmem:[#allocation2 + $0xf8] sm:$0xff] %vm419, -inf
          %452 = vst.msk [vmem:[#allocation2 + $0x100] sm:$0xff] %vm419, -inf
          %453 = vst.msk [vmem:[#allocation2 + $0x108] sm:$0xff] %vm419, -inf
          %454 = vst.msk [vmem:[#allocation2 + $0x110] sm:$0xff] %vm419, -inf
          %455 = vst.msk [vmem:[#allocation2 + $0x118] sm:$0xff] %vm419, -inf
          %456 = vst.msk [vmem:[#allocation2 + $0x120] sm:$0xff] %vm419, -inf
          %457 = vst.msk [vmem:[#allocation2 + $0x128] sm:$0xff] %vm419, -inf
          %458 = vst.msk [vmem:[#allocation2 + $0x130] sm:$0xff] %vm419, -inf
          %459 = vst.msk [vmem:[#allocation2 + $0x138] sm:$0xff] %vm419, -inf
          %460 = vst.msk [vmem:[#allocation2 + $0x140] sm:$0xff] %vm419, -inf
          %461 = vst.msk [vmem:[#allocation2 + $0x148] sm:$0xff] %vm419, -inf
          %462 = vst.msk [vmem:[#allocation2 + $0x150] sm:$0xff] %vm419, -inf
          %463 = vst.msk [vmem:[#allocation2 + $0x158] sm:$0xff] %vm419, -inf
          %464 = vst.msk [vmem:[#allocation2 + $0x160] sm:$0xff] %vm419, -inf
          %465 = vst.msk [vmem:[#allocation2 + $0x168] sm:$0xff] %vm419, -inf
          %466 = vst.msk [vmem:[#allocation2 + $0x170] sm:$0xff] %vm419, -inf
          %467 = vst.msk [vmem:[#allocation2 + $0x178] sm:$0xff] %vm419, -inf
          %468 = vst.msk [vmem:[#allocation2 + $0x180] sm:$0xff] %vm419, -inf
          %469 = vst.msk [vmem:[#allocation2 + $0x188] sm:$0xff] %vm419, -inf
          %470 = vst.msk [vmem:[#allocation2 + $0x190] sm:$0xff] %vm419, -inf
          %471 = vst.msk [vmem:[#allocation2 + $0x198] sm:$0xff] %vm419, -inf
          %472 = vst.msk [vmem:[#allocation2 + $0x1a0] sm:$0xff] %vm419, -inf
          %473 = vst.msk [vmem:[#allocation2 + $0x1a8] sm:$0xff] %vm419, -inf
          %474 = vst.msk [vmem:[#allocation2 + $0x1b0] sm:$0xff] %vm419, -inf
          %475 = vst.msk [vmem:[#allocation2 + $0x1b8] sm:$0xff] %vm419, -inf
          %476 = vst.msk [vmem:[#allocation2 + $0x1c0] sm:$0xff] %vm419, -inf
          %477 = vst.msk [vmem:[#allocation2 + $0x1c8] sm:$0xff] %vm419, -inf
          %478 = vst.msk [vmem:[#allocation2 + $0x1d0] sm:$0xff] %vm419, -inf
          %479 = vst.msk [vmem:[#allocation2 + $0x1d8] sm:$0xff] %vm419, -inf
          %480 = vst.msk [vmem:[#allocation2 + $0x1e0] sm:$0xff] %vm419, -inf
          %481 = vst.msk [vmem:[#allocation2 + $0x1e8] sm:$0xff] %vm419, -inf
          %482 = vst.msk [vmem:[#allocation2 + $0x1f0] sm:$0xff] %vm419, -inf
          %483 = vst.msk [vmem:[#allocation2 + $0x1f8] sm:$0xff] %vm419, -inf
          %484 = vst.msk [vmem:[#allocation2 + $0x200] sm:$0xff] %vm419, -inf
          %485 = vst.msk [vmem:[#allocation2 + $0x208] sm:$0xff] %vm419, -inf
          %486 = vst.msk [vmem:[#allocation2 + $0x210] sm:$0xff] %vm419, -inf
          %487 = vst.msk [vmem:[#allocation2 + $0x218] sm:$0xff] %vm419, -inf
          %488 = vst.msk [vmem:[#allocation2 + $0x220] sm:$0xff] %vm419, -inf
          %489 = vst.msk [vmem:[#allocation2 + $0x228] sm:$0xff] %vm419, -inf
          %490 = vst.msk [vmem:[#allocation2 + $0x230] sm:$0xff] %vm419, -inf
          %491 = vst.msk [vmem:[#allocation2 + $0x238] sm:$0xff] %vm419, -inf
          %492 = vst.msk [vmem:[#allocation2 + $0x240] sm:$0xff] %vm419, -inf
          %493 = vst.msk [vmem:[#allocation2 + $0x248] sm:$0xff] %vm419, -inf
          %494 = vst.msk [vmem:[#allocation2 + $0x250] sm:$0xff] %vm419, -inf
          %495 = vst.msk [vmem:[#allocation2 + $0x258] sm:$0xff] %vm419, -inf
          %496 = vst.msk [vmem:[#allocation2 + $0x260] sm:$0xff] %vm419, -inf
          %497 = vst.msk [vmem:[#allocation2 + $0x268] sm:$0xff] %vm419, -inf
          %498 = vst.msk [vmem:[#allocation2 + $0x270] sm:$0xff] %vm419, -inf
          %499 = vst.msk [vmem:[#allocation2 + $0x278] sm:$0xff] %vm419, -inf
          %500 = vst.msk [vmem:[#allocation2 + $0x280] sm:$0xff] %vm419, -inf
          %501 = vst.msk [vmem:[#allocation2 + $0x288] sm:$0xff] %vm419, -inf
          %502 = vst.msk [vmem:[#allocation2 + $0x290] sm:$0xff] %vm419, -inf
          %503 = vst.msk [vmem:[#allocation2 + $0x298] sm:$0xff] %vm419, -inf
          %504 = vst.msk [vmem:[#allocation2 + $0x2a0] sm:$0xff] %vm419, -inf
          %505 = vst.msk [vmem:[#allocation2 + $0x2a8] sm:$0xff] %vm419, -inf
          %506 = vst.msk [vmem:[#allocation2 + $0x2b0] sm:$0xff] %vm419, -inf
          %507 = vst.msk [vmem:[#allocation2 + $0x2b8] sm:$0xff] %vm419, -inf
          %508 = vst.msk [vmem:[#allocation2 + $0x2c0] sm:$0xff] %vm419, -inf
          %509 = vst.msk [vmem:[#allocation2 + $0x2c8] sm:$0xff] %vm419, -inf
          %510 = vst.msk [vmem:[#allocation2 + $0x2d0] sm:$0xff] %vm419, -inf
          %511 = vst.msk [vmem:[#allocation2 + $0x2d8] sm:$0xff] %vm419, -inf
          %512 = vst.msk [vmem:[#allocation2 + $0x2e0] sm:$0xff] %vm419, -inf
          %513 = vst.msk [vmem:[#allocation2 + $0x2e8] sm:$0xff] %vm419, -inf
          %514 = vst.msk [vmem:[#allocation2 + $0x2f0] sm:$0xff] %vm419, -inf
          %515 = vst.msk [vmem:[#allocation2 + $0x2f8] sm:$0xff] %vm419, -inf
          %516 = vst.msk [vmem:[#allocation2 + $0x300] sm:$0xff] %vm419, -inf
          %517 = vst.msk [vmem:[#allocation2 + $0x308] sm:$0xff] %vm419, -inf
          %518 = vst.msk [vmem:[#allocation2 + $0x310] sm:$0xff] %vm419, -inf
          %519 = vst.msk [vmem:[#allocation2 + $0x318] sm:$0xff] %vm419, -inf
          %520 = vst.msk [vmem:[#allocation2 + $0x320] sm:$0xff] %vm419, -inf
          %521 = vst.msk [vmem:[#allocation2 + $0x328] sm:$0xff] %vm419, -inf
          %522 = vst.msk [vmem:[#allocation2 + $0x330] sm:$0xff] %vm419, -inf
          %523 = vst.msk [vmem:[#allocation2 + $0x338] sm:$0xff] %vm419, -inf
          %524 = vst.msk [vmem:[#allocation2 + $0x340] sm:$0xff] %vm419, -inf
          %525 = vst.msk [vmem:[#allocation2 + $0x348] sm:$0xff] %vm419, -inf
          %526 = vst.msk [vmem:[#allocation2 + $0x350] sm:$0xff] %vm419, -inf
          %527 = vst.msk [vmem:[#allocation2 + $0x358] sm:$0xff] %vm419, -inf
          %528 = vst.msk [vmem:[#allocation2 + $0x360] sm:$0xff] %vm419, -inf
          %529 = vst.msk [vmem:[#allocation2 + $0x368] sm:$0xff] %vm419, -inf
          %530 = vst.msk [vmem:[#allocation2 + $0x370] sm:$0xff] %vm419, -inf
          %531 = vst.msk [vmem:[#allocation2 + $0x378] sm:$0xff] %vm419, -inf
          %532 = vst.msk [vmem:[#allocation2 + $0x380] sm:$0xff] %vm419, -inf
          %533 = vst.msk [vmem:[#allocation2 + $0x388] sm:$0xff] %vm419, -inf
          %534 = vst.msk [vmem:[#allocation2 + $0x390] sm:$0xff] %vm419, -inf
          %535 = vst.msk [vmem:[#allocation2 + $0x398] sm:$0xff] %vm419, -inf
          %536 = vst.msk [vmem:[#allocation2 + $0x3a0] sm:$0xff] %vm419, -inf
          %537 = vst.msk [vmem:[#allocation2 + $0x3a8] sm:$0xff] %vm419, -inf
          %538 = vst.msk [vmem:[#allocation2 + $0x3b0] sm:$0xff] %vm419, -inf
          %539 = vst.msk [vmem:[#allocation2 + $0x3b8] sm:$0xff] %vm419, -inf
          %540 = vst.msk [vmem:[#allocation2 + $0x3c0] sm:$0xff] %vm419, -inf
          %541 = vst.msk [vmem:[#allocation2 + $0x3c8] sm:$0xff] %vm419, -inf
          %542 = vst.msk [vmem:[#allocation2 + $0x3d0] sm:$0xff] %vm419, -inf
          %543 = vst.msk [vmem:[#allocation2 + $0x3d8] sm:$0xff] %vm419, -inf
          %544 = vst.msk [vmem:[#allocation2 + $0x3e0] sm:$0xff] %vm419, -inf
          %545 = vst.msk [vmem:[#allocation2 + $0x3e8] sm:$0xff] %vm419, -inf
          %546 = vst.msk [vmem:[#allocation2 + $0x3f0] sm:$0xff] %vm419, -inf
          %547 = vst.msk [vmem:[#allocation2 + $0x3f8] sm:$0xff] %vm419, -inf
        $region102: #{tpu_custom_call.1} parent=93 // pred_fallthru
          _
        %v548 = vld [vmem:[%s374] sm:$0xff]
        %v549 = vld [vmem:[%s374 + $0x8] sm:$0xff]
        %v550 = vpack.c.bf16 %v549, %v548
        %v551 = vld [vmem:[%s1] sm:$0xf]
        %v552 = vld [vmem:[%s1 + $0x4] sm:$0xf]
        %v553 = vld [vmem:[%s1 + $0x8] sm:$0xf]
        %v554 = vld [vmem:[%s1 + $0xc] sm:$0xf]
        %v555 = vld [vmem:[%s1 + $0x10] sm:$0xf]
        %v556 = vld [vmem:[%s1 + $0x14] sm:$0xf]
        %v557 = vld [vmem:[%s1 + $0x18] sm:$0xf]
        %v558 = vld [vmem:[%s1 + $0x1c] sm:$0xf]
        %v567 = vunpack.c.l.b16 %v551
        %v568 = vunpack.c.l.b16 %v552
        %v569 = vunpack.c.l.b16 %v553
        %v570 = vunpack.c.l.b16 %v554
        %v571 = vunpack.c.l.b16 %v555
        %v572 = vunpack.c.l.b16 %v556
        %v573 = vunpack.c.l.b16 %v557
        %v574 = vunpack.c.l.b16 %v558
        %v575 = vpack.c.b16 %v568, %v567
        %v576 = vpack.c.b16 %v570, %v569
        %v577 = vpack.c.b16 %v572, %v571
        %v578 = vpack.c.b16 %v574, %v573
        %vm579 = vcmask 130048
        %v581 = vsel %vm579, %v575, 0
        %v584 = vsel %vm579, %v576, 0
        %v587 = vsel %vm579, %v577, 0
        %v590 = vsel %vm579, %v578, 0
        %592 = vmatprep.subr.bf16.mxu0 0
        %593 = vmatpush1.bf16.msra.mxu0 %v550
        %594 = vmatprep.subr.bf16.mxu0 0
        %595 = vmatpush1.bf16.msra.mxu0 0
        %596 = vmatprep.subr.bf16.mxu0 0
        %597 = vmatpush1.bf16.msra.mxu0 0
        %598 = vmatprep.subr.bf16.mxu0 0
        %599 = vmatpush1.bf16.msra.mxu0 0
        %600 = vmatprep.subr.bf16.mxu0 0
        %601 = vmatpush1.bf16.msra.mxu0 0
        %602 = vmatprep.subr.bf16.mxu0 0
        %603 = vmatpush1.bf16.msra.mxu0 0
        %604 = vmatprep.subr.bf16.mxu0 0
        %605 = vmatpush1.bf16.msra.mxu0 0
        %606 = vmatprep.subr.bf16.mxu0 0
        %607 = vmatpush1.bf16.msra.mxu0 0
        %608 = vmatprep.subr.bf16.mxu0 0
        %609 = vmatpush1.bf16.msra.mxu0 0
        %610 = vmatprep.subr.bf16.mxu0 0
        %611 = vmatpush1.bf16.msra.mxu0 0
        %612 = vmatprep.subr.bf16.mxu0 0
        %613 = vmatpush1.bf16.msra.mxu0 0
        %614 = vmatprep.subr.bf16.mxu0 0
        %615 = vmatpush1.bf16.msra.mxu0 0
        %616 = vmatprep.subr.bf16.mxu0 0
        %617 = vmatpush1.bf16.msra.mxu0 0
        %618 = vmatprep.subr.bf16.mxu0 0
        %619 = vmatpush1.bf16.msra.mxu0 0
        %620 = vmatprep.subr.bf16.mxu0 0
        %621 = vmatpush1.bf16.msra.mxu0 0
        %622 = vmatprep.subr.bf16.mxu0 0
        %623 = vmatpush1.bf16.msra.mxu0 0
        %624 = vmatprep.mubr.bf16.mxu0 0
        %625 = vmatmul.mubr.bf16.gmra.mrb[0].mxu0 %v581
        %v626 = vpop.f32.mrb[0].mxu0
        %v627 = vadd.f32 0.0, %v626
        %v628 = vpop.f32.mrb[0].mxu0
        %v629 = vpop.f32.mrb[0].mxu0
        %v630 = vadd.f32 0.0, %v629
        %v631 = vpop.f32.mrb[0].mxu0
        %632 = vmatprep.mubr.bf16.mxu0 0
        %633 = vmatmul.mubr.bf16.gmra.mrb[0].mxu0 %v584
        %v634 = vpop.f32.mrb[0].mxu0
        %v635 = vadd.f32 0.0, %v634
        %v636 = vpop.f32.mrb[0].mxu0
        %v637 = vpop.f32.mrb[0].mxu0
        %v638 = vadd.f32 0.0, %v637
        %v639 = vpop.f32.mrb[0].mxu0
        %640 = vmatprep.mubr.bf16.mxu0 0
        %641 = vmatmul.mubr.bf16.gmra.mrb[0].mxu0 %v587
        %v642 = vpop.f32.mrb[0].mxu0
        %v643 = vadd.f32 0.0, %v642
        %v644 = vpop.f32.mrb[0].mxu0
        %v645 = vpop.f32.mrb[0].mxu0
        %v646 = vadd.f32 0.0, %v645
        %v647 = vpop.f32.mrb[0].mxu0
        %648 = vmatprep.mubr.bf16.mxu0 0
        %649 = vmatmul.mubr.bf16.gmra.mrb[0].mxu0 %v590
        %v650 = vpop.f32.mrb[0].mxu0
        %v651 = vadd.f32 0.0, %v650
        %v652 = vpop.f32.mrb[0].mxu0
        %v653 = vpop.f32.mrb[0].mxu0
        %v654 = vadd.f32 0.0, %v653
        %v655 = vpop.f32.mrb[0].mxu0
        %656 = vdwg.mxu0
        %v657 = vld [vmem:[%s2] sm:$0xff]
        %v658 = vld [vmem:[%s2 + $0x8] sm:$0xff]
        %v659 = vld [vmem:[%s2 + $0x10] sm:$0xff]
        %v660 = vld [vmem:[%s2 + $0x18] sm:$0xff]
        %v661 = vld [vmem:[%s2 + $0x20] sm:$0xff]
        %v662 = vld [vmem:[%s2 + $0x28] sm:$0xff]
        %v663 = vld [vmem:[%s2 + $0x30] sm:$0xff]
        %v664 = vld [vmem:[%s2 + $0x38] sm:$0xff]
        %666 = vset.pattern.permute.xlu0 0
        %667 = vperm.xlu0 %666, %v657
        %v668 = vpop.permute.xlu0 %667
        %671 = vset.pattern.permute.xlu0 0
        %672 = vperm.xlu0 %671, %v658
        %v673 = vpop.permute.xlu0 %672
        %676 = vset.pattern.permute.xlu0 0
        %677 = vperm.xlu0 %676, %v659
        %v678 = vpop.permute.xlu0 %677
        %681 = vset.pattern.permute.xlu0 0
        %682 = vperm.xlu0 %681, %v660
        %v683 = vpop.permute.xlu0 %682
        %686 = vset.pattern.permute.xlu0 0
        %687 = vperm.xlu0 %686, %v661
        %v688 = vpop.permute.xlu0 %687
        %691 = vset.pattern.permute.xlu0 0
        %692 = vperm.xlu0 %691, %v662
        %v693 = vpop.permute.xlu0 %692
        %696 = vset.pattern.permute.xlu0 0
        %697 = vperm.xlu0 %696, %v663
        %v698 = vpop.permute.xlu0 %697
        %701 = vset.pattern.permute.xlu0 0
        %702 = vperm.xlu0 %701, %v664
        %v703 = vpop.permute.xlu0 %702
        %v705 = vmul.f32 %v627, %v668
        %v706 = vmul.f32 %v630, %v673
        %v707 = vmul.f32 %v635, %v678
        %v708 = vmul.f32 %v638, %v683
        %v709 = vmul.f32 %v643, %v688
        %v710 = vmul.f32 %v646, %v693
        %v711 = vmul.f32 %v651, %v698
        %v712 = vmul.f32 %v654, %v703
        %v713 = vld [vmem:[%s3] sm:$0xff]
        %v714 = vld [vmem:[%s3 + $0x8] sm:$0xff]
        %v715 = vld [vmem:[%s3 + $0x10] sm:$0xff]
        %v716 = vld [vmem:[%s3 + $0x18] sm:$0xff]
        %v717 = vld [vmem:[%s3 + $0x20] sm:$0xff]
        %v718 = vld [vmem:[%s3 + $0x28] sm:$0xff]
        %v719 = vld [vmem:[%s3 + $0x30] sm:$0xff]
        %v720 = vld [vmem:[%s3 + $0x38] sm:$0xff]
        %722 = vset.pattern.permute.xlu0 0
        %723 = vperm.xlu0 %722, %v713
        %v724 = vpop.permute.xlu0 %723
        %727 = vset.pattern.permute.xlu0 0
        %728 = vperm.xlu0 %727, %v714
        %v729 = vpop.permute.xlu0 %728
        %732 = vset.pattern.permute.xlu0 0
        %733 = vperm.xlu0 %732, %v715
        %v734 = vpop.permute.xlu0 %733
        %737 = vset.pattern.permute.xlu0 0
        %738 = vperm.xlu0 %737, %v716
        %v739 = vpop.permute.xlu0 %738
        %742 = vset.pattern.permute.xlu0 0
        %743 = vperm.xlu0 %742, %v717
        %v744 = vpop.permute.xlu0 %743
        %747 = vset.pattern.permute.xlu0 0
        %748 = vperm.xlu0 %747, %v718
        %v749 = vpop.permute.xlu0 %748
        %752 = vset.pattern.permute.xlu0 0
        %753 = vperm.xlu0 %752, %v719
        %v754 = vpop.permute.xlu0 %753
        %757 = vset.pattern.permute.xlu0 0
        %758 = vperm.xlu0 %757, %v720
        %v759 = vpop.permute.xlu0 %758
        %v761 = vadd.f32 %v705, %v724
        %v762 = vadd.f32 %v706, %v729
        %v763 = vadd.f32 %v707, %v734
        %v764 = vadd.f32 %v708, %v739
        %v765 = vadd.f32 %v709, %v744
        %v766 = vadd.f32 %v710, %v749
        %v767 = vadd.f32 %v711, %v754
        %v768 = vadd.f32 %v712, %v759
        %v769 = vmax.f32 %v761, 0.0
        %v770 = vmax.f32 %v762, 0.0
        %v771 = vmax.f32 %v763, 0.0
        %v772 = vmax.f32 %v764, 0.0
        %v773 = vmax.f32 %v765, 0.0
        %v774 = vmax.f32 %v766, 0.0
        %v775 = vmax.f32 %v767, 0.0
        %v776 = vmax.f32 %v768, 0.0
        %v777 = vld [vmem:[%s4] sm:$0xf]
        %v778 = vld [vmem:[%s4 + $0x4] sm:$0xf]
        %v779 = vld [vmem:[%s4 + $0x8] sm:$0xf]
        %v780 = vld [vmem:[%s4 + $0xc] sm:$0xf]
        %v781 = vld [vmem:[%s4 + $0x10] sm:$0xf]
        %v782 = vld [vmem:[%s4 + $0x14] sm:$0xf]
        %v783 = vld [vmem:[%s4 + $0x18] sm:$0xf]
        %v784 = vld [vmem:[%s4 + $0x1c] sm:$0xf]
        %v785 = vld [vmem:[%s4 + $0x20] sm:$0xf]
        %v786 = vld [vmem:[%s4 + $0x24] sm:$0xf]
        %v787 = vld [vmem:[%s4 + $0x28] sm:$0xf]
        %v788 = vld [vmem:[%s4 + $0x2c] sm:$0xf]
        %v789 = vld [vmem:[%s4 + $0x30] sm:$0xf]
        %v790 = vld [vmem:[%s4 + $0x34] sm:$0xf]
        %v791 = vld [vmem:[%s4 + $0x38] sm:$0xf]
        %v792 = vld [vmem:[%s4 + $0x3c] sm:$0xf]
        %v793 = vpack.c.bf16 %v770, %v769
        %v794 = vpack.c.bf16 %v772, %v771
        %v795 = vpack.c.bf16 %v774, %v773
        %v796 = vpack.c.bf16 %v776, %v775
        %v813 = vunpack.c.l.b16 %v777
        %v814 = vunpack.c.l.b16 %v778
        %v815 = vunpack.c.l.b16 %v779
        %v816 = vunpack.c.l.b16 %v780
        %v817 = vunpack.c.l.b16 %v781
        %v818 = vunpack.c.l.b16 %v782
        %v819 = vunpack.c.l.b16 %v783
        %v820 = vunpack.c.l.b16 %v784
        %v821 = vunpack.c.l.b16 %v785
        %v822 = vunpack.c.l.b16 %v786
        %v823 = vunpack.c.l.b16 %v787
        %v824 = vunpack.c.l.b16 %v788
        %v825 = vunpack.c.l.b16 %v789
        %v826 = vunpack.c.l.b16 %v790
        %v827 = vunpack.c.l.b16 %v791
        %v828 = vunpack.c.l.b16 %v792
        %v829 = vpack.c.b16 %v814, %v813
        %v830 = vpack.c.b16 %v816, %v815
        %v831 = vpack.c.b16 %v818, %v817
        %v832 = vpack.c.b16 %v820, %v819
        %v833 = vpack.c.b16 %v822, %v821
        %v834 = vpack.c.b16 %v824, %v823
        %v835 = vpack.c.b16 %v826, %v825
        %v836 = vpack.c.b16 %v828, %v827
        %vm837 = vcmask 523264
        %v839 = vsel %vm837, %v829, 0
        %v842 = vsel %vm837, %v830, 0
        %v845 = vsel %vm837, %v831, 0
        %v848 = vsel %vm837, %v832, 0
        %v851 = vsel %vm837, %v833, 0
        %v854 = vsel %vm837, %v834, 0
        %v857 = vsel %vm837, %v835, 0
        %v860 = vsel %vm837, %v836, 0
        %862 = vmatprep.subr.bf16.mxu0 0
        %863 = vmatpush1.bf16.msra.mxu0 %v793
        %864 = vmatprep.subr.bf16.mxu0 0
        %865 = vmatpush1.bf16.msra.mxu0 %v794
        %866 = vmatprep.subr.bf16.mxu0 0
        %867 = vmatpush1.bf16.msra.mxu0 %v795
        %868 = vmatprep.subr.bf16.mxu0 0
        %869 = vmatpush1.bf16.msra.mxu0 %v796
        %870 = vmatprep.subr.bf16.mxu0 0
        %871 = vmatpush1.bf16.msra.mxu0 0
        %872 = vmatprep.subr.bf16.mxu0 0
        %873 = vmatpush1.bf16.msra.mxu0 0
        %874 = vmatprep.subr.bf16.mxu0 0
        %875 = vmatpush1.bf16.msra.mxu0 0
        %876 = vmatprep.subr.bf16.mxu0 0
        %877 = vmatpush1.bf16.msra.mxu0 0
        %878 = vmatprep.subr.bf16.mxu0 0
        %879 = vmatpush1.bf16.msra.mxu0 0
        %880 = vmatprep.subr.bf16.mxu0 0
        %881 = vmatpush1.bf16.msra.mxu0 0
        %882 = vmatprep.subr.bf16.mxu0 0
        %883 = vmatpush1.bf16.msra.mxu0 0
        %884 = vmatprep.subr.bf16.mxu0 0
        %885 = vmatpush1.bf16.msra.mxu0 0
        %886 = vmatprep.subr.bf16.mxu0 0
        %887 = vmatpush1.bf16.msra.mxu0 0
        %888 = vmatprep.subr.bf16.mxu0 0
        %889 = vmatpush1.bf16.msra.mxu0 0
        %890 = vmatprep.subr.bf16.mxu0 0
        %891 = vmatpush1.bf16.msra.mxu0 0
        %892 = vmatprep.subr.bf16.mxu0 0
        %893 = vmatpush1.bf16.msra.mxu0 0
        %894 = vmatprep.mubr.bf16.mxu0 0
        %895 = vmatmul.mubr.bf16.gmra.mrb[0].mxu0 %v839
        %v896 = vpop.f32.mrb[0].mxu0
        %v897 = vadd.f32 0.0, %v896
        %v898 = vpop.f32.mrb[0].mxu0
        %v899 = vpop.f32.mrb[0].mxu0
        %v900 = vadd.f32 0.0, %v899
        %v901 = vpop.f32.mrb[0].mxu0
        %902 = vmatprep.mubr.bf16.mxu0 0
        %903 = vmatmul.mubr.bf16.gmra.mrb[0].mxu0 %v842
        %v904 = vpop.f32.mrb[0].mxu0
        %v905 = vadd.f32 0.0, %v904
        %v906 = vpop.f32.mrb[0].mxu0
        %v907 = vpop.f32.mrb[0].mxu0
        %v908 = vadd.f32 0.0, %v907
        %v909 = vpop.f32.mrb[0].mxu0
        %910 = vmatprep.mubr.bf16.mxu0 0
        %911 = vmatmul.mubr.bf16.gmra.mrb[0].mxu0 %v845
        %v912 = vpop.f32.mrb[0].mxu0
        %v913 = vadd.f32 0.0, %v912
        %v914 = vpop.f32.mrb[0].mxu0
        %v915 = vpop.f32.mrb[0].mxu0
        %v916 = vadd.f32 0.0, %v915
        %v917 = vpop.f32.mrb[0].mxu0
        %918 = vmatprep.mubr.bf16.mxu0 0
        %919 = vmatmul.mubr.bf16.gmra.mrb[0].mxu0 %v848
        %v920 = vpop.f32.mrb[0].mxu0
        %v921 = vadd.f32 0.0, %v920
        %v922 = vpop.f32.mrb[0].mxu0
        %v923 = vpop.f32.mrb[0].mxu0
        %v924 = vadd.f32 0.0, %v923
        %v925 = vpop.f32.mrb[0].mxu0
        %926 = vmatprep.mubr.bf16.mxu0 0
        %927 = vmatmul.mubr.bf16.gmra.mrb[0].mxu0 %v851
        %v928 = vpop.f32.mrb[0].mxu0
        %v929 = vadd.f32 0.0, %v928
        %v930 = vpop.f32.mrb[0].mxu0
        %v931 = vpop.f32.mrb[0].mxu0
        %v932 = vadd.f32 0.0, %v931
        %v933 = vpop.f32.mrb[0].mxu0
        %934 = vmatprep.mubr.bf16.mxu0 0
        %935 = vmatmul.mubr.bf16.gmra.mrb[0].mxu0 %v854
        %v936 = vpop.f32.mrb[0].mxu0
        %v937 = vadd.f32 0.0, %v936
        %v938 = vpop.f32.mrb[0].mxu0
        %v939 = vpop.f32.mrb[0].mxu0
        %v940 = vadd.f32 0.0, %v939
        %v941 = vpop.f32.mrb[0].mxu0
        %942 = vmatprep.mubr.bf16.mxu0 0
        %943 = vmatmul.mubr.bf16.gmra.mrb[0].mxu0 %v857
        %v944 = vpop.f32.mrb[0].mxu0
        %v945 = vadd.f32 0.0, %v944
        %v946 = vpop.f32.mrb[0].mxu0
        %v947 = vpop.f32.mrb[0].mxu0
        %v948 = vadd.f32 0.0, %v947
        %v949 = vpop.f32.mrb[0].mxu0
        %950 = vmatprep.mubr.bf16.mxu0 0
        %951 = vmatmul.mubr.bf16.gmra.mrb[0].mxu0 %v860
        %v952 = vpop.f32.mrb[0].mxu0
        %v953 = vadd.f32 0.0, %v952
        %v954 = vpop.f32.mrb[0].mxu0
        %v955 = vpop.f32.mrb[0].mxu0
        %v956 = vadd.f32 0.0, %v955
        %v957 = vpop.f32.mrb[0].mxu0
        %958 = vdwg.mxu0
        %v959 = vld [vmem:[%s5] sm:$0xff]
        %v960 = vld [vmem:[%s5 + $0x8] sm:$0xff]
        %v961 = vld [vmem:[%s5 + $0x10] sm:$0xff]
        %v962 = vld [vmem:[%s5 + $0x18] sm:$0xff]
        %v963 = vld [vmem:[%s5 + $0x20] sm:$0xff]
        %v964 = vld [vmem:[%s5 + $0x28] sm:$0xff]
        %v965 = vld [vmem:[%s5 + $0x30] sm:$0xff]
        %v966 = vld [vmem:[%s5 + $0x38] sm:$0xff]
        %v967 = vld [vmem:[%s5 + $0x40] sm:$0xff]
        %v968 = vld [vmem:[%s5 + $0x48] sm:$0xff]
        %v969 = vld [vmem:[%s5 + $0x50] sm:$0xff]
        %v970 = vld [vmem:[%s5 + $0x58] sm:$0xff]
        %v971 = vld [vmem:[%s5 + $0x60] sm:$0xff]
        %v972 = vld [vmem:[%s5 + $0x68] sm:$0xff]
        %v973 = vld [vmem:[%s5 + $0x70] sm:$0xff]
        %v974 = vld [vmem:[%s5 + $0x78] sm:$0xff]
        %976 = vset.pattern.permute.xlu0 0
        %977 = vperm.xlu0 %976, %v959
        %v978 = vpop.permute.xlu0 %977
        %981 = vset.pattern.permute.xlu0 0
        %982 = vperm.xlu0 %981, %v960
        %v983 = vpop.permute.xlu0 %982
        %986 = vset.pattern.permute.xlu0 0
        %987 = vperm.xlu0 %986, %v961
        %v988 = vpop.permute.xlu0 %987
        %991 = vset.pattern.permute.xlu0 0
        %992 = vperm.xlu0 %991, %v962
        %v993 = vpop.permute.xlu0 %992
        %996 = vset.pattern.permute.xlu0 0
        %997 = vperm.xlu0 %996, %v963
        %v998 = vpop.permute.xlu0 %997
        %1001 = vset.pattern.permute.xlu0 0
        %1002 = vperm.xlu0 %1001, %v964
        %v1003 = vpop.permute.xlu0 %1002
        %1006 = vset.pattern.permute.xlu0 0
        %1007 = vperm.xlu0 %1006, %v965
        %v1008 = vpop.permute.xlu0 %1007
        %1011 = vset.pattern.permute.xlu0 0
        %1012 = vperm.xlu0 %1011, %v966
        %v1013 = vpop.permute.xlu0 %1012
        %1016 = vset.pattern.permute.xlu0 0
        %1017 = vperm.xlu0 %1016, %v967
        %v1018 = vpop.permute.xlu0 %1017
        %1021 = vset.pattern.permute.xlu0 0
        %1022 = vperm.xlu0 %1021, %v968
        %v1023 = vpop.permute.xlu0 %1022
        %1026 = vset.pattern.permute.xlu0 0
        %1027 = vperm.xlu0 %1026, %v969
        %v1028 = vpop.permute.xlu0 %1027
        %1031 = vset.pattern.permute.xlu0 0
        %1032 = vperm.xlu0 %1031, %v970
        %v1033 = vpop.permute.xlu0 %1032
        %1036 = vset.pattern.permute.xlu0 0
        %1037 = vperm.xlu0 %1036, %v971
        %v1038 = vpop.permute.xlu0 %1037
        %1041 = vset.pattern.permute.xlu0 0
        %1042 = vperm.xlu0 %1041, %v972
        %v1043 = vpop.permute.xlu0 %1042
        %1046 = vset.pattern.permute.xlu0 0
        %1047 = vperm.xlu0 %1046, %v973
        %v1048 = vpop.permute.xlu0 %1047
        %1051 = vset.pattern.permute.xlu0 0
        %1052 = vperm.xlu0 %1051, %v974
        %v1053 = vpop.permute.xlu0 %1052
        %v1055 = vmul.f32 %v897, %v978
        %v1056 = vmul.f32 %v900, %v983
        %v1057 = vmul.f32 %v905, %v988
        %v1058 = vmul.f32 %v908, %v993
        %v1059 = vmul.f32 %v913, %v998
        %v1060 = vmul.f32 %v916, %v1003
        %v1061 = vmul.f32 %v921, %v1008
        %v1062 = vmul.f32 %v924, %v1013
        %v1063 = vmul.f32 %v929, %v1018
        %v1064 = vmul.f32 %v932, %v1023
        %v1065 = vmul.f32 %v937, %v1028
        %v1066 = vmul.f32 %v940, %v1033
        %v1067 = vmul.f32 %v945, %v1038
        %v1068 = vmul.f32 %v948, %v1043
        %v1069 = vmul.f32 %v953, %v1048
        %v1070 = vmul.f32 %v956, %v1053
        %v1071 = vld [vmem:[%s6] sm:$0xff]
        %v1072 = vld [vmem:[%s6 + $0x8] sm:$0xff]
        %v1073 = vld [vmem:[%s6 + $0x10] sm:$0xff]
        %v1074 = vld [vmem:[%s6 + $0x18] sm:$0xff]
        %v1075 = vld [vmem:[%s6 + $0x20] sm:$0xff]
        %v1076 = vld [vmem:[%s6 + $0x28] sm:$0xff]
        %v1077 = vld [vmem:[%s6 + $0x30] sm:$0xff]
        %v1078 = vld [vmem:[%s6 + $0x38] sm:$0xff]
        %v1079 = vld [vmem:[%s6 + $0x40] sm:$0xff]
        %v1080 = vld [vmem:[%s6 + $0x48] sm:$0xff]
        %v1081 = vld [vmem:[%s6 + $0x50] sm:$0xff]
        %v1082 = vld [vmem:[%s6 + $0x58] sm:$0xff]
        %v1083 = vld [vmem:[%s6 + $0x60] sm:$0xff]
        %v1084 = vld [vmem:[%s6 + $0x68] sm:$0xff]
        %v1085 = vld [vmem:[%s6 + $0x70] sm:$0xff]
        %v1086 = vld [vmem:[%s6 + $0x78] sm:$0xff]
        %1088 = vset.pattern.permute.xlu0 0
        %1089 = vperm.xlu0 %1088, %v1071
        %v1090 = vpop.permute.xlu0 %1089
        %1093 = vset.pattern.permute.xlu0 0
        %1094 = vperm.xlu0 %1093, %v1072
        %v1095 = vpop.permute.xlu0 %1094
        %1098 = vset.pattern.permute.xlu0 0
        %1099 = vperm.xlu0 %1098, %v1073
        %v1100 = vpop.permute.xlu0 %1099
        %1103 = vset.pattern.permute.xlu0 0
        %1104 = vperm.xlu0 %1103, %v1074
        %v1105 = vpop.permute.xlu0 %1104
        %1108 = vset.pattern.permute.xlu0 0
        %1109 = vperm.xlu0 %1108, %v1075
        %v1110 = vpop.permute.xlu0 %1109
        %1113 = vset.pattern.permute.xlu0 0
        %1114 = vperm.xlu0 %1113, %v1076
        %v1115 = vpop.permute.xlu0 %1114
        %1118 = vset.pattern.permute.xlu0 0
        %1119 = vperm.xlu0 %1118, %v1077
        %v1120 = vpop.permute.xlu0 %1119
        %1123 = vset.pattern.permute.xlu0 0
        %1124 = vperm.xlu0 %1123, %v1078
        %v1125 = vpop.permute.xlu0 %1124
        %1128 = vset.pattern.permute.xlu0 0
        %1129 = vperm.xlu0 %1128, %v1079
        %v1130 = vpop.permute.xlu0 %1129
        %1133 = vset.pattern.permute.xlu0 0
        %1134 = vperm.xlu0 %1133, %v1080
        %v1135 = vpop.permute.xlu0 %1134
        %1138 = vset.pattern.permute.xlu0 0
        %1139 = vperm.xlu0 %1138, %v1081
        %v1140 = vpop.permute.xlu0 %1139
        %1143 = vset.pattern.permute.xlu0 0
        %1144 = vperm.xlu0 %1143, %v1082
        %v1145 = vpop.permute.xlu0 %1144
        %1148 = vset.pattern.permute.xlu0 0
        %1149 = vperm.xlu0 %1148, %v1083
        %v1150 = vpop.permute.xlu0 %1149
        %1153 = vset.pattern.permute.xlu0 0
        %1154 = vperm.xlu0 %1153, %v1084
        %v1155 = vpop.permute.xlu0 %1154
        %1158 = vset.pattern.permute.xlu0 0
        %1159 = vperm.xlu0 %1158, %v1085
        %v1160 = vpop.permute.xlu0 %1159
        %1163 = vset.pattern.permute.xlu0 0
        %1164 = vperm.xlu0 %1163, %v1086
        %v1165 = vpop.permute.xlu0 %1164
        %v1167 = vadd.f32 %v1055, %v1090
        %v1168 = vadd.f32 %v1056, %v1095
        %v1169 = vadd.f32 %v1057, %v1100
        %v1170 = vadd.f32 %v1058, %v1105
        %v1171 = vadd.f32 %v1059, %v1110
        %v1172 = vadd.f32 %v1060, %v1115
        %v1173 = vadd.f32 %v1061, %v1120
        %v1174 = vadd.f32 %v1062, %v1125
        %v1175 = vadd.f32 %v1063, %v1130
        %v1176 = vadd.f32 %v1064, %v1135
        %v1177 = vadd.f32 %v1065, %v1140
        %v1178 = vadd.f32 %v1066, %v1145
        %v1179 = vadd.f32 %v1067, %v1150
        %v1180 = vadd.f32 %v1068, %v1155
        %v1181 = vadd.f32 %v1069, %v1160
        %v1182 = vadd.f32 %v1070, %v1165
        %v1183 = vmax.f32 %v1167, 0.0
        %v1184 = vmax.f32 %v1168, 0.0
        %v1185 = vmax.f32 %v1169, 0.0
        %v1186 = vmax.f32 %v1170, 0.0
        %v1187 = vmax.f32 %v1171, 0.0
        %v1188 = vmax.f32 %v1172, 0.0
        %v1189 = vmax.f32 %v1173, 0.0
        %v1190 = vmax.f32 %v1174, 0.0
        %v1191 = vmax.f32 %v1175, 0.0
        %v1192 = vmax.f32 %v1176, 0.0
        %v1193 = vmax.f32 %v1177, 0.0
        %v1194 = vmax.f32 %v1178, 0.0
        %v1195 = vmax.f32 %v1179, 0.0
        %v1196 = vmax.f32 %v1180, 0.0
        %v1197 = vmax.f32 %v1181, 0.0
        %v1198 = vmax.f32 %v1182, 0.0
        %v1199 = vld [vmem:[%s7] sm:$0xf]
        %v1200 = vld [vmem:[%s7 + $0x4] sm:$0xf]
        %v1201 = vld [vmem:[%s7 + $0x8] sm:$0xf]
        %v1202 = vld [vmem:[%s7 + $0xc] sm:$0xf]
        %v1203 = vld [vmem:[%s7 + $0x10] sm:$0xf]
        %v1204 = vld [vmem:[%s7 + $0x14] sm:$0xf]
        %v1205 = vld [vmem:[%s7 + $0x18] sm:$0xf]
        %v1206 = vld [vmem:[%s7 + $0x1c] sm:$0xf]
        %v1207 = vld [vmem:[%s7 + $0x20] sm:$0xf]
        %v1208 = vld [vmem:[%s7 + $0x24] sm:$0xf]
        %v1209 = vld [vmem:[%s7 + $0x28] sm:$0xf]
        %v1210 = vld [vmem:[%s7 + $0x2c] sm:$0xf]
        %v1211 = vld [vmem:[%s7 + $0x30] sm:$0xf]
        %v1212 = vld [vmem:[%s7 + $0x34] sm:$0xf]
        %v1213 = vld [vmem:[%s7 + $0x38] sm:$0xf]
        %v1214 = vld [vmem:[%s7 + $0x3c] sm:$0xf]
        %v1215 = vld [vmem:[%s7 + $0x40] sm:$0xf]
        %v1216 = vld [vmem:[%s7 + $0x44] sm:$0xf]
        %v1217 = vld [vmem:[%s7 + $0x48] sm:$0xf]
        %v1218 = vld [vmem:[%s7 + $0x4c] sm:$0xf]
        %v1219 = vld [vmem:[%s7 + $0x50] sm:$0xf]
        %v1220 = vld [vmem:[%s7 + $0x54] sm:$0xf]
        %v1221 = vld [vmem:[%s7 + $0x58] sm:$0xf]
        %v1222 = vld [vmem:[%s7 + $0x5c] sm:$0xf]
        %v1223 = vld [vmem:[%s7 + $0x60] sm:$0xf]
        %v1224 = vld [vmem:[%s7 + $0x64] sm:$0xf]
        %v1225 = vld [vmem:[%s7 + $0x68] sm:$0xf]
        %v1226 = vld [vmem:[%s7 + $0x6c] sm:$0xf]
        %v1227 = vld [vmem:[%s7 + $0x70] sm:$0xf]
        %v1228 = vld [vmem:[%s7 + $0x74] sm:$0xf]
        %v1229 = vld [vmem:[%s7 + $0x78] sm:$0xf]
        %v1230 = vld [vmem:[%s7 + $0x7c] sm:$0xf]
        %v1231 = vld [vmem:[%s7 + $0x80] sm:$0xf]
        %v1232 = vld [vmem:[%s7 + $0x84] sm:$0xf]
        %v1233 = vld [vmem:[%s7 + $0x88] sm:$0xf]
        %v1234 = vld [vmem:[%s7 + $0x8c] sm:$0xf]
        %v1235 = vld [vmem:[%s7 + $0x90] sm:$0xf]
        %v1236 = vld [vmem:[%s7 + $0x94] sm:$0xf]
        %v1237 = vld [vmem:[%s7 + $0x98] sm:$0xf]
        %v1238 = vld [vmem:[%s7 + $0x9c] sm:$0xf]
        %v1239 = vld [vmem:[%s7 + $0xa0] sm:$0xf]
        %v1240 = vld [vmem:[%s7 + $0xa4] sm:$0xf]
        %v1241 = vld [vmem:[%s7 + $0xa8] sm:$0xf]
        %v1242 = vld [vmem:[%s7 + $0xac] sm:$0xf]
        %v1243 = vld [vmem:[%s7 + $0xb0] sm:$0xf]
        %v1244 = vld [vmem:[%s7 + $0xb4] sm:$0xf]
        %v1245 = vld [vmem:[%s7 + $0xb8] sm:$0xf]
        %v1246 = vld [vmem:[%s7 + $0xbc] sm:$0xf]
        %v1247 = vld [vmem:[%s7 + $0xc0] sm:$0xf]
        %v1248 = vld [vmem:[%s7 + $0xc4] sm:$0xf]
        %v1249 = vld [vmem:[%s7 + $0xc8] sm:$0xf]
        %v1250 = vld [vmem:[%s7 + $0xcc] sm:$0xf]
        %v1251 = vld [vmem:[%s7 + $0xd0] sm:$0xf]
        %v1252 = vld [vmem:[%s7 + $0xd4] sm:$0xf]
        %v1253 = vld [vmem:[%s7 + $0xd8] sm:$0xf]
        %v1254 = vld [vmem:[%s7 + $0xdc] sm:$0xf]
        %v1255 = vld [vmem:[%s7 + $0xe0] sm:$0xf]
        %v1256 = vld [vmem:[%s7 + $0xe4] sm:$0xf]
        %v1257 = vld [vmem:[%s7 + $0xe8] sm:$0xf]
        %v1258 = vld [vmem:[%s7 + $0xec] sm:$0xf]
        %v1259 = vld [vmem:[%s7 + $0xf0] sm:$0xf]
        %v1260 = vld [vmem:[%s7 + $0xf4] sm:$0xf]
        %v1261 = vld [vmem:[%s7 + $0xf8] sm:$0xf]
        %v1262 = vld [vmem:[%s7 + $0xfc] sm:$0xf]
        %v1263 = vld [vmem:[%s7 + $0x100] sm:$0xf]
        %v1264 = vld [vmem:[%s7 + $0x104] sm:$0xf]
        %v1265 = vld [vmem:[%s7 + $0x108] sm:$0xf]
        %v1266 = vld [vmem:[%s7 + $0x10c] sm:$0xf]
        %v1267 = vld [vmem:[%s7 + $0x110] sm:$0xf]
        %v1268 = vld [vmem:[%s7 + $0x114] sm:$0xf]
        %v1269 = vld [vmem:[%s7 + $0x118] sm:$0xf]
        %v1270 = vld [vmem:[%s7 + $0x11c] sm:$0xf]
        %v1271 = vld [vmem:[%s7 + $0x120] sm:$0xf]
        %v1272 = vld [vmem:[%s7 + $0x124] sm:$0xf]
        %v1273 = vld [vmem:[%s7 + $0x128] sm:$0xf]
        %v1274 = vld [vmem:[%s7 + $0x12c] sm:$0xf]
        %v1275 = vld [vmem:[%s7 + $0x130] sm:$0xf]
        %v1276 = vld [vmem:[%s7 + $0x134] sm:$0xf]
        %v1277 = vld [vmem:[%s7 + $0x138] sm:$0xf]
        %v1278 = vld [vmem:[%s7 + $0x13c] sm:$0xf]
        %v1279 = vld [vmem:[%s7 + $0x140] sm:$0xf]
        %v1280 = vld [vmem:[%s7 + $0x144] sm:$0xf]
        %v1281 = vld [vmem:[%s7 + $0x148] sm:$0xf]
        %v1282 = vld [vmem:[%s7 + $0x14c] sm:$0xf]
        %v1283 = vld [vmem:[%s7 + $0x150] sm:$0xf]
        %v1284 = vld [vmem:[%s7 + $0x154] sm:$0xf]
        %v1285 = vld [vmem:[%s7 + $0x158] sm:$0xf]
        %v1286 = vld [vmem:[%s7 + $0x15c] sm:$0xf]
        %v1287 = vld [vmem:[%s7 + $0x160] sm:$0xf]
        %v1288 = vld [vmem:[%s7 + $0x164] sm:$0xf]
        %v1289 = vld [vmem:[%s7 + $0x168] sm:$0xf]
        %v1290 = vld [vmem:[%s7 + $0x16c] sm:$0xf]
        %v1291 = vld [vmem:[%s7 + $0x170] sm:$0xf]
        %v1292 = vld [vmem:[%s7 + $0x174] sm:$0xf]
        %v1293 = vld [vmem:[%s7 + $0x178] sm:$0xf]
        %v1294 = vld [vmem:[%s7 + $0x17c] sm:$0xf]
        %v1295 = vld [vmem:[%s7 + $0x180] sm:$0xf]
        %v1296 = vld [vmem:[%s7 + $0x184] sm:$0xf]
        %v1297 = vld [vmem:[%s7 + $0x188] sm:$0xf]
        %v1298 = vld [vmem:[%s7 + $0x18c] sm:$0xf]
        %v1299 = vld [vmem:[%s7 + $0x190] sm:$0xf]
        %v1300 = vld [vmem:[%s7 + $0x194] sm:$0xf]
        %v1301 = vld [vmem:[%s7 + $0x198] sm:$0xf]
        %v1302 = vld [vmem:[%s7 + $0x19c] sm:$0xf]
        %v1303 = vld [vmem:[%s7 + $0x1a0] sm:$0xf]
        %v1304 = vld [vmem:[%s7 + $0x1a4] sm:$0xf]
        %v1305 = vld [vmem:[%s7 + $0x1a8] sm:$0xf]
        %v1306 = vld [vmem:[%s7 + $0x1ac] sm:$0xf]
        %v1307 = vld [vmem:[%s7 + $0x1b0] sm:$0xf]
        %v1308 = vld [vmem:[%s7 + $0x1b4] sm:$0xf]
        %v1309 = vld [vmem:[%s7 + $0x1b8] sm:$0xf]
        %v1310 = vld [vmem:[%s7 + $0x1bc] sm:$0xf]
        %v1311 = vld [vmem:[%s7 + $0x1c0] sm:$0xf]
        %v1312 = vld [vmem:[%s7 + $0x1c4] sm:$0xf]
        %v1313 = vld [vmem:[%s7 + $0x1c8] sm:$0xf]
        %v1314 = vld [vmem:[%s7 + $0x1cc] sm:$0xf]
        %v1315 = vld [vmem:[%s7 + $0x1d0] sm:$0xf]
        %v1316 = vld [vmem:[%s7 + $0x1d4] sm:$0xf]
        %v1317 = vld [vmem:[%s7 + $0x1d8] sm:$0xf]
        %v1318 = vld [vmem:[%s7 + $0x1dc] sm:$0xf]
        %v1319 = vld [vmem:[%s7 + $0x1e0] sm:$0xf]
        %v1320 = vld [vmem:[%s7 + $0x1e4] sm:$0xf]
        %v1321 = vld [vmem:[%s7 + $0x1e8] sm:$0xf]
        %v1322 = vld [vmem:[%s7 + $0x1ec] sm:$0xf]
        %v1323 = vld [vmem:[%s7 + $0x1f0] sm:$0xf]
        %v1324 = vld [vmem:[%s7 + $0x1f4] sm:$0xf]
        %v1325 = vld [vmem:[%s7 + $0x1f8] sm:$0xf]
        %v1326 = vld [vmem:[%s7 + $0x1fc] sm:$0xf]
        %v1327 = vpack.c.bf16 %v1184, %v1183
        %v1328 = vpack.c.bf16 %v1186, %v1185
        %v1329 = vpack.c.bf16 %v1188, %v1187
        %v1330 = vpack.c.bf16 %v1190, %v1189
        %v1331 = vpack.c.bf16 %v1192, %v1191
        %v1332 = vpack.c.bf16 %v1194, %v1193
        %v1333 = vpack.c.bf16 %v1196, %v1195
        %v1334 = vpack.c.bf16 %v1198, %v1197
        %v1463 = vunpack.c.l.b16 %v1199
        %v1464 = vunpack.c.l.b16 %v1200
        %v1465 = vunpack.c.l.b16 %v1201
        %v1466 = vunpack.c.l.b16 %v1202
        %v1467 = vunpack.c.l.b16 %v1203
        %v1468 = vunpack.c.l.b16 %v1204
        %v1469 = vunpack.c.l.b16 %v1205
        %v1470 = vunpack.c.l.b16 %v1206
        %v1471 = vunpack.c.l.b16 %v1207
        %v1472 = vunpack.c.l.b16 %v1208
        %v1473 = vunpack.c.l.b16 %v1209
        %v1474 = vunpack.c.l.b16 %v1210
        %v1475 = vunpack.c.l.b16 %v1211
        %v1476 = vunpack.c.l.b16 %v1212
        %v1477 = vunpack.c.l.b16 %v1213
        %v1478 = vunpack.c.l.b16 %v1214
        %v1479 = vunpack.c.l.b16 %v1215
        %v1480 = vunpack.c.l.b16 %v1216
        %v1481 = vunpack.c.l.b16 %v1217
        %v1482 = vunpack.c.l.b16 %v1218
        %v1483 = vunpack.c.l.b16 %v1219
        %v1484 = vunpack.c.l.b16 %v1220
        %v1485 = vunpack.c.l.b16 %v1221
        %v1486 = vunpack.c.l.b16 %v1222
        %v1487 = vunpack.c.l.b16 %v1223
        %v1488 = vunpack.c.l.b16 %v1224
        %v1489 = vunpack.c.l.b16 %v1225
        %v1490 = vunpack.c.l.b16 %v1226
        %v1491 = vunpack.c.l.b16 %v1227
        %v1492 = vunpack.c.l.b16 %v1228
        %v1493 = vunpack.c.l.b16 %v1229
        %v1494 = vunpack.c.l.b16 %v1230
        %v1495 = vunpack.c.l.b16 %v1231
        %v1496 = vunpack.c.l.b16 %v1232
        %v1497 = vunpack.c.l.b16 %v1233
        %v1498 = vunpack.c.l.b16 %v1234
        %v1499 = vunpack.c.l.b16 %v1235
        %v1500 = vunpack.c.l.b16 %v1236
        %v1501 = vunpack.c.l.b16 %v1237
        %v1502 = vunpack.c.l.b16 %v1238
        %v1503 = vunpack.c.l.b16 %v1239
        %v1504 = vunpack.c.l.b16 %v1240
        %v1505 = vunpack.c.l.b16 %v1241
        %v1506 = vunpack.c.l.b16 %v1242
        %v1507 = vunpack.c.l.b16 %v1243
        %v1508 = vunpack.c.l.b16 %v1244
        %v1509 = vunpack.c.l.b16 %v1245
        %v1510 = vunpack.c.l.b16 %v1246
        %v1511 = vunpack.c.l.b16 %v1247
        %v1512 = vunpack.c.l.b16 %v1248
        %v1513 = vunpack.c.l.b16 %v1249
        %v1514 = vunpack.c.l.b16 %v1250
        %v1515 = vunpack.c.l.b16 %v1251
        %v1516 = vunpack.c.l.b16 %v1252
        %v1517 = vunpack.c.l.b16 %v1253
        %v1518 = vunpack.c.l.b16 %v1254
        %v1519 = vunpack.c.l.b16 %v1255
        %v1520 = vunpack.c.l.b16 %v1256
        %v1521 = vunpack.c.l.b16 %v1257
        %v1522 = vunpack.c.l.b16 %v1258
        %v1523 = vunpack.c.l.b16 %v1259
        %v1524 = vunpack.c.l.b16 %v1260
        %v1525 = vunpack.c.l.b16 %v1261
        %v1526 = vunpack.c.l.b16 %v1262
        %v1527 = vunpack.c.l.b16 %v1263
        %v1528 = vunpack.c.l.b16 %v1264
        %v1529 = vunpack.c.l.b16 %v1265
        %v1530 = vunpack.c.l.b16 %v1266
        %v1531 = vunpack.c.l.b16 %v1267
        %v1532 = vunpack.c.l.b16 %v1268
        %v1533 = vunpack.c.l.b16 %v1269
        %v1534 = vunpack.c.l.b16 %v1270
        %v1535 = vunpack.c.l.b16 %v1271
        %v1536 = vunpack.c.l.b16 %v1272
        %v1537 = vunpack.c.l.b16 %v1273
        %v1538 = vunpack.c.l.b16 %v1274
        %v1539 = vunpack.c.l.b16 %v1275
        %v1540 = vunpack.c.l.b16 %v1276
        %v1541 = vunpack.c.l.b16 %v1277
        %v1542 = vunpack.c.l.b16 %v1278
        %v1543 = vunpack.c.l.b16 %v1279
        %v1544 = vunpack.c.l.b16 %v1280
        %v1545 = vunpack.c.l.b16 %v1281
        %v1546 = vunpack.c.l.b16 %v1282
        %v1547 = vunpack.c.l.b16 %v1283
        %v1548 = vunpack.c.l.b16 %v1284
        %v1549 = vunpack.c.l.b16 %v1285
        %v1550 = vunpack.c.l.b16 %v1286
        %v1551 = vunpack.c.l.b16 %v1287
        %v1552 = vunpack.c.l.b16 %v1288
        %v1553 = vunpack.c.l.b16 %v1289
        %v1554 = vunpack.c.l.b16 %v1290
        %v1555 = vunpack.c.l.b16 %v1291
        %v1556 = vunpack.c.l.b16 %v1292
        %v1557 = vunpack.c.l.b16 %v1293
        %v1558 = vunpack.c.l.b16 %v1294
        %v1559 = vunpack.c.l.b16 %v1295
        %v1560 = vunpack.c.l.b16 %v1296
        %v1561 = vunpack.c.l.b16 %v1297
        %v1562 = vunpack.c.l.b16 %v1298
        %v1563 = vunpack.c.l.b16 %v1299
        %v1564 = vunpack.c.l.b16 %v1300
        %v1565 = vunpack.c.l.b16 %v1301
        %v1566 = vunpack.c.l.b16 %v1302
        %v1567 = vunpack.c.l.b16 %v1303
        %v1568 = vunpack.c.l.b16 %v1304
        %v1569 = vunpack.c.l.b16 %v1305
        %v1570 = vunpack.c.l.b16 %v1306
        %v1571 = vunpack.c.l.b16 %v1307
        %v1572 = vunpack.c.l.b16 %v1308
        %v1573 = vunpack.c.l.b16 %v1309
        %v1574 = vunpack.c.l.b16 %v1310
        %v1575 = vunpack.c.l.b16 %v1311
        %v1576 = vunpack.c.l.b16 %v1312
        %v1577 = vunpack.c.l.b16 %v1313
        %v1578 = vunpack.c.l.b16 %v1314
        %v1579 = vunpack.c.l.b16 %v1315
        %v1580 = vunpack.c.l.b16 %v1316
        %v1581 = vunpack.c.l.b16 %v1317
        %v1582 = vunpack.c.l.b16 %v1318
        %v1583 = vunpack.c.l.b16 %v1319
        %v1584 = vunpack.c.l.b16 %v1320
        %v1585 = vunpack.c.l.b16 %v1321
        %v1586 = vunpack.c.l.b16 %v1322
        %v1587 = vunpack.c.l.b16 %v1323
        %v1588 = vunpack.c.l.b16 %v1324
        %v1589 = vunpack.c.l.b16 %v1325
        %v1590 = vunpack.c.l.b16 %v1326
        %v1591 = vpack.c.b16 %v1464, %v1463
        %v1592 = vpack.c.b16 %v1466, %v1465
        %v1593 = vpack.c.b16 %v1468, %v1467
        %v1594 = vpack.c.b16 %v1470, %v1469
        %v1595 = vpack.c.b16 %v1472, %v1471
        %v1596 = vpack.c.b16 %v1474, %v1473
        %v1597 = vpack.c.b16 %v1476, %v1475
        %v1598 = vpack.c.b16 %v1478, %v1477
        %v1599 = vpack.c.b16 %v1480, %v1479
        %v1600 = vpack.c.b16 %v1482, %v1481
        %v1601 = vpack.c.b16 %v1484, %v1483
        %v1602 = vpack.c.b16 %v1486, %v1485
        %v1603 = vpack.c.b16 %v1488, %v1487
        %v1604 = vpack.c.b16 %v1490, %v1489
        %v1605 = vpack.c.b16 %v1492, %v1491
        %v1606 = vpack.c.b16 %v1494, %v1493
        %v1607 = vpack.c.b16 %v1496, %v1495
        %v1608 = vpack.c.b16 %v1498, %v1497
        %v1609 = vpack.c.b16 %v1500, %v1499
        %v1610 = vpack.c.b16 %v1502, %v1501
        %v1611 = vpack.c.b16 %v1504, %v1503
        %v1612 = vpack.c.b16 %v1506, %v1505
        %v1613 = vpack.c.b16 %v1508, %v1507
        %v1614 = vpack.c.b16 %v1510, %v1509
        %v1615 = vpack.c.b16 %v1512, %v1511
        %v1616 = vpack.c.b16 %v1514, %v1513
        %v1617 = vpack.c.b16 %v1516, %v1515
        %v1618 = vpack.c.b16 %v1518, %v1517
        %v1619 = vpack.c.b16 %v1520, %v1519
        %v1620 = vpack.c.b16 %v1522, %v1521
        %v1621 = vpack.c.b16 %v1524, %v1523
        %v1622 = vpack.c.b16 %v1526, %v1525
        %v1623 = vpack.c.b16 %v1528, %v1527
        %v1624 = vpack.c.b16 %v1530, %v1529
        %v1625 = vpack.c.b16 %v1532, %v1531
        %v1626 = vpack.c.b16 %v1534, %v1533
        %v1627 = vpack.c.b16 %v1536, %v1535
        %v1628 = vpack.c.b16 %v1538, %v1537
        %v1629 = vpack.c.b16 %v1540, %v1539
        %v1630 = vpack.c.b16 %v1542, %v1541
        %v1631 = vpack.c.b16 %v1544, %v1543
        %v1632 = vpack.c.b16 %v1546, %v1545
        %v1633 = vpack.c.b16 %v1548, %v1547
        %v1634 = vpack.c.b16 %v1550, %v1549
        %v1635 = vpack.c.b16 %v1552, %v1551
        %v1636 = vpack.c.b16 %v1554, %v1553
        %v1637 = vpack.c.b16 %v1556, %v1555
        %v1638 = vpack.c.b16 %v1558, %v1557
        %v1639 = vpack.c.b16 %v1560, %v1559
        %v1640 = vpack.c.b16 %v1562, %v1561
        %v1641 = vpack.c.b16 %v1564, %v1563
        %v1642 = vpack.c.b16 %v1566, %v1565
        %v1643 = vpack.c.b16 %v1568, %v1567
        %v1644 = vpack.c.b16 %v1570, %v1569
        %v1645 = vpack.c.b16 %v1572, %v1571
        %v1646 = vpack.c.b16 %v1574, %v1573
        %v1647 = vpack.c.b16 %v1576, %v1575
        %v1648 = vpack.c.b16 %v1578, %v1577
        %v1649 = vpack.c.b16 %v1580, %v1579
        %v1650 = vpack.c.b16 %v1582, %v1581
        %v1651 = vpack.c.b16 %v1584, %v1583
        %v1652 = vpack.c.b16 %v1586, %v1585
        %v1653 = vpack.c.b16 %v1588, %v1587
        %v1654 = vpack.c.b16 %v1590, %v1589
        %1719 = vmatprep.subr.bf16.mxu0 0
        %1720 = vmatpush1.bf16.msra.mxu0 %v1327
        %1721 = vmatprep.subr.bf16.mxu0 0
        %1722 = vmatpush1.bf16.msra.mxu0 %v1328
        %1723 = vmatprep.subr.bf16.mxu0 0
        %1724 = vmatpush1.bf16.msra.mxu0 %v1329
        %1725 = vmatprep.subr.bf16.mxu0 0
        %1726 = vmatpush1.bf16.msra.mxu0 %v1330
        %1727 = vmatprep.subr.bf16.mxu0 0
        %1728 = vmatpush1.bf16.msra.mxu0 %v1331
        %1729 = vmatprep.subr.bf16.mxu0 0
        %1730 = vmatpush1.bf16.msra.mxu0 %v1332
        %1731 = vmatprep.subr.bf16.mxu0 0
        %1732 = vmatpush1.bf16.msra.mxu0 %v1333
        %1733 = vmatprep.subr.bf16.mxu0 0
        %1734 = vmatpush1.bf16.msra.mxu0 %v1334
        %1735 = vmatprep.subr.bf16.mxu0 0
        %1736 = vmatpush1.bf16.msra.mxu0 0
        %1737 = vmatprep.subr.bf16.mxu0 0
        %1738 = vmatpush1.bf16.msra.mxu0 0
        %1739 = vmatprep.subr.bf16.mxu0 0
        %1740 = vmatpush1.bf16.msra.mxu0 0
        %1741 = vmatprep.subr.bf16.mxu0 0
        %1742 = vmatpush1.bf16.msra.mxu0 0
        %1743 = vmatprep.subr.bf16.mxu0 0
        %1744 = vmatpush1.bf16.msra.mxu0 0
        %1745 = vmatprep.subr.bf16.mxu0 0
        %1746 = vmatpush1.bf16.msra.mxu0 0
        %1747 = vmatprep.subr.bf16.mxu0 0
        %1748 = vmatpush1.bf16.msra.mxu0 0
        %1749 = vmatprep.subr.bf16.mxu0 0
        %1750 = vmatpush1.bf16.msra.mxu0 0
        %1751 = vmatprep.mubr.bf16.mxu0 0
        %1752 = vmatmul.mubr.bf16.gmra.mrb[0].mxu0 %v1591
        %v1753 = vpop.f32.mrb[0].mxu0
        %v1754 = vadd.f32 0.0, %v1753
        %v1755 = vpop.f32.mrb[0].mxu0
        %v1756 = vpop.f32.mrb[0].mxu0
        %v1757 = vadd.f32 0.0, %v1756
        %v1758 = vpop.f32.mrb[0].mxu0
        %1759 = vmatprep.mubr.bf16.mxu0 0
        %1760 = vmatmul.mubr.bf16.gmra.mrb[0].mxu0 %v1592
        %v1761 = vpop.f32.mrb[0].mxu0
        %v1762 = vadd.f32 0.0, %v1761
        %v1763 = vpop.f32.mrb[0].mxu0
        %v1764 = vpop.f32.mrb[0].mxu0
        %v1765 = vadd.f32 0.0, %v1764
        %v1766 = vpop.f32.mrb[0].mxu0
        %1767 = vmatprep.mubr.bf16.mxu0 0
        %1768 = vmatmul.mubr.bf16.gmra.mrb[0].mxu0 %v1593
        %v1769 = vpop.f32.mrb[0].mxu0
        %v1770 = vadd.f32 0.0, %v1769
        %v1771 = vpop.f32.mrb[0].mxu0
        %v1772 = vpop.f32.mrb[0].mxu0
        %v1773 = vadd.f32 0.0, %v1772
        %v1774 = vpop.f32.mrb[0].mxu0
        %1775 = vmatprep.mubr.bf16.mxu0 0
        %1776 = vmatmul.mubr.bf16.gmra.mrb[0].mxu0 %v1594
        %v1777 = vpop.f32.mrb[0].mxu0
        %v1778 = vadd.f32 0.0, %v1777
        %v1779 = vpop.f32.mrb[0].mxu0
        %v1780 = vpop.f32.mrb[0].mxu0
        %v1781 = vadd.f32 0.0, %v1780
        %v1782 = vpop.f32.mrb[0].mxu0
        %1783 = vmatprep.mubr.bf16.mxu0 0
        %1784 = vmatmul.mubr.bf16.gmra.mrb[0].mxu0 %v1595
        %v1785 = vpop.f32.mrb[0].mxu0
        %v1786 = vadd.f32 0.0, %v1785
        %v1787 = vpop.f32.mrb[0].mxu0
        %v1788 = vpop.f32.mrb[0].mxu0
        %v1789 = vadd.f32 0.0, %v1788
        %v1790 = vpop.f32.mrb[0].mxu0
        %1791 = vmatprep.mubr.bf16.mxu0 0
        %1792 = vmatmul.mubr.bf16.gmra.mrb[0].mxu0 %v1596
        %v1793 = vpop.f32.mrb[0].mxu0
        %v1794 = vadd.f32 0.0, %v1793
        %v1795 = vpop.f32.mrb[0].mxu0
        %v1796 = vpop.f32.mrb[0].mxu0
        %v1797 = vadd.f32 0.0, %v1796
        %v1798 = vpop.f32.mrb[0].mxu0
        %1799 = vmatprep.mubr.bf16.mxu0 0
        %1800 = vmatmul.mubr.bf16.gmra.mrb[0].mxu0 %v1597
        %v1801 = vpop.f32.mrb[0].mxu0
        %v1802 = vadd.f32 0.0, %v1801
        %v1803 = vpop.f32.mrb[0].mxu0
        %v1804 = vpop.f32.mrb[0].mxu0
        %v1805 = vadd.f32 0.0, %v1804
        %v1806 = vpop.f32.mrb[0].mxu0
        %1807 = vmatprep.mubr.bf16.mxu0 0
        %1808 = vmatmul.mubr.bf16.gmra.mrb[0].mxu0 %v1598
        %v1809 = vpop.f32.mrb[0].mxu0
        %v1810 = vadd.f32 0.0, %v1809
        %v1811 = vpop.f32.mrb[0].mxu0
        %v1812 = vpop.f32.mrb[0].mxu0
        %v1813 = vadd.f32 0.0, %v1812
        %v1814 = vpop.f32.mrb[0].mxu0
        %1815 = vmatprep.mubr.bf16.mxu0 0
        %1816 = vmatmul.mubr.bf16.gmra.mrb[0].mxu0 %v1599
        %v1817 = vpop.f32.mrb[0].mxu0
        %v1818 = vadd.f32 0.0, %v1817
        %v1819 = vpop.f32.mrb[0].mxu0
        %v1820 = vpop.f32.mrb[0].mxu0
        %v1821 = vadd.f32 0.0, %v1820
        %v1822 = vpop.f32.mrb[0].mxu0
        %1823 = vmatprep.mubr.bf16.mxu0 0
        %1824 = vmatmul.mubr.bf16.gmra.mrb[0].mxu0 %v1600
        %v1825 = vpop.f32.mrb[0].mxu0
        %v1826 = vadd.f32 0.0, %v1825
        %v1827 = vpop.f32.mrb[0].mxu0
        %v1828 = vpop.f32.mrb[0].mxu0
        %v1829 = vadd.f32 0.0, %v1828
        %v1830 = vpop.f32.mrb[0].mxu0
        %1831 = vmatprep.mubr.bf16.mxu0 0
        %1832 = vmatmul.mubr.bf16.gmra.mrb[0].mxu0 %v1601
        %v1833 = vpop.f32.mrb[0].mxu0
        %v1834 = vadd.f32 0.0, %v1833
        %v1835 = vpop.f32.mrb[0].mxu0
        %v1836 = vpop.f32.mrb[0].mxu0
        %v1837 = vadd.f32 0.0, %v1836
        %v1838 = vpop.f32.mrb[0].mxu0
        %1839 = vmatprep.mubr.bf16.mxu0 0
        %1840 = vmatmul.mubr.bf16.gmra.mrb[0].mxu0 %v1602
        %v1841 = vpop.f32.mrb[0].mxu0
        %v1842 = vadd.f32 0.0, %v1841
        %v1843 = vpop.f32.mrb[0].mxu0
        %v1844 = vpop.f32.mrb[0].mxu0
        %v1845 = vadd.f32 0.0, %v1844
        %v1846 = vpop.f32.mrb[0].mxu0
        %1847 = vmatprep.mubr.bf16.mxu0 0
        %1848 = vmatmul.mubr.bf16.gmra.mrb[0].mxu0 %v1603
        %v1849 = vpop.f32.mrb[0].mxu0
        %v1850 = vadd.f32 0.0, %v1849
        %v1851 = vpop.f32.mrb[0].mxu0
        %v1852 = vpop.f32.mrb[0].mxu0
        %v1853 = vadd.f32 0.0, %v1852
        %v1854 = vpop.f32.mrb[0].mxu0
        %1855 = vmatprep.mubr.bf16.mxu0 0
        %1856 = vmatmul.mubr.bf16.gmra.mrb[0].mxu0 %v1604
        %v1857 = vpop.f32.mrb[0].mxu0
        %v1858 = vadd.f32 0.0, %v1857
        %v1859 = vpop.f32.mrb[0].mxu0
        %v1860 = vpop.f32.mrb[0].mxu0
        %v1861 = vadd.f32 0.0, %v1860
        %v1862 = vpop.f32.mrb[0].mxu0
        %1863 = vmatprep.mubr.bf16.mxu0 0
        %1864 = vmatmul.mubr.bf16.gmra.mrb[0].mxu0 %v1605
        %v1865 = vpop.f32.mrb[0].mxu0
        %v1866 = vadd.f32 0.0, %v1865
        %v1867 = vpop.f32.mrb[0].mxu0
        %v1868 = vpop.f32.mrb[0].mxu0
        %v1869 = vadd.f32 0.0, %v1868
        %v1870 = vpop.f32.mrb[0].mxu0
        %1871 = vmatprep.mubr.bf16.mxu0 0
        %1872 = vmatmul.mubr.bf16.gmra.mrb[0].mxu0 %v1606
        %v1873 = vpop.f32.mrb[0].mxu0
        %v1874 = vadd.f32 0.0, %v1873
        %v1875 = vpop.f32.mrb[0].mxu0
        %v1876 = vpop.f32.mrb[0].mxu0
        %v1877 = vadd.f32 0.0, %v1876
        %v1878 = vpop.f32.mrb[0].mxu0
        %1879 = vmatprep.mubr.bf16.mxu0 0
        %1880 = vmatmul.mubr.bf16.gmra.mrb[0].mxu0 %v1607
        %v1881 = vpop.f32.mrb[0].mxu0
        %v1882 = vadd.f32 0.0, %v1881
        %v1883 = vpop.f32.mrb[0].mxu0
        %v1884 = vpop.f32.mrb[0].mxu0
        %v1885 = vadd.f32 0.0, %v1884
        %v1886 = vpop.f32.mrb[0].mxu0
        %1887 = vmatprep.mubr.bf16.mxu0 0
        %1888 = vmatmul.mubr.bf16.gmra.mrb[0].mxu0 %v1608
        %v1889 = vpop.f32.mrb[0].mxu0
        %v1890 = vadd.f32 0.0, %v1889
        %v1891 = vpop.f32.mrb[0].mxu0
        %v1892 = vpop.f32.mrb[0].mxu0
        %v1893 = vadd.f32 0.0, %v1892
        %v1894 = vpop.f32.mrb[0].mxu0
        %1895 = vmatprep.mubr.bf16.mxu0 0
        %1896 = vmatmul.mubr.bf16.gmra.mrb[0].mxu0 %v1609
        %v1897 = vpop.f32.mrb[0].mxu0
        %v1898 = vadd.f32 0.0, %v1897
        %v1899 = vpop.f32.mrb[0].mxu0
        %v1900 = vpop.f32.mrb[0].mxu0
        %v1901 = vadd.f32 0.0, %v1900
        %v1902 = vpop.f32.mrb[0].mxu0
        %1903 = vmatprep.mubr.bf16.mxu0 0
        %1904 = vmatmul.mubr.bf16.gmra.mrb[0].mxu0 %v1610
        %v1905 = vpop.f32.mrb[0].mxu0
        %v1906 = vadd.f32 0.0, %v1905
        %v1907 = vpop.f32.mrb[0].mxu0
        %v1908 = vpop.f32.mrb[0].mxu0
        %v1909 = vadd.f32 0.0, %v1908
        %v1910 = vpop.f32.mrb[0].mxu0
        %1911 = vmatprep.mubr.bf16.mxu0 0
        %1912 = vmatmul.mubr.bf16.gmra.mrb[0].mxu0 %v1611
        %v1913 = vpop.f32.mrb[0].mxu0
        %v1914 = vadd.f32 0.0, %v1913
        %v1915 = vpop.f32.mrb[0].mxu0
        %v1916 = vpop.f32.mrb[0].mxu0
        %v1917 = vadd.f32 0.0, %v1916
        %v1918 = vpop.f32.mrb[0].mxu0
        %1919 = vmatprep.mubr.bf16.mxu0 0
        %1920 = vmatmul.mubr.bf16.gmra.mrb[0].mxu0 %v1612
        %v1921 = vpop.f32.mrb[0].mxu0
        %v1922 = vadd.f32 0.0, %v1921
        %v1923 = vpop.f32.mrb[0].mxu0
        %v1924 = vpop.f32.mrb[0].mxu0
        %v1925 = vadd.f32 0.0, %v1924
        %v1926 = vpop.f32.mrb[0].mxu0
        %1927 = vmatprep.mubr.bf16.mxu0 0
        %1928 = vmatmul.mubr.bf16.gmra.mrb[0].mxu0 %v1613
        %v1929 = vpop.f32.mrb[0].mxu0
        %v1930 = vadd.f32 0.0, %v1929
        %v1931 = vpop.f32.mrb[0].mxu0
        %v1932 = vpop.f32.mrb[0].mxu0
        %v1933 = vadd.f32 0.0, %v1932
        %v1934 = vpop.f32.mrb[0].mxu0
        %1935 = vmatprep.mubr.bf16.mxu0 0
        %1936 = vmatmul.mubr.bf16.gmra.mrb[0].mxu0 %v1614
        %v1937 = vpop.f32.mrb[0].mxu0
        %v1938 = vadd.f32 0.0, %v1937
        %v1939 = vpop.f32.mrb[0].mxu0
        %v1940 = vpop.f32.mrb[0].mxu0
        %v1941 = vadd.f32 0.0, %v1940
        %v1942 = vpop.f32.mrb[0].mxu0
        %1943 = vmatprep.mubr.bf16.mxu0 0
        %1944 = vmatmul.mubr.bf16.gmra.mrb[0].mxu0 %v1615
        %v1945 = vpop.f32.mrb[0].mxu0
        %v1946 = vadd.f32 0.0, %v1945
        %v1947 = vpop.f32.mrb[0].mxu0
        %v1948 = vpop.f32.mrb[0].mxu0
        %v1949 = vadd.f32 0.0, %v1948
        %v1950 = vpop.f32.mrb[0].mxu0
        %1951 = vmatprep.mubr.bf16.mxu0 0
        %1952 = vmatmul.mubr.bf16.gmra.mrb[0].mxu0 %v1616
        %v1953 = vpop.f32.mrb[0].mxu0
        %v1954 = vadd.f32 0.0, %v1953
        %v1955 = vpop.f32.mrb[0].mxu0
        %v1956 = vpop.f32.mrb[0].mxu0
        %v1957 = vadd.f32 0.0, %v1956
        %v1958 = vpop.f32.mrb[0].mxu0
        %1959 = vmatprep.mubr.bf16.mxu0 0
        %1960 = vmatmul.mubr.bf16.gmra.mrb[0].mxu0 %v1617
        %v1961 = vpop.f32.mrb[0].mxu0
        %v1962 = vadd.f32 0.0, %v1961
        %v1963 = vpop.f32.mrb[0].mxu0
        %v1964 = vpop.f32.mrb[0].mxu0
        %v1965 = vadd.f32 0.0, %v1964
        %v1966 = vpop.f32.mrb[0].mxu0
        %1967 = vmatprep.mubr.bf16.mxu0 0
        %1968 = vmatmul.mubr.bf16.gmra.mrb[0].mxu0 %v1618
        %v1969 = vpop.f32.mrb[0].mxu0
        %v1970 = vadd.f32 0.0, %v1969
        %v1971 = vpop.f32.mrb[0].mxu0
        %v1972 = vpop.f32.mrb[0].mxu0
        %v1973 = vadd.f32 0.0, %v1972
        %v1974 = vpop.f32.mrb[0].mxu0
        %1975 = vmatprep.mubr.bf16.mxu0 0
        %1976 = vmatmul.mubr.bf16.gmra.mrb[0].mxu0 %v1619
        %v1977 = vpop.f32.mrb[0].mxu0
        %v1978 = vadd.f32 0.0, %v1977
        %v1979 = vpop.f32.mrb[0].mxu0
        %v1980 = vpop.f32.mrb[0].mxu0
        %v1981 = vadd.f32 0.0, %v1980
        %v1982 = vpop.f32.mrb[0].mxu0
        %1983 = vmatprep.mubr.bf16.mxu0 0
        %1984 = vmatmul.mubr.bf16.gmra.mrb[0].mxu0 %v1620
        %v1985 = vpop.f32.mrb[0].mxu0
        %v1986 = vadd.f32 0.0, %v1985
        %v1987 = vpop.f32.mrb[0].mxu0
        %v1988 = vpop.f32.mrb[0].mxu0
        %v1989 = vadd.f32 0.0, %v1988
        %v1990 = vpop.f32.mrb[0].mxu0
        %1991 = vmatprep.mubr.bf16.mxu0 0
        %1992 = vmatmul.mubr.bf16.gmra.mrb[0].mxu0 %v1621
        %v1993 = vpop.f32.mrb[0].mxu0
        %v1994 = vadd.f32 0.0, %v1993
        %v1995 = vpop.f32.mrb[0].mxu0
        %v1996 = vpop.f32.mrb[0].mxu0
        %v1997 = vadd.f32 0.0, %v1996
        %v1998 = vpop.f32.mrb[0].mxu0
        %1999 = vmatprep.mubr.bf16.mxu0 0
        %2000 = vmatmul.mubr.bf16.gmra.mrb[0].mxu0 %v1622
        %v2001 = vpop.f32.mrb[0].mxu0
        %v2002 = vadd.f32 0.0, %v2001
        %v2003 = vpop.f32.mrb[0].mxu0
        %v2004 = vpop.f32.mrb[0].mxu0
        %v2005 = vadd.f32 0.0, %v2004
        %v2006 = vpop.f32.mrb[0].mxu0
        %2007 = vmatprep.mubr.bf16.mxu0 0
        %2008 = vmatmul.mubr.bf16.gmra.mrb[0].mxu0 %v1623
        %v2009 = vpop.f32.mrb[0].mxu0
        %v2010 = vadd.f32 0.0, %v2009
        %v2011 = vpop.f32.mrb[0].mxu0
        %v2012 = vpop.f32.mrb[0].mxu0
        %v2013 = vadd.f32 0.0, %v2012
        %v2014 = vpop.f32.mrb[0].mxu0
        %2015 = vmatprep.mubr.bf16.mxu0 0
        %2016 = vmatmul.mubr.bf16.gmra.mrb[0].mxu0 %v1624
        %v2017 = vpop.f32.mrb[0].mxu0
        %v2018 = vadd.f32 0.0, %v2017
        %v2019 = vpop.f32.mrb[0].mxu0
        %v2020 = vpop.f32.mrb[0].mxu0
        %v2021 = vadd.f32 0.0, %v2020
        %v2022 = vpop.f32.mrb[0].mxu0
        %2023 = vmatprep.mubr.bf16.mxu0 0
        %2024 = vmatmul.mubr.bf16.gmra.mrb[0].mxu0 %v1625
        %v2025 = vpop.f32.mrb[0].mxu0
        %v2026 = vadd.f32 0.0, %v2025
        %v2027 = vpop.f32.mrb[0].mxu0
        %v2028 = vpop.f32.mrb[0].mxu0
        %v2029 = vadd.f32 0.0, %v2028
        %v2030 = vpop.f32.mrb[0].mxu0
        %2031 = vmatprep.mubr.bf16.mxu0 0
        %2032 = vmatmul.mubr.bf16.gmra.mrb[0].mxu0 %v1626
        %v2033 = vpop.f32.mrb[0].mxu0
        %v2034 = vadd.f32 0.0, %v2033
        %v2035 = vpop.f32.mrb[0].mxu0
        %v2036 = vpop.f32.mrb[0].mxu0
        %v2037 = vadd.f32 0.0, %v2036
        %v2038 = vpop.f32.mrb[0].mxu0
        %2039 = vmatprep.mubr.bf16.mxu0 0
        %2040 = vmatmul.mubr.bf16.gmra.mrb[0].mxu0 %v1627
        %v2041 = vpop.f32.mrb[0].mxu0
        %v2042 = vadd.f32 0.0, %v2041
        %v2043 = vpop.f32.mrb[0].mxu0
        %v2044 = vpop.f32.mrb[0].mxu0
        %v2045 = vadd.f32 0.0, %v2044
        %v2046 = vpop.f32.mrb[0].mxu0
        %2047 = vmatprep.mubr.bf16.mxu0 0
        %2048 = vmatmul.mubr.bf16.gmra.mrb[0].mxu0 %v1628
        %v2049 = vpop.f32.mrb[0].mxu0
        %v2050 = vadd.f32 0.0, %v2049
        %v2051 = vpop.f32.mrb[0].mxu0
        %v2052 = vpop.f32.mrb[0].mxu0
        %v2053 = vadd.f32 0.0, %v2052
        %v2054 = vpop.f32.mrb[0].mxu0
        %2055 = vmatprep.mubr.bf16.mxu0 0
        %2056 = vmatmul.mubr.bf16.gmra.mrb[0].mxu0 %v1629
        %v2057 = vpop.f32.mrb[0].mxu0
        %v2058 = vadd.f32 0.0, %v2057
        %v2059 = vpop.f32.mrb[0].mxu0
        %v2060 = vpop.f32.mrb[0].mxu0
        %v2061 = vadd.f32 0.0, %v2060
        %v2062 = vpop.f32.mrb[0].mxu0
        %2063 = vmatprep.mubr.bf16.mxu0 0
        %2064 = vmatmul.mubr.bf16.gmra.mrb[0].mxu0 %v1630
        %v2065 = vpop.f32.mrb[0].mxu0
        %v2066 = vadd.f32 0.0, %v2065
        %v2067 = vpop.f32.mrb[0].mxu0
        %v2068 = vpop.f32.mrb[0].mxu0
        %v2069 = vadd.f32 0.0, %v2068
        %v2070 = vpop.f32.mrb[0].mxu0
        %2071 = vmatprep.mubr.bf16.mxu0 0
        %2072 = vmatmul.mubr.bf16.gmra.mrb[0].mxu0 %v1631
        %v2073 = vpop.f32.mrb[0].mxu0
        %v2074 = vadd.f32 0.0, %v2073
        %v2075 = vpop.f32.mrb[0].mxu0
        %v2076 = vpop.f32.mrb[0].mxu0
        %v2077 = vadd.f32 0.0, %v2076
        %v2078 = vpop.f32.mrb[0].mxu0
        %2079 = vmatprep.mubr.bf16.mxu0 0
        %2080 = vmatmul.mubr.bf16.gmra.mrb[0].mxu0 %v1632
        %v2081 = vpop.f32.mrb[0].mxu0
        %v2082 = vadd.f32 0.0, %v2081
        %v2083 = vpop.f32.mrb[0].mxu0
        %v2084 = vpop.f32.mrb[0].mxu0
        %v2085 = vadd.f32 0.0, %v2084
        %v2086 = vpop.f32.mrb[0].mxu0
        %2087 = vmatprep.mubr.bf16.mxu0 0
        %2088 = vmatmul.mubr.bf16.gmra.mrb[0].mxu0 %v1633
        %v2089 = vpop.f32.mrb[0].mxu0
        %v2090 = vadd.f32 0.0, %v2089
        %v2091 = vpop.f32.mrb[0].mxu0
        %v2092 = vpop.f32.mrb[0].mxu0
        %v2093 = vadd.f32 0.0, %v2092
        %v2094 = vpop.f32.mrb[0].mxu0
        %2095 = vmatprep.mubr.bf16.mxu0 0
        %2096 = vmatmul.mubr.bf16.gmra.mrb[0].mxu0 %v1634
        %v2097 = vpop.f32.mrb[0].mxu0
        %v2098 = vadd.f32 0.0, %v2097
        %v2099 = vpop.f32.mrb[0].mxu0
        %v2100 = vpop.f32.mrb[0].mxu0
        %v2101 = vadd.f32 0.0, %v2100
        %v2102 = vpop.f32.mrb[0].mxu0
        %2103 = vmatprep.mubr.bf16.mxu0 0
        %2104 = vmatmul.mubr.bf16.gmra.mrb[0].mxu0 %v1635
        %v2105 = vpop.f32.mrb[0].mxu0
        %v2106 = vadd.f32 0.0, %v2105
        %v2107 = vpop.f32.mrb[0].mxu0
        %v2108 = vpop.f32.mrb[0].mxu0
        %v2109 = vadd.f32 0.0, %v2108
        %v2110 = vpop.f32.mrb[0].mxu0
        %2111 = vmatprep.mubr.bf16.mxu0 0
        %2112 = vmatmul.mubr.bf16.gmra.mrb[0].mxu0 %v1636
        %v2113 = vpop.f32.mrb[0].mxu0
        %v2114 = vadd.f32 0.0, %v2113
        %v2115 = vpop.f32.mrb[0].mxu0
        %v2116 = vpop.f32.mrb[0].mxu0
        %v2117 = vadd.f32 0.0, %v2116
        %v2118 = vpop.f32.mrb[0].mxu0
        %2119 = vmatprep.mubr.bf16.mxu0 0
        %2120 = vmatmul.mubr.bf16.gmra.mrb[0].mxu0 %v1637
        %v2121 = vpop.f32.mrb[0].mxu0
        %v2122 = vadd.f32 0.0, %v2121
        %v2123 = vpop.f32.mrb[0].mxu0
        %v2124 = vpop.f32.mrb[0].mxu0
        %v2125 = vadd.f32 0.0, %v2124
        %v2126 = vpop.f32.mrb[0].mxu0
        %2127 = vmatprep.mubr.bf16.mxu0 0
        %2128 = vmatmul.mubr.bf16.gmra.mrb[0].mxu0 %v1638
        %v2129 = vpop.f32.mrb[0].mxu0
        %v2130 = vadd.f32 0.0, %v2129
        %v2131 = vpop.f32.mrb[0].mxu0
        %v2132 = vpop.f32.mrb[0].mxu0
        %v2133 = vadd.f32 0.0, %v2132
        %v2134 = vpop.f32.mrb[0].mxu0
        %2135 = vmatprep.mubr.bf16.mxu0 0
        %2136 = vmatmul.mubr.bf16.gmra.mrb[0].mxu0 %v1639
        %v2137 = vpop.f32.mrb[0].mxu0
        %v2138 = vadd.f32 0.0, %v2137
        %v2139 = vpop.f32.mrb[0].mxu0
        %v2140 = vpop.f32.mrb[0].mxu0
        %v2141 = vadd.f32 0.0, %v2140
        %v2142 = vpop.f32.mrb[0].mxu0
        %2143 = vmatprep.mubr.bf16.mxu0 0
        %2144 = vmatmul.mubr.bf16.gmra.mrb[0].mxu0 %v1640
        %v2145 = vpop.f32.mrb[0].mxu0
        %v2146 = vadd.f32 0.0, %v2145
        %v2147 = vpop.f32.mrb[0].mxu0
        %v2148 = vpop.f32.mrb[0].mxu0
        %v2149 = vadd.f32 0.0, %v2148
        %v2150 = vpop.f32.mrb[0].mxu0
        %2151 = vmatprep.mubr.bf16.mxu0 0
        %2152 = vmatmul.mubr.bf16.gmra.mrb[0].mxu0 %v1641
        %v2153 = vpop.f32.mrb[0].mxu0
        %v2154 = vadd.f32 0.0, %v2153
        %v2155 = vpop.f32.mrb[0].mxu0
        %v2156 = vpop.f32.mrb[0].mxu0
        %v2157 = vadd.f32 0.0, %v2156
        %v2158 = vpop.f32.mrb[0].mxu0
        %2159 = vmatprep.mubr.bf16.mxu0 0
        %2160 = vmatmul.mubr.bf16.gmra.mrb[0].mxu0 %v1642
        %v2161 = vpop.f32.mrb[0].mxu0
        %v2162 = vadd.f32 0.0, %v2161
        %v2163 = vpop.f32.mrb[0].mxu0
        %v2164 = vpop.f32.mrb[0].mxu0
        %v2165 = vadd.f32 0.0, %v2164
        %v2166 = vpop.f32.mrb[0].mxu0
        %2167 = vmatprep.mubr.bf16.mxu0 0
        %2168 = vmatmul.mubr.bf16.gmra.mrb[0].mxu0 %v1643
        %v2169 = vpop.f32.mrb[0].mxu0
        %v2170 = vadd.f32 0.0, %v2169
        %v2171 = vpop.f32.mrb[0].mxu0
        %v2172 = vpop.f32.mrb[0].mxu0
        %v2173 = vadd.f32 0.0, %v2172
        %v2174 = vpop.f32.mrb[0].mxu0
        %2175 = vmatprep.mubr.bf16.mxu0 0
        %2176 = vmatmul.mubr.bf16.gmra.mrb[0].mxu0 %v1644
        %v2177 = vpop.f32.mrb[0].mxu0
        %v2178 = vadd.f32 0.0, %v2177
        %v2179 = vpop.f32.mrb[0].mxu0
        %v2180 = vpop.f32.mrb[0].mxu0
        %v2181 = vadd.f32 0.0, %v2180
        %v2182 = vpop.f32.mrb[0].mxu0
        %2183 = vmatprep.mubr.bf16.mxu0 0
        %2184 = vmatmul.mubr.bf16.gmra.mrb[0].mxu0 %v1645
        %v2185 = vpop.f32.mrb[0].mxu0
        %v2186 = vadd.f32 0.0, %v2185
        %v2187 = vpop.f32.mrb[0].mxu0
        %v2188 = vpop.f32.mrb[0].mxu0
        %v2189 = vadd.f32 0.0, %v2188
        %v2190 = vpop.f32.mrb[0].mxu0
        %2191 = vmatprep.mubr.bf16.mxu0 0
        %2192 = vmatmul.mubr.bf16.gmra.mrb[0].mxu0 %v1646
        %v2193 = vpop.f32.mrb[0].mxu0
        %v2194 = vadd.f32 0.0, %v2193
        %v2195 = vpop.f32.mrb[0].mxu0
        %v2196 = vpop.f32.mrb[0].mxu0
        %v2197 = vadd.f32 0.0, %v2196
        %v2198 = vpop.f32.mrb[0].mxu0
        %2199 = vmatprep.mubr.bf16.mxu0 0
        %2200 = vmatmul.mubr.bf16.gmra.mrb[0].mxu0 %v1647
        %v2201 = vpop.f32.mrb[0].mxu0
        %v2202 = vadd.f32 0.0, %v2201
        %v2203 = vpop.f32.mrb[0].mxu0
        %v2204 = vpop.f32.mrb[0].mxu0
        %v2205 = vadd.f32 0.0, %v2204
        %v2206 = vpop.f32.mrb[0].mxu0
        %2207 = vmatprep.mubr.bf16.mxu0 0
        %2208 = vmatmul.mubr.bf16.gmra.mrb[0].mxu0 %v1648
        %v2209 = vpop.f32.mrb[0].mxu0
        %v2210 = vadd.f32 0.0, %v2209
        %v2211 = vpop.f32.mrb[0].mxu0
        %v2212 = vpop.f32.mrb[0].mxu0
        %v2213 = vadd.f32 0.0, %v2212
        %v2214 = vpop.f32.mrb[0].mxu0
        %2215 = vmatprep.mubr.bf16.mxu0 0
        %2216 = vmatmul.mubr.bf16.gmra.mrb[0].mxu0 %v1649
        %v2217 = vpop.f32.mrb[0].mxu0
        %v2218 = vadd.f32 0.0, %v2217
        %v2219 = vpop.f32.mrb[0].mxu0
        %v2220 = vpop.f32.mrb[0].mxu0
        %v2221 = vadd.f32 0.0, %v2220
        %v2222 = vpop.f32.mrb[0].mxu0
        %2223 = vmatprep.mubr.bf16.mxu0 0
        %2224 = vmatmul.mubr.bf16.gmra.mrb[0].mxu0 %v1650
        %v2225 = vpop.f32.mrb[0].mxu0
        %v2226 = vadd.f32 0.0, %v2225
        %v2227 = vpop.f32.mrb[0].mxu0
        %v2228 = vpop.f32.mrb[0].mxu0
        %v2229 = vadd.f32 0.0, %v2228
        %v2230 = vpop.f32.mrb[0].mxu0
        %2231 = vmatprep.mubr.bf16.mxu0 0
        %2232 = vmatmul.mubr.bf16.gmra.mrb[0].mxu0 %v1651
        %v2233 = vpop.f32.mrb[0].mxu0
        %v2234 = vadd.f32 0.0, %v2233
        %v2235 = vpop.f32.mrb[0].mxu0
        %v2236 = vpop.f32.mrb[0].mxu0
        %v2237 = vadd.f32 0.0, %v2236
        %v2238 = vpop.f32.mrb[0].mxu0
        %2239 = vmatprep.mubr.bf16.mxu0 0
        %2240 = vmatmul.mubr.bf16.gmra.mrb[0].mxu0 %v1652
        %v2241 = vpop.f32.mrb[0].mxu0
        %v2242 = vadd.f32 0.0, %v2241
        %v2243 = vpop.f32.mrb[0].mxu0
        %v2244 = vpop.f32.mrb[0].mxu0
        %v2245 = vadd.f32 0.0, %v2244
        %v2246 = vpop.f32.mrb[0].mxu0
        %2247 = vmatprep.mubr.bf16.mxu0 0
        %2248 = vmatmul.mubr.bf16.gmra.mrb[0].mxu0 %v1653
        %v2249 = vpop.f32.mrb[0].mxu0
        %v2250 = vadd.f32 0.0, %v2249
        %v2251 = vpop.f32.mrb[0].mxu0
        %v2252 = vpop.f32.mrb[0].mxu0
        %v2253 = vadd.f32 0.0, %v2252
        %v2254 = vpop.f32.mrb[0].mxu0
        %2255 = vmatprep.mubr.bf16.mxu0 0
        %2256 = vmatmul.mubr.bf16.gmra.mrb[0].mxu0 %v1654
        %v2257 = vpop.f32.mrb[0].mxu0
        %v2258 = vadd.f32 0.0, %v2257
        %v2259 = vpop.f32.mrb[0].mxu0
        %v2260 = vpop.f32.mrb[0].mxu0
        %v2261 = vadd.f32 0.0, %v2260
        %v2262 = vpop.f32.mrb[0].mxu0
        %2263 = vdwg.mxu0
        %v2264 = vld [vmem:[%s8] sm:$0xff]
        %v2265 = vld [vmem:[%s8 + $0x8] sm:$0xff]
        %v2266 = vld [vmem:[%s8 + $0x10] sm:$0xff]
        %v2267 = vld [vmem:[%s8 + $0x18] sm:$0xff]
        %v2268 = vld [vmem:[%s8 + $0x20] sm:$0xff]
        %v2269 = vld [vmem:[%s8 + $0x28] sm:$0xff]
        %v2270 = vld [vmem:[%s8 + $0x30] sm:$0xff]
        %v2271 = vld [vmem:[%s8 + $0x38] sm:$0xff]
        %v2272 = vld [vmem:[%s8 + $0x40] sm:$0xff]
        %v2273 = vld [vmem:[%s8 + $0x48] sm:$0xff]
        %v2274 = vld [vmem:[%s8 + $0x50] sm:$0xff]
        %v2275 = vld [vmem:[%s8 + $0x58] sm:$0xff]
        %v2276 = vld [vmem:[%s8 + $0x60] sm:$0xff]
        %v2277 = vld [vmem:[%s8 + $0x68] sm:$0xff]
        %v2278 = vld [vmem:[%s8 + $0x70] sm:$0xff]
        %v2279 = vld [vmem:[%s8 + $0x78] sm:$0xff]
        %v2280 = vld [vmem:[%s8 + $0x80] sm:$0xff]
        %v2281 = vld [vmem:[%s8 + $0x88] sm:$0xff]
        %v2282 = vld [vmem:[%s8 + $0x90] sm:$0xff]
        %v2283 = vld [vmem:[%s8 + $0x98] sm:$0xff]
        %v2284 = vld [vmem:[%s8 + $0xa0] sm:$0xff]
        %v2285 = vld [vmem:[%s8 + $0xa8] sm:$0xff]
        %v2286 = vld [vmem:[%s8 + $0xb0] sm:$0xff]
        %v2287 = vld [vmem:[%s8 + $0xb8] sm:$0xff]
        %v2288 = vld [vmem:[%s8 + $0xc0] sm:$0xff]
        %v2289 = vld [vmem:[%s8 + $0xc8] sm:$0xff]
        %v2290 = vld [vmem:[%s8 + $0xd0] sm:$0xff]
        %v2291 = vld [vmem:[%s8 + $0xd8] sm:$0xff]
        %v2292 = vld [vmem:[%s8 + $0xe0] sm:$0xff]
        %v2293 = vld [vmem:[%s8 + $0xe8] sm:$0xff]
        %v2294 = vld [vmem:[%s8 + $0xf0] sm:$0xff]
        %v2295 = vld [vmem:[%s8 + $0xf8] sm:$0xff]
        %v2296 = vld [vmem:[%s8 + $0x100] sm:$0xff]
        %v2297 = vld [vmem:[%s8 + $0x108] sm:$0xff]
        %v2298 = vld [vmem:[%s8 + $0x110] sm:$0xff]
        %v2299 = vld [vmem:[%s8 + $0x118] sm:$0xff]
        %v2300 = vld [vmem:[%s8 + $0x120] sm:$0xff]
        %v2301 = vld [vmem:[%s8 + $0x128] sm:$0xff]
        %v2302 = vld [vmem:[%s8 + $0x130] sm:$0xff]
        %v2303 = vld [vmem:[%s8 + $0x138] sm:$0xff]
        %v2304 = vld [vmem:[%s8 + $0x140] sm:$0xff]
        %v2305 = vld [vmem:[%s8 + $0x148] sm:$0xff]
        %v2306 = vld [vmem:[%s8 + $0x150] sm:$0xff]
        %v2307 = vld [vmem:[%s8 + $0x158] sm:$0xff]
        %v2308 = vld [vmem:[%s8 + $0x160] sm:$0xff]
        %v2309 = vld [vmem:[%s8 + $0x168] sm:$0xff]
        %v2310 = vld [vmem:[%s8 + $0x170] sm:$0xff]
        %v2311 = vld [vmem:[%s8 + $0x178] sm:$0xff]
        %v2312 = vld [vmem:[%s8 + $0x180] sm:$0xff]
        %v2313 = vld [vmem:[%s8 + $0x188] sm:$0xff]
        %v2314 = vld [vmem:[%s8 + $0x190] sm:$0xff]
        %v2315 = vld [vmem:[%s8 + $0x198] sm:$0xff]
        %v2316 = vld [vmem:[%s8 + $0x1a0] sm:$0xff]
        %v2317 = vld [vmem:[%s8 + $0x1a8] sm:$0xff]
        %v2318 = vld [vmem:[%s8 + $0x1b0] sm:$0xff]
        %v2319 = vld [vmem:[%s8 + $0x1b8] sm:$0xff]
        %v2320 = vld [vmem:[%s8 + $0x1c0] sm:$0xff]
        %v2321 = vld [vmem:[%s8 + $0x1c8] sm:$0xff]
        %v2322 = vld [vmem:[%s8 + $0x1d0] sm:$0xff]
        %v2323 = vld [vmem:[%s8 + $0x1d8] sm:$0xff]
        %v2324 = vld [vmem:[%s8 + $0x1e0] sm:$0xff]
        %v2325 = vld [vmem:[%s8 + $0x1e8] sm:$0xff]
        %v2326 = vld [vmem:[%s8 + $0x1f0] sm:$0xff]
        %v2327 = vld [vmem:[%s8 + $0x1f8] sm:$0xff]
        %v2328 = vld [vmem:[%s8 + $0x200] sm:$0xff]
        %v2329 = vld [vmem:[%s8 + $0x208] sm:$0xff]
        %v2330 = vld [vmem:[%s8 + $0x210] sm:$0xff]
        %v2331 = vld [vmem:[%s8 + $0x218] sm:$0xff]
        %v2332 = vld [vmem:[%s8 + $0x220] sm:$0xff]
        %v2333 = vld [vmem:[%s8 + $0x228] sm:$0xff]
        %v2334 = vld [vmem:[%s8 + $0x230] sm:$0xff]
        %v2335 = vld [vmem:[%s8 + $0x238] sm:$0xff]
        %v2336 = vld [vmem:[%s8 + $0x240] sm:$0xff]
        %v2337 = vld [vmem:[%s8 + $0x248] sm:$0xff]
        %v2338 = vld [vmem:[%s8 + $0x250] sm:$0xff]
        %v2339 = vld [vmem:[%s8 + $0x258] sm:$0xff]
        %v2340 = vld [vmem:[%s8 + $0x260] sm:$0xff]
        %v2341 = vld [vmem:[%s8 + $0x268] sm:$0xff]
        %v2342 = vld [vmem:[%s8 + $0x270] sm:$0xff]
        %v2343 = vld [vmem:[%s8 + $0x278] sm:$0xff]
        %v2344 = vld [vmem:[%s8 + $0x280] sm:$0xff]
        %v2345 = vld [vmem:[%s8 + $0x288] sm:$0xff]
        %v2346 = vld [vmem:[%s8 + $0x290] sm:$0xff]
        %v2347 = vld [vmem:[%s8 + $0x298] sm:$0xff]
        %v2348 = vld [vmem:[%s8 + $0x2a0] sm:$0xff]
        %v2349 = vld [vmem:[%s8 + $0x2a8] sm:$0xff]
        %v2350 = vld [vmem:[%s8 + $0x2b0] sm:$0xff]
        %v2351 = vld [vmem:[%s8 + $0x2b8] sm:$0xff]
        %v2352 = vld [vmem:[%s8 + $0x2c0] sm:$0xff]
        %v2353 = vld [vmem:[%s8 + $0x2c8] sm:$0xff]
        %v2354 = vld [vmem:[%s8 + $0x2d0] sm:$0xff]
        %v2355 = vld [vmem:[%s8 + $0x2d8] sm:$0xff]
        %v2356 = vld [vmem:[%s8 + $0x2e0] sm:$0xff]
        %v2357 = vld [vmem:[%s8 + $0x2e8] sm:$0xff]
        %v2358 = vld [vmem:[%s8 + $0x2f0] sm:$0xff]
        %v2359 = vld [vmem:[%s8 + $0x2f8] sm:$0xff]
        %v2360 = vld [vmem:[%s8 + $0x300] sm:$0xff]
        %v2361 = vld [vmem:[%s8 + $0x308] sm:$0xff]
        %v2362 = vld [vmem:[%s8 + $0x310] sm:$0xff]
        %v2363 = vld [vmem:[%s8 + $0x318] sm:$0xff]
        %v2364 = vld [vmem:[%s8 + $0x320] sm:$0xff]
        %v2365 = vld [vmem:[%s8 + $0x328] sm:$0xff]
        %v2366 = vld [vmem:[%s8 + $0x330] sm:$0xff]
        %v2367 = vld [vmem:[%s8 + $0x338] sm:$0xff]
        %v2368 = vld [vmem:[%s8 + $0x340] sm:$0xff]
        %v2369 = vld [vmem:[%s8 + $0x348] sm:$0xff]
        %v2370 = vld [vmem:[%s8 + $0x350] sm:$0xff]
        %v2371 = vld [vmem:[%s8 + $0x358] sm:$0xff]
        %v2372 = vld [vmem:[%s8 + $0x360] sm:$0xff]
        %v2373 = vld [vmem:[%s8 + $0x368] sm:$0xff]
        %v2374 = vld [vmem:[%s8 + $0x370] sm:$0xff]
        %v2375 = vld [vmem:[%s8 + $0x378] sm:$0xff]
        %v2376 = vld [vmem:[%s8 + $0x380] sm:$0xff]
        %v2377 = vld [vmem:[%s8 + $0x388] sm:$0xff]
        %v2378 = vld [vmem:[%s8 + $0x390] sm:$0xff]
        %v2379 = vld [vmem:[%s8 + $0x398] sm:$0xff]
        %v2380 = vld [vmem:[%s8 + $0x3a0] sm:$0xff]
        %v2381 = vld [vmem:[%s8 + $0x3a8] sm:$0xff]
        %v2382 = vld [vmem:[%s8 + $0x3b0] sm:$0xff]
        %v2383 = vld [vmem:[%s8 + $0x3b8] sm:$0xff]
        %v2384 = vld [vmem:[%s8 + $0x3c0] sm:$0xff]
        %v2385 = vld [vmem:[%s8 + $0x3c8] sm:$0xff]
        %v2386 = vld [vmem:[%s8 + $0x3d0] sm:$0xff]
        %v2387 = vld [vmem:[%s8 + $0x3d8] sm:$0xff]
        %v2388 = vld [vmem:[%s8 + $0x3e0] sm:$0xff]
        %v2389 = vld [vmem:[%s8 + $0x3e8] sm:$0xff]
        %v2390 = vld [vmem:[%s8 + $0x3f0] sm:$0xff]
        %v2391 = vld [vmem:[%s8 + $0x3f8] sm:$0xff]
        %2393 = vset.pattern.permute.xlu0 0
        %2394 = vperm.xlu0 %2393, %v2264
        %v2395 = vpop.permute.xlu0 %2394
        %2398 = vset.pattern.permute.xlu0 0
        %2399 = vperm.xlu0 %2398, %v2265
        %v2400 = vpop.permute.xlu0 %2399
        %2403 = vset.pattern.permute.xlu0 0
        %2404 = vperm.xlu0 %2403, %v2266
        %v2405 = vpop.permute.xlu0 %2404
        %2408 = vset.pattern.permute.xlu0 0
        %2409 = vperm.xlu0 %2408, %v2267
        %v2410 = vpop.permute.xlu0 %2409
        %2413 = vset.pattern.permute.xlu0 0
        %2414 = vperm.xlu0 %2413, %v2268
        %v2415 = vpop.permute.xlu0 %2414
        %2418 = vset.pattern.permute.xlu0 0
        %2419 = vperm.xlu0 %2418, %v2269
        %v2420 = vpop.permute.xlu0 %2419
        %2423 = vset.pattern.permute.xlu0 0
        %2424 = vperm.xlu0 %2423, %v2270
        %v2425 = vpop.permute.xlu0 %2424
        %2428 = vset.pattern.permute.xlu0 0
        %2429 = vperm.xlu0 %2428, %v2271
        %v2430 = vpop.permute.xlu0 %2429
        %2433 = vset.pattern.permute.xlu0 0
        %2434 = vperm.xlu0 %2433, %v2272
        %v2435 = vpop.permute.xlu0 %2434
        %2438 = vset.pattern.permute.xlu0 0
        %2439 = vperm.xlu0 %2438, %v2273
        %v2440 = vpop.permute.xlu0 %2439
        %2443 = vset.pattern.permute.xlu0 0
        %2444 = vperm.xlu0 %2443, %v2274
        %v2445 = vpop.permute.xlu0 %2444
        %2448 = vset.pattern.permute.xlu0 0
        %2449 = vperm.xlu0 %2448, %v2275
        %v2450 = vpop.permute.xlu0 %2449
        %2453 = vset.pattern.permute.xlu0 0
        %2454 = vperm.xlu0 %2453, %v2276
        %v2455 = vpop.permute.xlu0 %2454
        %2458 = vset.pattern.permute.xlu0 0
        %2459 = vperm.xlu0 %2458, %v2277
        %v2460 = vpop.permute.xlu0 %2459
        %2463 = vset.pattern.permute.xlu0 0
        %2464 = vperm.xlu0 %2463, %v2278
        %v2465 = vpop.permute.xlu0 %2464
        %2468 = vset.pattern.permute.xlu0 0
        %2469 = vperm.xlu0 %2468, %v2279
        %v2470 = vpop.permute.xlu0 %2469
        %2473 = vset.pattern.permute.xlu0 0
        %2474 = vperm.xlu0 %2473, %v2280
        %v2475 = vpop.permute.xlu0 %2474
        %2478 = vset.pattern.permute.xlu0 0
        %2479 = vperm.xlu0 %2478, %v2281
        %v2480 = vpop.permute.xlu0 %2479
        %2483 = vset.pattern.permute.xlu0 0
        %2484 = vperm.xlu0 %2483, %v2282
        %v2485 = vpop.permute.xlu0 %2484
        %2488 = vset.pattern.permute.xlu0 0
        %2489 = vperm.xlu0 %2488, %v2283
        %v2490 = vpop.permute.xlu0 %2489
        %2493 = vset.pattern.permute.xlu0 0
        %2494 = vperm.xlu0 %2493, %v2284
        %v2495 = vpop.permute.xlu0 %2494
        %2498 = vset.pattern.permute.xlu0 0
        %2499 = vperm.xlu0 %2498, %v2285
        %v2500 = vpop.permute.xlu0 %2499
        %2503 = vset.pattern.permute.xlu0 0
        %2504 = vperm.xlu0 %2503, %v2286
        %v2505 = vpop.permute.xlu0 %2504
        %2508 = vset.pattern.permute.xlu0 0
        %2509 = vperm.xlu0 %2508, %v2287
        %v2510 = vpop.permute.xlu0 %2509
        %2513 = vset.pattern.permute.xlu0 0
        %2514 = vperm.xlu0 %2513, %v2288
        %v2515 = vpop.permute.xlu0 %2514
        %2518 = vset.pattern.permute.xlu0 0
        %2519 = vperm.xlu0 %2518, %v2289
        %v2520 = vpop.permute.xlu0 %2519
        %2523 = vset.pattern.permute.xlu0 0
        %2524 = vperm.xlu0 %2523, %v2290
        %v2525 = vpop.permute.xlu0 %2524
        %2528 = vset.pattern.permute.xlu0 0
        %2529 = vperm.xlu0 %2528, %v2291
        %v2530 = vpop.permute.xlu0 %2529
        %2533 = vset.pattern.permute.xlu0 0
        %2534 = vperm.xlu0 %2533, %v2292
        %v2535 = vpop.permute.xlu0 %2534
        %2538 = vset.pattern.permute.xlu0 0
        %2539 = vperm.xlu0 %2538, %v2293
        %v2540 = vpop.permute.xlu0 %2539
        %2543 = vset.pattern.permute.xlu0 0
        %2544 = vperm.xlu0 %2543, %v2294
        %v2545 = vpop.permute.xlu0 %2544
        %2548 = vset.pattern.permute.xlu0 0
        %2549 = vperm.xlu0 %2548, %v2295
        %v2550 = vpop.permute.xlu0 %2549
        %2553 = vset.pattern.permute.xlu0 0
        %2554 = vperm.xlu0 %2553, %v2296
        %v2555 = vpop.permute.xlu0 %2554
        %2558 = vset.pattern.permute.xlu0 0
        %2559 = vperm.xlu0 %2558, %v2297
        %v2560 = vpop.permute.xlu0 %2559
        %2563 = vset.pattern.permute.xlu0 0
        %2564 = vperm.xlu0 %2563, %v2298
        %v2565 = vpop.permute.xlu0 %2564
        %2568 = vset.pattern.permute.xlu0 0
        %2569 = vperm.xlu0 %2568, %v2299
        %v2570 = vpop.permute.xlu0 %2569
        %2573 = vset.pattern.permute.xlu0 0
        %2574 = vperm.xlu0 %2573, %v2300
        %v2575 = vpop.permute.xlu0 %2574
        %2578 = vset.pattern.permute.xlu0 0
        %2579 = vperm.xlu0 %2578, %v2301
        %v2580 = vpop.permute.xlu0 %2579
        %2583 = vset.pattern.permute.xlu0 0
        %2584 = vperm.xlu0 %2583, %v2302
        %v2585 = vpop.permute.xlu0 %2584
        %2588 = vset.pattern.permute.xlu0 0
        %2589 = vperm.xlu0 %2588, %v2303
        %v2590 = vpop.permute.xlu0 %2589
        %2593 = vset.pattern.permute.xlu0 0
        %2594 = vperm.xlu0 %2593, %v2304
        %v2595 = vpop.permute.xlu0 %2594
        %2598 = vset.pattern.permute.xlu0 0
        %2599 = vperm.xlu0 %2598, %v2305
        %v2600 = vpop.permute.xlu0 %2599
        %2603 = vset.pattern.permute.xlu0 0
        %2604 = vperm.xlu0 %2603, %v2306
        %v2605 = vpop.permute.xlu0 %2604
        %2608 = vset.pattern.permute.xlu0 0
        %2609 = vperm.xlu0 %2608, %v2307
        %v2610 = vpop.permute.xlu0 %2609
        %2613 = vset.pattern.permute.xlu0 0
        %2614 = vperm.xlu0 %2613, %v2308
        %v2615 = vpop.permute.xlu0 %2614
        %2618 = vset.pattern.permute.xlu0 0
        %2619 = vperm.xlu0 %2618, %v2309
        %v2620 = vpop.permute.xlu0 %2619
        %2623 = vset.pattern.permute.xlu0 0
        %2624 = vperm.xlu0 %2623, %v2310
        %v2625 = vpop.permute.xlu0 %2624
        %2628 = vset.pattern.permute.xlu0 0
        %2629 = vperm.xlu0 %2628, %v2311
        %v2630 = vpop.permute.xlu0 %2629
        %2633 = vset.pattern.permute.xlu0 0
        %2634 = vperm.xlu0 %2633, %v2312
        %v2635 = vpop.permute.xlu0 %2634
        %2638 = vset.pattern.permute.xlu0 0
        %2639 = vperm.xlu0 %2638, %v2313
        %v2640 = vpop.permute.xlu0 %2639
        %2643 = vset.pattern.permute.xlu0 0
        %2644 = vperm.xlu0 %2643, %v2314
        %v2645 = vpop.permute.xlu0 %2644
        %2648 = vset.pattern.permute.xlu0 0
        %2649 = vperm.xlu0 %2648, %v2315
        %v2650 = vpop.permute.xlu0 %2649
        %2653 = vset.pattern.permute.xlu0 0
        %2654 = vperm.xlu0 %2653, %v2316
        %v2655 = vpop.permute.xlu0 %2654
        %2658 = vset.pattern.permute.xlu0 0
        %2659 = vperm.xlu0 %2658, %v2317
        %v2660 = vpop.permute.xlu0 %2659
        %2663 = vset.pattern.permute.xlu0 0
        %2664 = vperm.xlu0 %2663, %v2318
        %v2665 = vpop.permute.xlu0 %2664
        %2668 = vset.pattern.permute.xlu0 0
        %2669 = vperm.xlu0 %2668, %v2319
        %v2670 = vpop.permute.xlu0 %2669
        %2673 = vset.pattern.permute.xlu0 0
        %2674 = vperm.xlu0 %2673, %v2320
        %v2675 = vpop.permute.xlu0 %2674
        %2678 = vset.pattern.permute.xlu0 0
        %2679 = vperm.xlu0 %2678, %v2321
        %v2680 = vpop.permute.xlu0 %2679
        %2683 = vset.pattern.permute.xlu0 0
        %2684 = vperm.xlu0 %2683, %v2322
        %v2685 = vpop.permute.xlu0 %2684
        %2688 = vset.pattern.permute.xlu0 0
        %2689 = vperm.xlu0 %2688, %v2323
        %v2690 = vpop.permute.xlu0 %2689
        %2693 = vset.pattern.permute.xlu0 0
        %2694 = vperm.xlu0 %2693, %v2324
        %v2695 = vpop.permute.xlu0 %2694
        %2698 = vset.pattern.permute.xlu0 0
        %2699 = vperm.xlu0 %2698, %v2325
        %v2700 = vpop.permute.xlu0 %2699
        %2703 = vset.pattern.permute.xlu0 0
        %2704 = vperm.xlu0 %2703, %v2326
        %v2705 = vpop.permute.xlu0 %2704
        %2708 = vset.pattern.permute.xlu0 0
        %2709 = vperm.xlu0 %2708, %v2327
        %v2710 = vpop.permute.xlu0 %2709
        %2713 = vset.pattern.permute.xlu0 0
        %2714 = vperm.xlu0 %2713, %v2328
        %v2715 = vpop.permute.xlu0 %2714
        %2718 = vset.pattern.permute.xlu0 0
        %2719 = vperm.xlu0 %2718, %v2329
        %v2720 = vpop.permute.xlu0 %2719
        %2723 = vset.pattern.permute.xlu0 0
        %2724 = vperm.xlu0 %2723, %v2330
        %v2725 = vpop.permute.xlu0 %2724
        %2728 = vset.pattern.permute.xlu0 0
        %2729 = vperm.xlu0 %2728, %v2331
        %v2730 = vpop.permute.xlu0 %2729
        %2733 = vset.pattern.permute.xlu0 0
        %2734 = vperm.xlu0 %2733, %v2332
        %v2735 = vpop.permute.xlu0 %2734
        %2738 = vset.pattern.permute.xlu0 0
        %2739 = vperm.xlu0 %2738, %v2333
        %v2740 = vpop.permute.xlu0 %2739
        %2743 = vset.pattern.permute.xlu0 0
        %2744 = vperm.xlu0 %2743, %v2334
        %v2745 = vpop.permute.xlu0 %2744
        %2748 = vset.pattern.permute.xlu0 0
        %2749 = vperm.xlu0 %2748, %v2335
        %v2750 = vpop.permute.xlu0 %2749
        %2753 = vset.pattern.permute.xlu0 0
        %2754 = vperm.xlu0 %2753, %v2336
        %v2755 = vpop.permute.xlu0 %2754
        %2758 = vset.pattern.permute.xlu0 0
        %2759 = vperm.xlu0 %2758, %v2337
        %v2760 = vpop.permute.xlu0 %2759
        %2763 = vset.pattern.permute.xlu0 0
        %2764 = vperm.xlu0 %2763, %v2338
        %v2765 = vpop.permute.xlu0 %2764
        %2768 = vset.pattern.permute.xlu0 0
        %2769 = vperm.xlu0 %2768, %v2339
        %v2770 = vpop.permute.xlu0 %2769
        %2773 = vset.pattern.permute.xlu0 0
        %2774 = vperm.xlu0 %2773, %v2340
        %v2775 = vpop.permute.xlu0 %2774
        %2778 = vset.pattern.permute.xlu0 0
        %2779 = vperm.xlu0 %2778, %v2341
        %v2780 = vpop.permute.xlu0 %2779
        %2783 = vset.pattern.permute.xlu0 0
        %2784 = vperm.xlu0 %2783, %v2342
        %v2785 = vpop.permute.xlu0 %2784
        %2788 = vset.pattern.permute.xlu0 0
        %2789 = vperm.xlu0 %2788, %v2343
        %v2790 = vpop.permute.xlu0 %2789
        %2793 = vset.pattern.permute.xlu0 0
        %2794 = vperm.xlu0 %2793, %v2344
        %v2795 = vpop.permute.xlu0 %2794
        %2798 = vset.pattern.permute.xlu0 0
        %2799 = vperm.xlu0 %2798, %v2345
        %v2800 = vpop.permute.xlu0 %2799
        %2803 = vset.pattern.permute.xlu0 0
        %2804 = vperm.xlu0 %2803, %v2346
        %v2805 = vpop.permute.xlu0 %2804
        %2808 = vset.pattern.permute.xlu0 0
        %2809 = vperm.xlu0 %2808, %v2347
        %v2810 = vpop.permute.xlu0 %2809
        %2813 = vset.pattern.permute.xlu0 0
        %2814 = vperm.xlu0 %2813, %v2348
        %v2815 = vpop.permute.xlu0 %2814
        %2818 = vset.pattern.permute.xlu0 0
        %2819 = vperm.xlu0 %2818, %v2349
        %v2820 = vpop.permute.xlu0 %2819
        %2823 = vset.pattern.permute.xlu0 0
        %2824 = vperm.xlu0 %2823, %v2350
        %v2825 = vpop.permute.xlu0 %2824
        %2828 = vset.pattern.permute.xlu0 0
        %2829 = vperm.xlu0 %2828, %v2351
        %v2830 = vpop.permute.xlu0 %2829
        %2833 = vset.pattern.permute.xlu0 0
        %2834 = vperm.xlu0 %2833, %v2352
        %v2835 = vpop.permute.xlu0 %2834
        %2838 = vset.pattern.permute.xlu0 0
        %2839 = vperm.xlu0 %2838, %v2353
        %v2840 = vpop.permute.xlu0 %2839
        %2843 = vset.pattern.permute.xlu0 0
        %2844 = vperm.xlu0 %2843, %v2354
        %v2845 = vpop.permute.xlu0 %2844
        %2848 = vset.pattern.permute.xlu0 0
        %2849 = vperm.xlu0 %2848, %v2355
        %v2850 = vpop.permute.xlu0 %2849
        %2853 = vset.pattern.permute.xlu0 0
        %2854 = vperm.xlu0 %2853, %v2356
        %v2855 = vpop.permute.xlu0 %2854
        %2858 = vset.pattern.permute.xlu0 0
        %2859 = vperm.xlu0 %2858, %v2357
        %v2860 = vpop.permute.xlu0 %2859
        %2863 = vset.pattern.permute.xlu0 0
        %2864 = vperm.xlu0 %2863, %v2358
        %v2865 = vpop.permute.xlu0 %2864
        %2868 = vset.pattern.permute.xlu0 0
        %2869 = vperm.xlu0 %2868, %v2359
        %v2870 = vpop.permute.xlu0 %2869
        %2873 = vset.pattern.permute.xlu0 0
        %2874 = vperm.xlu0 %2873, %v2360
        %v2875 = vpop.permute.xlu0 %2874
        %2878 = vset.pattern.permute.xlu0 0
        %2879 = vperm.xlu0 %2878, %v2361
        %v2880 = vpop.permute.xlu0 %2879
        %2883 = vset.pattern.permute.xlu0 0
        %2884 = vperm.xlu0 %2883, %v2362
        %v2885 = vpop.permute.xlu0 %2884
        %2888 = vset.pattern.permute.xlu0 0
        %2889 = vperm.xlu0 %2888, %v2363
        %v2890 = vpop.permute.xlu0 %2889
        %2893 = vset.pattern.permute.xlu0 0
        %2894 = vperm.xlu0 %2893, %v2364
        %v2895 = vpop.permute.xlu0 %2894
        %2898 = vset.pattern.permute.xlu0 0
        %2899 = vperm.xlu0 %2898, %v2365
        %v2900 = vpop.permute.xlu0 %2899
        %2903 = vset.pattern.permute.xlu0 0
        %2904 = vperm.xlu0 %2903, %v2366
        %v2905 = vpop.permute.xlu0 %2904
        %2908 = vset.pattern.permute.xlu0 0
        %2909 = vperm.xlu0 %2908, %v2367
        %v2910 = vpop.permute.xlu0 %2909
        %2913 = vset.pattern.permute.xlu0 0
        %2914 = vperm.xlu0 %2913, %v2368
        %v2915 = vpop.permute.xlu0 %2914
        %2918 = vset.pattern.permute.xlu0 0
        %2919 = vperm.xlu0 %2918, %v2369
        %v2920 = vpop.permute.xlu0 %2919
        %2923 = vset.pattern.permute.xlu0 0
        %2924 = vperm.xlu0 %2923, %v2370
        %v2925 = vpop.permute.xlu0 %2924
        %2928 = vset.pattern.permute.xlu0 0
        %2929 = vperm.xlu0 %2928, %v2371
        %v2930 = vpop.permute.xlu0 %2929
        %2933 = vset.pattern.permute.xlu0 0
        %2934 = vperm.xlu0 %2933, %v2372
        %v2935 = vpop.permute.xlu0 %2934
        %2938 = vset.pattern.permute.xlu0 0
        %2939 = vperm.xlu0 %2938, %v2373
        %v2940 = vpop.permute.xlu0 %2939
        %2943 = vset.pattern.permute.xlu0 0
        %2944 = vperm.xlu0 %2943, %v2374
        %v2945 = vpop.permute.xlu0 %2944
        %2948 = vset.pattern.permute.xlu0 0
        %2949 = vperm.xlu0 %2948, %v2375
        %v2950 = vpop.permute.xlu0 %2949
        %2953 = vset.pattern.permute.xlu0 0
        %2954 = vperm.xlu0 %2953, %v2376
        %v2955 = vpop.permute.xlu0 %2954
        %2958 = vset.pattern.permute.xlu0 0
        %2959 = vperm.xlu0 %2958, %v2377
        %v2960 = vpop.permute.xlu0 %2959
        %2963 = vset.pattern.permute.xlu0 0
        %2964 = vperm.xlu0 %2963, %v2378
        %v2965 = vpop.permute.xlu0 %2964
        %2968 = vset.pattern.permute.xlu0 0
        %2969 = vperm.xlu0 %2968, %v2379
        %v2970 = vpop.permute.xlu0 %2969
        %2973 = vset.pattern.permute.xlu0 0
        %2974 = vperm.xlu0 %2973, %v2380
        %v2975 = vpop.permute.xlu0 %2974
        %2978 = vset.pattern.permute.xlu0 0
        %2979 = vperm.xlu0 %2978, %v2381
        %v2980 = vpop.permute.xlu0 %2979
        %2983 = vset.pattern.permute.xlu0 0
        %2984 = vperm.xlu0 %2983, %v2382
        %v2985 = vpop.permute.xlu0 %2984
        %2988 = vset.pattern.permute.xlu0 0
        %2989 = vperm.xlu0 %2988, %v2383
        %v2990 = vpop.permute.xlu0 %2989
        %2993 = vset.pattern.permute.xlu0 0
        %2994 = vperm.xlu0 %2993, %v2384
        %v2995 = vpop.permute.xlu0 %2994
        %2998 = vset.pattern.permute.xlu0 0
        %2999 = vperm.xlu0 %2998, %v2385
        %v3000 = vpop.permute.xlu0 %2999
        %3003 = vset.pattern.permute.xlu0 0
        %3004 = vperm.xlu0 %3003, %v2386
        %v3005 = vpop.permute.xlu0 %3004
        %3008 = vset.pattern.permute.xlu0 0
        %3009 = vperm.xlu0 %3008, %v2387
        %v3010 = vpop.permute.xlu0 %3009
        %3013 = vset.pattern.permute.xlu0 0
        %3014 = vperm.xlu0 %3013, %v2388
        %v3015 = vpop.permute.xlu0 %3014
        %3018 = vset.pattern.permute.xlu0 0
        %3019 = vperm.xlu0 %3018, %v2389
        %v3020 = vpop.permute.xlu0 %3019
        %3023 = vset.pattern.permute.xlu0 0
        %3024 = vperm.xlu0 %3023, %v2390
        %v3025 = vpop.permute.xlu0 %3024
        %3028 = vset.pattern.permute.xlu0 0
        %3029 = vperm.xlu0 %3028, %v2391
        %v3030 = vpop.permute.xlu0 %3029
        %v3032 = vmul.f32 %v1754, %v2395
        %v3033 = vmul.f32 %v1757, %v2400
        %v3034 = vmul.f32 %v1762, %v2405
        %v3035 = vmul.f32 %v1765, %v2410
        %v3036 = vmul.f32 %v1770, %v2415
        %v3037 = vmul.f32 %v1773, %v2420
        %v3038 = vmul.f32 %v1778, %v2425
        %v3039 = vmul.f32 %v1781, %v2430
        %v3040 = vmul.f32 %v1786, %v2435
        %v3041 = vmul.f32 %v1789, %v2440
        %v3042 = vmul.f32 %v1794, %v2445
        %v3043 = vmul.f32 %v1797, %v2450
        %v3044 = vmul.f32 %v1802, %v2455
        %v3045 = vmul.f32 %v1805, %v2460
        %v3046 = vmul.f32 %v1810, %v2465
        %v3047 = vmul.f32 %v1813, %v2470
        %v3048 = vmul.f32 %v1818, %v2475
        %v3049 = vmul.f32 %v1821, %v2480
        %v3050 = vmul.f32 %v1826, %v2485
        %v3051 = vmul.f32 %v1829, %v2490
        %v3052 = vmul.f32 %v1834, %v2495
        %v3053 = vmul.f32 %v1837, %v2500
        %v3054 = vmul.f32 %v1842, %v2505
        %v3055 = vmul.f32 %v1845, %v2510
        %v3056 = vmul.f32 %v1850, %v2515
        %v3057 = vmul.f32 %v1853, %v2520
        %v3058 = vmul.f32 %v1858, %v2525
        %v3059 = vmul.f32 %v1861, %v2530
        %v3060 = vmul.f32 %v1866, %v2535
        %v3061 = vmul.f32 %v1869, %v2540
        %v3062 = vmul.f32 %v1874, %v2545
        %v3063 = vmul.f32 %v1877, %v2550
        %v3064 = vmul.f32 %v1882, %v2555
        %v3065 = vmul.f32 %v1885, %v2560
        %v3066 = vmul.f32 %v1890, %v2565
        %v3067 = vmul.f32 %v1893, %v2570
        %v3068 = vmul.f32 %v1898, %v2575
        %v3069 = vmul.f32 %v1901, %v2580
        %v3070 = vmul.f32 %v1906, %v2585
        %v3071 = vmul.f32 %v1909, %v2590
        %v3072 = vmul.f32 %v1914, %v2595
        %v3073 = vmul.f32 %v1917, %v2600
        %v3074 = vmul.f32 %v1922, %v2605
        %v3075 = vmul.f32 %v1925, %v2610
        %v3076 = vmul.f32 %v1930, %v2615
        %v3077 = vmul.f32 %v1933, %v2620
        %v3078 = vmul.f32 %v1938, %v2625
        %v3079 = vmul.f32 %v1941, %v2630
        %v3080 = vmul.f32 %v1946, %v2635
        %v3081 = vmul.f32 %v1949, %v2640
        %v3082 = vmul.f32 %v1954, %v2645
        %v3083 = vmul.f32 %v1957, %v2650
        %v3084 = vmul.f32 %v1962, %v2655
        %v3085 = vmul.f32 %v1965, %v2660
        %v3086 = vmul.f32 %v1970, %v2665
        %v3087 = vmul.f32 %v1973, %v2670
        %v3088 = vmul.f32 %v1978, %v2675
        %v3089 = vmul.f32 %v1981, %v2680
        %v3090 = vmul.f32 %v1986, %v2685
        %v3091 = vmul.f32 %v1989, %v2690
        %v3092 = vmul.f32 %v1994, %v2695
        %v3093 = vmul.f32 %v1997, %v2700
        %v3094 = vmul.f32 %v2002, %v2705
        %v3095 = vmul.f32 %v2005, %v2710
        %v3096 = vmul.f32 %v2010, %v2715
        %v3097 = vmul.f32 %v2013, %v2720
        %v3098 = vmul.f32 %v2018, %v2725
        %v3099 = vmul.f32 %v2021, %v2730
        %v3100 = vmul.f32 %v2026, %v2735
        %v3101 = vmul.f32 %v2029, %v2740
        %v3102 = vmul.f32 %v2034, %v2745
        %v3103 = vmul.f32 %v2037, %v2750
        %v3104 = vmul.f32 %v2042, %v2755
        %v3105 = vmul.f32 %v2045, %v2760
        %v3106 = vmul.f32 %v2050, %v2765
        %v3107 = vmul.f32 %v2053, %v2770
        %v3108 = vmul.f32 %v2058, %v2775
        %v3109 = vmul.f32 %v2061, %v2780
        %v3110 = vmul.f32 %v2066, %v2785
        %v3111 = vmul.f32 %v2069, %v2790
        %v3112 = vmul.f32 %v2074, %v2795
        %v3113 = vmul.f32 %v2077, %v2800
        %v3114 = vmul.f32 %v2082, %v2805
        %v3115 = vmul.f32 %v2085, %v2810
        %v3116 = vmul.f32 %v2090, %v2815
        %v3117 = vmul.f32 %v2093, %v2820
        %v3118 = vmul.f32 %v2098, %v2825
        %v3119 = vmul.f32 %v2101, %v2830
        %v3120 = vmul.f32 %v2106, %v2835
        %v3121 = vmul.f32 %v2109, %v2840
        %v3122 = vmul.f32 %v2114, %v2845
        %v3123 = vmul.f32 %v2117, %v2850
        %v3124 = vmul.f32 %v2122, %v2855
        %v3125 = vmul.f32 %v2125, %v2860
        %v3126 = vmul.f32 %v2130, %v2865
        %v3127 = vmul.f32 %v2133, %v2870
        %v3128 = vmul.f32 %v2138, %v2875
        %v3129 = vmul.f32 %v2141, %v2880
        %v3130 = vmul.f32 %v2146, %v2885
        %v3131 = vmul.f32 %v2149, %v2890
        %v3132 = vmul.f32 %v2154, %v2895
        %v3133 = vmul.f32 %v2157, %v2900
        %v3134 = vmul.f32 %v2162, %v2905
        %v3135 = vmul.f32 %v2165, %v2910
        %v3136 = vmul.f32 %v2170, %v2915
        %v3137 = vmul.f32 %v2173, %v2920
        %v3138 = vmul.f32 %v2178, %v2925
        %v3139 = vmul.f32 %v2181, %v2930
        %v3140 = vmul.f32 %v2186, %v2935
        %v3141 = vmul.f32 %v2189, %v2940
        %v3142 = vmul.f32 %v2194, %v2945
        %v3143 = vmul.f32 %v2197, %v2950
        %v3144 = vmul.f32 %v2202, %v2955
        %v3145 = vmul.f32 %v2205, %v2960
        %v3146 = vmul.f32 %v2210, %v2965
        %v3147 = vmul.f32 %v2213, %v2970
        %v3148 = vmul.f32 %v2218, %v2975
        %v3149 = vmul.f32 %v2221, %v2980
        %v3150 = vmul.f32 %v2226, %v2985
        %v3151 = vmul.f32 %v2229, %v2990
        %v3152 = vmul.f32 %v2234, %v2995
        %v3153 = vmul.f32 %v2237, %v3000
        %v3154 = vmul.f32 %v2242, %v3005
        %v3155 = vmul.f32 %v2245, %v3010
        %v3156 = vmul.f32 %v2250, %v3015
        %v3157 = vmul.f32 %v2253, %v3020
        %v3158 = vmul.f32 %v2258, %v3025
        %v3159 = vmul.f32 %v2261, %v3030
        %v3160 = vld [vmem:[%s9] sm:$0xff]
        %v3161 = vld [vmem:[%s9 + $0x8] sm:$0xff]
        %v3162 = vld [vmem:[%s9 + $0x10] sm:$0xff]
        %v3163 = vld [vmem:[%s9 + $0x18] sm:$0xff]
        %v3164 = vld [vmem:[%s9 + $0x20] sm:$0xff]
        %v3165 = vld [vmem:[%s9 + $0x28] sm:$0xff]
        %v3166 = vld [vmem:[%s9 + $0x30] sm:$0xff]
        %v3167 = vld [vmem:[%s9 + $0x38] sm:$0xff]
        %v3168 = vld [vmem:[%s9 + $0x40] sm:$0xff]
        %v3169 = vld [vmem:[%s9 + $0x48] sm:$0xff]
        %v3170 = vld [vmem:[%s9 + $0x50] sm:$0xff]
        %v3171 = vld [vmem:[%s9 + $0x58] sm:$0xff]
        %v3172 = vld [vmem:[%s9 + $0x60] sm:$0xff]
        %v3173 = vld [vmem:[%s9 + $0x68] sm:$0xff]
        %v3174 = vld [vmem:[%s9 + $0x70] sm:$0xff]
        %v3175 = vld [vmem:[%s9 + $0x78] sm:$0xff]
        %v3176 = vld [vmem:[%s9 + $0x80] sm:$0xff]
        %v3177 = vld [vmem:[%s9 + $0x88] sm:$0xff]
        %v3178 = vld [vmem:[%s9 + $0x90] sm:$0xff]
        %v3179 = vld [vmem:[%s9 + $0x98] sm:$0xff]
        %v3180 = vld [vmem:[%s9 + $0xa0] sm:$0xff]
        %v3181 = vld [vmem:[%s9 + $0xa8] sm:$0xff]
        %v3182 = vld [vmem:[%s9 + $0xb0] sm:$0xff]
        %v3183 = vld [vmem:[%s9 + $0xb8] sm:$0xff]
        %v3184 = vld [vmem:[%s9 + $0xc0] sm:$0xff]
        %v3185 = vld [vmem:[%s9 + $0xc8] sm:$0xff]
        %v3186 = vld [vmem:[%s9 + $0xd0] sm:$0xff]
        %v3187 = vld [vmem:[%s9 + $0xd8] sm:$0xff]
        %v3188 = vld [vmem:[%s9 + $0xe0] sm:$0xff]
        %v3189 = vld [vmem:[%s9 + $0xe8] sm:$0xff]
        %v3190 = vld [vmem:[%s9 + $0xf0] sm:$0xff]
        %v3191 = vld [vmem:[%s9 + $0xf8] sm:$0xff]
        %v3192 = vld [vmem:[%s9 + $0x100] sm:$0xff]
        %v3193 = vld [vmem:[%s9 + $0x108] sm:$0xff]
        %v3194 = vld [vmem:[%s9 + $0x110] sm:$0xff]
        %v3195 = vld [vmem:[%s9 + $0x118] sm:$0xff]
        %v3196 = vld [vmem:[%s9 + $0x120] sm:$0xff]
        %v3197 = vld [vmem:[%s9 + $0x128] sm:$0xff]
        %v3198 = vld [vmem:[%s9 + $0x130] sm:$0xff]
        %v3199 = vld [vmem:[%s9 + $0x138] sm:$0xff]
        %v3200 = vld [vmem:[%s9 + $0x140] sm:$0xff]
        %v3201 = vld [vmem:[%s9 + $0x148] sm:$0xff]
        %v3202 = vld [vmem:[%s9 + $0x150] sm:$0xff]
        %v3203 = vld [vmem:[%s9 + $0x158] sm:$0xff]
        %v3204 = vld [vmem:[%s9 + $0x160] sm:$0xff]
        %v3205 = vld [vmem:[%s9 + $0x168] sm:$0xff]
        %v3206 = vld [vmem:[%s9 + $0x170] sm:$0xff]
        %v3207 = vld [vmem:[%s9 + $0x178] sm:$0xff]
        %v3208 = vld [vmem:[%s9 + $0x180] sm:$0xff]
        %v3209 = vld [vmem:[%s9 + $0x188] sm:$0xff]
        %v3210 = vld [vmem:[%s9 + $0x190] sm:$0xff]
        %v3211 = vld [vmem:[%s9 + $0x198] sm:$0xff]
        %v3212 = vld [vmem:[%s9 + $0x1a0] sm:$0xff]
        %v3213 = vld [vmem:[%s9 + $0x1a8] sm:$0xff]
        %v3214 = vld [vmem:[%s9 + $0x1b0] sm:$0xff]
        %v3215 = vld [vmem:[%s9 + $0x1b8] sm:$0xff]
        %v3216 = vld [vmem:[%s9 + $0x1c0] sm:$0xff]
        %v3217 = vld [vmem:[%s9 + $0x1c8] sm:$0xff]
        %v3218 = vld [vmem:[%s9 + $0x1d0] sm:$0xff]
        %v3219 = vld [vmem:[%s9 + $0x1d8] sm:$0xff]
        %v3220 = vld [vmem:[%s9 + $0x1e0] sm:$0xff]
        %v3221 = vld [vmem:[%s9 + $0x1e8] sm:$0xff]
        %v3222 = vld [vmem:[%s9 + $0x1f0] sm:$0xff]
        %v3223 = vld [vmem:[%s9 + $0x1f8] sm:$0xff]
        %v3224 = vld [vmem:[%s9 + $0x200] sm:$0xff]
        %v3225 = vld [vmem:[%s9 + $0x208] sm:$0xff]
        %v3226 = vld [vmem:[%s9 + $0x210] sm:$0xff]
        %v3227 = vld [vmem:[%s9 + $0x218] sm:$0xff]
        %v3228 = vld [vmem:[%s9 + $0x220] sm:$0xff]
        %v3229 = vld [vmem:[%s9 + $0x228] sm:$0xff]
        %v3230 = vld [vmem:[%s9 + $0x230] sm:$0xff]
        %v3231 = vld [vmem:[%s9 + $0x238] sm:$0xff]
        %v3232 = vld [vmem:[%s9 + $0x240] sm:$0xff]
        %v3233 = vld [vmem:[%s9 + $0x248] sm:$0xff]
        %v3234 = vld [vmem:[%s9 + $0x250] sm:$0xff]
        %v3235 = vld [vmem:[%s9 + $0x258] sm:$0xff]
        %v3236 = vld [vmem:[%s9 + $0x260] sm:$0xff]
        %v3237 = vld [vmem:[%s9 + $0x268] sm:$0xff]
        %v3238 = vld [vmem:[%s9 + $0x270] sm:$0xff]
        %v3239 = vld [vmem:[%s9 + $0x278] sm:$0xff]
        %v3240 = vld [vmem:[%s9 + $0x280] sm:$0xff]
        %v3241 = vld [vmem:[%s9 + $0x288] sm:$0xff]
        %v3242 = vld [vmem:[%s9 + $0x290] sm:$0xff]
        %v3243 = vld [vmem:[%s9 + $0x298] sm:$0xff]
        %v3244 = vld [vmem:[%s9 + $0x2a0] sm:$0xff]
        %v3245 = vld [vmem:[%s9 + $0x2a8] sm:$0xff]
        %v3246 = vld [vmem:[%s9 + $0x2b0] sm:$0xff]
        %v3247 = vld [vmem:[%s9 + $0x2b8] sm:$0xff]
        %v3248 = vld [vmem:[%s9 + $0x2c0] sm:$0xff]
        %v3249 = vld [vmem:[%s9 + $0x2c8] sm:$0xff]
        %v3250 = vld [vmem:[%s9 + $0x2d0] sm:$0xff]
        %v3251 = vld [vmem:[%s9 + $0x2d8] sm:$0xff]
        %v3252 = vld [vmem:[%s9 + $0x2e0] sm:$0xff]
        %v3253 = vld [vmem:[%s9 + $0x2e8] sm:$0xff]
        %v3254 = vld [vmem:[%s9 + $0x2f0] sm:$0xff]
        %v3255 = vld [vmem:[%s9 + $0x2f8] sm:$0xff]
        %v3256 = vld [vmem:[%s9 + $0x300] sm:$0xff]
        %v3257 = vld [vmem:[%s9 + $0x308] sm:$0xff]
        %v3258 = vld [vmem:[%s9 + $0x310] sm:$0xff]
        %v3259 = vld [vmem:[%s9 + $0x318] sm:$0xff]
        %v3260 = vld [vmem:[%s9 + $0x320] sm:$0xff]
        %v3261 = vld [vmem:[%s9 + $0x328] sm:$0xff]
        %v3262 = vld [vmem:[%s9 + $0x330] sm:$0xff]
        %v3263 = vld [vmem:[%s9 + $0x338] sm:$0xff]
        %v3264 = vld [vmem:[%s9 + $0x340] sm:$0xff]
        %v3265 = vld [vmem:[%s9 + $0x348] sm:$0xff]
        %v3266 = vld [vmem:[%s9 + $0x350] sm:$0xff]
        %v3267 = vld [vmem:[%s9 + $0x358] sm:$0xff]
        %v3268 = vld [vmem:[%s9 + $0x360] sm:$0xff]
        %v3269 = vld [vmem:[%s9 + $0x368] sm:$0xff]
        %v3270 = vld [vmem:[%s9 + $0x370] sm:$0xff]
        %v3271 = vld [vmem:[%s9 + $0x378] sm:$0xff]
        %v3272 = vld [vmem:[%s9 + $0x380] sm:$0xff]
        %v3273 = vld [vmem:[%s9 + $0x388] sm:$0xff]
        %v3274 = vld [vmem:[%s9 + $0x390] sm:$0xff]
        %v3275 = vld [vmem:[%s9 + $0x398] sm:$0xff]
        %v3276 = vld [vmem:[%s9 + $0x3a0] sm:$0xff]
        %v3277 = vld [vmem:[%s9 + $0x3a8] sm:$0xff]
        %v3278 = vld [vmem:[%s9 + $0x3b0] sm:$0xff]
        %v3279 = vld [vmem:[%s9 + $0x3b8] sm:$0xff]
        %v3280 = vld [vmem:[%s9 + $0x3c0] sm:$0xff]
        %v3281 = vld [vmem:[%s9 + $0x3c8] sm:$0xff]
        %v3282 = vld [vmem:[%s9 + $0x3d0] sm:$0xff]
        %v3283 = vld [vmem:[%s9 + $0x3d8] sm:$0xff]
        %v3284 = vld [vmem:[%s9 + $0x3e0] sm:$0xff]
        %v3285 = vld [vmem:[%s9 + $0x3e8] sm:$0xff]
        %v3286 = vld [vmem:[%s9 + $0x3f0] sm:$0xff]
        %v3287 = vld [vmem:[%s9 + $0x3f8] sm:$0xff]
        %3289 = vset.pattern.permute.xlu0 0
        %3290 = vperm.xlu0 %3289, %v3160
        %v3291 = vpop.permute.xlu0 %3290
        %3294 = vset.pattern.permute.xlu0 0
        %3295 = vperm.xlu0 %3294, %v3161
        %v3296 = vpop.permute.xlu0 %3295
        %3299 = vset.pattern.permute.xlu0 0
        %3300 = vperm.xlu0 %3299, %v3162
        %v3301 = vpop.permute.xlu0 %3300
        %3304 = vset.pattern.permute.xlu0 0
        %3305 = vperm.xlu0 %3304, %v3163
        %v3306 = vpop.permute.xlu0 %3305
        %3309 = vset.pattern.permute.xlu0 0
        %3310 = vperm.xlu0 %3309, %v3164
        %v3311 = vpop.permute.xlu0 %3310
        %3314 = vset.pattern.permute.xlu0 0
        %3315 = vperm.xlu0 %3314, %v3165
        %v3316 = vpop.permute.xlu0 %3315
        %3319 = vset.pattern.permute.xlu0 0
        %3320 = vperm.xlu0 %3319, %v3166
        %v3321 = vpop.permute.xlu0 %3320
        %3324 = vset.pattern.permute.xlu0 0
        %3325 = vperm.xlu0 %3324, %v3167
        %v3326 = vpop.permute.xlu0 %3325
        %3329 = vset.pattern.permute.xlu0 0
        %3330 = vperm.xlu0 %3329, %v3168
        %v3331 = vpop.permute.xlu0 %3330
        %3334 = vset.pattern.permute.xlu0 0
        %3335 = vperm.xlu0 %3334, %v3169
        %v3336 = vpop.permute.xlu0 %3335
        %3339 = vset.pattern.permute.xlu0 0
        %3340 = vperm.xlu0 %3339, %v3170
        %v3341 = vpop.permute.xlu0 %3340
        %3344 = vset.pattern.permute.xlu0 0
        %3345 = vperm.xlu0 %3344, %v3171
        %v3346 = vpop.permute.xlu0 %3345
        %3349 = vset.pattern.permute.xlu0 0
        %3350 = vperm.xlu0 %3349, %v3172
        %v3351 = vpop.permute.xlu0 %3350
        %3354 = vset.pattern.permute.xlu0 0
        %3355 = vperm.xlu0 %3354, %v3173
        %v3356 = vpop.permute.xlu0 %3355
        %3359 = vset.pattern.permute.xlu0 0
        %3360 = vperm.xlu0 %3359, %v3174
        %v3361 = vpop.permute.xlu0 %3360
        %3364 = vset.pattern.permute.xlu0 0
        %3365 = vperm.xlu0 %3364, %v3175
        %v3366 = vpop.permute.xlu0 %3365
        %3369 = vset.pattern.permute.xlu0 0
        %3370 = vperm.xlu0 %3369, %v3176
        %v3371 = vpop.permute.xlu0 %3370
        %3374 = vset.pattern.permute.xlu0 0
        %3375 = vperm.xlu0 %3374, %v3177
        %v3376 = vpop.permute.xlu0 %3375
        %3379 = vset.pattern.permute.xlu0 0
        %3380 = vperm.xlu0 %3379, %v3178
        %v3381 = vpop.permute.xlu0 %3380
        %3384 = vset.pattern.permute.xlu0 0
        %3385 = vperm.xlu0 %3384, %v3179
        %v3386 = vpop.permute.xlu0 %3385
        %3389 = vset.pattern.permute.xlu0 0
        %3390 = vperm.xlu0 %3389, %v3180
        %v3391 = vpop.permute.xlu0 %3390
        %3394 = vset.pattern.permute.xlu0 0
        %3395 = vperm.xlu0 %3394, %v3181
        %v3396 = vpop.permute.xlu0 %3395
        %3399 = vset.pattern.permute.xlu0 0
        %3400 = vperm.xlu0 %3399, %v3182
        %v3401 = vpop.permute.xlu0 %3400
        %3404 = vset.pattern.permute.xlu0 0
        %3405 = vperm.xlu0 %3404, %v3183
        %v3406 = vpop.permute.xlu0 %3405
        %3409 = vset.pattern.permute.xlu0 0
        %3410 = vperm.xlu0 %3409, %v3184
        %v3411 = vpop.permute.xlu0 %3410
        %3414 = vset.pattern.permute.xlu0 0
        %3415 = vperm.xlu0 %3414, %v3185
        %v3416 = vpop.permute.xlu0 %3415
        %3419 = vset.pattern.permute.xlu0 0
        %3420 = vperm.xlu0 %3419, %v3186
        %v3421 = vpop.permute.xlu0 %3420
        %3424 = vset.pattern.permute.xlu0 0
        %3425 = vperm.xlu0 %3424, %v3187
        %v3426 = vpop.permute.xlu0 %3425
        %3429 = vset.pattern.permute.xlu0 0
        %3430 = vperm.xlu0 %3429, %v3188
        %v3431 = vpop.permute.xlu0 %3430
        %3434 = vset.pattern.permute.xlu0 0
        %3435 = vperm.xlu0 %3434, %v3189
        %v3436 = vpop.permute.xlu0 %3435
        %3439 = vset.pattern.permute.xlu0 0
        %3440 = vperm.xlu0 %3439, %v3190
        %v3441 = vpop.permute.xlu0 %3440
        %3444 = vset.pattern.permute.xlu0 0
        %3445 = vperm.xlu0 %3444, %v3191
        %v3446 = vpop.permute.xlu0 %3445
        %3449 = vset.pattern.permute.xlu0 0
        %3450 = vperm.xlu0 %3449, %v3192
        %v3451 = vpop.permute.xlu0 %3450
        %3454 = vset.pattern.permute.xlu0 0
        %3455 = vperm.xlu0 %3454, %v3193
        %v3456 = vpop.permute.xlu0 %3455
        %3459 = vset.pattern.permute.xlu0 0
        %3460 = vperm.xlu0 %3459, %v3194
        %v3461 = vpop.permute.xlu0 %3460
        %3464 = vset.pattern.permute.xlu0 0
        %3465 = vperm.xlu0 %3464, %v3195
        %v3466 = vpop.permute.xlu0 %3465
        %3469 = vset.pattern.permute.xlu0 0
        %3470 = vperm.xlu0 %3469, %v3196
        %v3471 = vpop.permute.xlu0 %3470
        %3474 = vset.pattern.permute.xlu0 0
        %3475 = vperm.xlu0 %3474, %v3197
        %v3476 = vpop.permute.xlu0 %3475
        %3479 = vset.pattern.permute.xlu0 0
        %3480 = vperm.xlu0 %3479, %v3198
        %v3481 = vpop.permute.xlu0 %3480
        %3484 = vset.pattern.permute.xlu0 0
        %3485 = vperm.xlu0 %3484, %v3199
        %v3486 = vpop.permute.xlu0 %3485
        %3489 = vset.pattern.permute.xlu0 0
        %3490 = vperm.xlu0 %3489, %v3200
        %v3491 = vpop.permute.xlu0 %3490
        %3494 = vset.pattern.permute.xlu0 0
        %3495 = vperm.xlu0 %3494, %v3201
        %v3496 = vpop.permute.xlu0 %3495
        %3499 = vset.pattern.permute.xlu0 0
        %3500 = vperm.xlu0 %3499, %v3202
        %v3501 = vpop.permute.xlu0 %3500
        %3504 = vset.pattern.permute.xlu0 0
        %3505 = vperm.xlu0 %3504, %v3203
        %v3506 = vpop.permute.xlu0 %3505
        %3509 = vset.pattern.permute.xlu0 0
        %3510 = vperm.xlu0 %3509, %v3204
        %v3511 = vpop.permute.xlu0 %3510
        %3514 = vset.pattern.permute.xlu0 0
        %3515 = vperm.xlu0 %3514, %v3205
        %v3516 = vpop.permute.xlu0 %3515
        %3519 = vset.pattern.permute.xlu0 0
        %3520 = vperm.xlu0 %3519, %v3206
        %v3521 = vpop.permute.xlu0 %3520
        %3524 = vset.pattern.permute.xlu0 0
        %3525 = vperm.xlu0 %3524, %v3207
        %v3526 = vpop.permute.xlu0 %3525
        %3529 = vset.pattern.permute.xlu0 0
        %3530 = vperm.xlu0 %3529, %v3208
        %v3531 = vpop.permute.xlu0 %3530
        %3534 = vset.pattern.permute.xlu0 0
        %3535 = vperm.xlu0 %3534, %v3209
        %v3536 = vpop.permute.xlu0 %3535
        %3539 = vset.pattern.permute.xlu0 0
        %3540 = vperm.xlu0 %3539, %v3210
        %v3541 = vpop.permute.xlu0 %3540
        %3544 = vset.pattern.permute.xlu0 0
        %3545 = vperm.xlu0 %3544, %v3211
        %v3546 = vpop.permute.xlu0 %3545
        %3549 = vset.pattern.permute.xlu0 0
        %3550 = vperm.xlu0 %3549, %v3212
        %v3551 = vpop.permute.xlu0 %3550
        %3554 = vset.pattern.permute.xlu0 0
        %3555 = vperm.xlu0 %3554, %v3213
        %v3556 = vpop.permute.xlu0 %3555
        %3559 = vset.pattern.permute.xlu0 0
        %3560 = vperm.xlu0 %3559, %v3214
        %v3561 = vpop.permute.xlu0 %3560
        %3564 = vset.pattern.permute.xlu0 0
        %3565 = vperm.xlu0 %3564, %v3215
        %v3566 = vpop.permute.xlu0 %3565
        %3569 = vset.pattern.permute.xlu0 0
        %3570 = vperm.xlu0 %3569, %v3216
        %v3571 = vpop.permute.xlu0 %3570
        %3574 = vset.pattern.permute.xlu0 0
        %3575 = vperm.xlu0 %3574, %v3217
        %v3576 = vpop.permute.xlu0 %3575
        %3579 = vset.pattern.permute.xlu0 0
        %3580 = vperm.xlu0 %3579, %v3218
        %v3581 = vpop.permute.xlu0 %3580
        %3584 = vset.pattern.permute.xlu0 0
        %3585 = vperm.xlu0 %3584, %v3219
        %v3586 = vpop.permute.xlu0 %3585
        %3589 = vset.pattern.permute.xlu0 0
        %3590 = vperm.xlu0 %3589, %v3220
        %v3591 = vpop.permute.xlu0 %3590
        %3594 = vset.pattern.permute.xlu0 0
        %3595 = vperm.xlu0 %3594, %v3221
        %v3596 = vpop.permute.xlu0 %3595
        %3599 = vset.pattern.permute.xlu0 0
        %3600 = vperm.xlu0 %3599, %v3222
        %v3601 = vpop.permute.xlu0 %3600
        %3604 = vset.pattern.permute.xlu0 0
        %3605 = vperm.xlu0 %3604, %v3223
        %v3606 = vpop.permute.xlu0 %3605
        %3609 = vset.pattern.permute.xlu0 0
        %3610 = vperm.xlu0 %3609, %v3224
        %v3611 = vpop.permute.xlu0 %3610
        %3614 = vset.pattern.permute.xlu0 0
        %3615 = vperm.xlu0 %3614, %v3225
        %v3616 = vpop.permute.xlu0 %3615
        %3619 = vset.pattern.permute.xlu0 0
        %3620 = vperm.xlu0 %3619, %v3226
        %v3621 = vpop.permute.xlu0 %3620
        %3624 = vset.pattern.permute.xlu0 0
        %3625 = vperm.xlu0 %3624, %v3227
        %v3626 = vpop.permute.xlu0 %3625
        %3629 = vset.pattern.permute.xlu0 0
        %3630 = vperm.xlu0 %3629, %v3228
        %v3631 = vpop.permute.xlu0 %3630
        %3634 = vset.pattern.permute.xlu0 0
        %3635 = vperm.xlu0 %3634, %v3229
        %v3636 = vpop.permute.xlu0 %3635
        %3639 = vset.pattern.permute.xlu0 0
        %3640 = vperm.xlu0 %3639, %v3230
        %v3641 = vpop.permute.xlu0 %3640
        %3644 = vset.pattern.permute.xlu0 0
        %3645 = vperm.xlu0 %3644, %v3231
        %v3646 = vpop.permute.xlu0 %3645
        %3649 = vset.pattern.permute.xlu0 0
        %3650 = vperm.xlu0 %3649, %v3232
        %v3651 = vpop.permute.xlu0 %3650
        %3654 = vset.pattern.permute.xlu0 0
        %3655 = vperm.xlu0 %3654, %v3233
        %v3656 = vpop.permute.xlu0 %3655
        %3659 = vset.pattern.permute.xlu0 0
        %3660 = vperm.xlu0 %3659, %v3234
        %v3661 = vpop.permute.xlu0 %3660
        %3664 = vset.pattern.permute.xlu0 0
        %3665 = vperm.xlu0 %3664, %v3235
        %v3666 = vpop.permute.xlu0 %3665
        %3669 = vset.pattern.permute.xlu0 0
        %3670 = vperm.xlu0 %3669, %v3236
        %v3671 = vpop.permute.xlu0 %3670
        %3674 = vset.pattern.permute.xlu0 0
        %3675 = vperm.xlu0 %3674, %v3237
        %v3676 = vpop.permute.xlu0 %3675
        %3679 = vset.pattern.permute.xlu0 0
        %3680 = vperm.xlu0 %3679, %v3238
        %v3681 = vpop.permute.xlu0 %3680
        %3684 = vset.pattern.permute.xlu0 0
        %3685 = vperm.xlu0 %3684, %v3239
        %v3686 = vpop.permute.xlu0 %3685
        %3689 = vset.pattern.permute.xlu0 0
        %3690 = vperm.xlu0 %3689, %v3240
        %v3691 = vpop.permute.xlu0 %3690
        %3694 = vset.pattern.permute.xlu0 0
        %3695 = vperm.xlu0 %3694, %v3241
        %v3696 = vpop.permute.xlu0 %3695
        %3699 = vset.pattern.permute.xlu0 0
        %3700 = vperm.xlu0 %3699, %v3242
        %v3701 = vpop.permute.xlu0 %3700
        %3704 = vset.pattern.permute.xlu0 0
        %3705 = vperm.xlu0 %3704, %v3243
        %v3706 = vpop.permute.xlu0 %3705
        %3709 = vset.pattern.permute.xlu0 0
        %3710 = vperm.xlu0 %3709, %v3244
        %v3711 = vpop.permute.xlu0 %3710
        %3714 = vset.pattern.permute.xlu0 0
        %3715 = vperm.xlu0 %3714, %v3245
        %v3716 = vpop.permute.xlu0 %3715
        %3719 = vset.pattern.permute.xlu0 0
        %3720 = vperm.xlu0 %3719, %v3246
        %v3721 = vpop.permute.xlu0 %3720
        %3724 = vset.pattern.permute.xlu0 0
        %3725 = vperm.xlu0 %3724, %v3247
        %v3726 = vpop.permute.xlu0 %3725
        %3729 = vset.pattern.permute.xlu0 0
        %3730 = vperm.xlu0 %3729, %v3248
        %v3731 = vpop.permute.xlu0 %3730
        %3734 = vset.pattern.permute.xlu0 0
        %3735 = vperm.xlu0 %3734, %v3249
        %v3736 = vpop.permute.xlu0 %3735
        %3739 = vset.pattern.permute.xlu0 0
        %3740 = vperm.xlu0 %3739, %v3250
        %v3741 = vpop.permute.xlu0 %3740
        %3744 = vset.pattern.permute.xlu0 0
        %3745 = vperm.xlu0 %3744, %v3251
        %v3746 = vpop.permute.xlu0 %3745
        %3749 = vset.pattern.permute.xlu0 0
        %3750 = vperm.xlu0 %3749, %v3252
        %v3751 = vpop.permute.xlu0 %3750
        %3754 = vset.pattern.permute.xlu0 0
        %3755 = vperm.xlu0 %3754, %v3253
        %v3756 = vpop.permute.xlu0 %3755
        %3759 = vset.pattern.permute.xlu0 0
        %3760 = vperm.xlu0 %3759, %v3254
        %v3761 = vpop.permute.xlu0 %3760
        %3764 = vset.pattern.permute.xlu0 0
        %3765 = vperm.xlu0 %3764, %v3255
        %v3766 = vpop.permute.xlu0 %3765
        %3769 = vset.pattern.permute.xlu0 0
        %3770 = vperm.xlu0 %3769, %v3256
        %v3771 = vpop.permute.xlu0 %3770
        %3774 = vset.pattern.permute.xlu0 0
        %3775 = vperm.xlu0 %3774, %v3257
        %v3776 = vpop.permute.xlu0 %3775
        %3779 = vset.pattern.permute.xlu0 0
        %3780 = vperm.xlu0 %3779, %v3258
        %v3781 = vpop.permute.xlu0 %3780
        %3784 = vset.pattern.permute.xlu0 0
        %3785 = vperm.xlu0 %3784, %v3259
        %v3786 = vpop.permute.xlu0 %3785
        %3789 = vset.pattern.permute.xlu0 0
        %3790 = vperm.xlu0 %3789, %v3260
        %v3791 = vpop.permute.xlu0 %3790
        %3794 = vset.pattern.permute.xlu0 0
        %3795 = vperm.xlu0 %3794, %v3261
        %v3796 = vpop.permute.xlu0 %3795
        %3799 = vset.pattern.permute.xlu0 0
        %3800 = vperm.xlu0 %3799, %v3262
        %v3801 = vpop.permute.xlu0 %3800
        %3804 = vset.pattern.permute.xlu0 0
        %3805 = vperm.xlu0 %3804, %v3263
        %v3806 = vpop.permute.xlu0 %3805
        %3809 = vset.pattern.permute.xlu0 0
        %3810 = vperm.xlu0 %3809, %v3264
        %v3811 = vpop.permute.xlu0 %3810
        %3814 = vset.pattern.permute.xlu0 0
        %3815 = vperm.xlu0 %3814, %v3265
        %v3816 = vpop.permute.xlu0 %3815
        %3819 = vset.pattern.permute.xlu0 0
        %3820 = vperm.xlu0 %3819, %v3266
        %v3821 = vpop.permute.xlu0 %3820
        %3824 = vset.pattern.permute.xlu0 0
        %3825 = vperm.xlu0 %3824, %v3267
        %v3826 = vpop.permute.xlu0 %3825
        %3829 = vset.pattern.permute.xlu0 0
        %3830 = vperm.xlu0 %3829, %v3268
        %v3831 = vpop.permute.xlu0 %3830
        %3834 = vset.pattern.permute.xlu0 0
        %3835 = vperm.xlu0 %3834, %v3269
        %v3836 = vpop.permute.xlu0 %3835
        %3839 = vset.pattern.permute.xlu0 0
        %3840 = vperm.xlu0 %3839, %v3270
        %v3841 = vpop.permute.xlu0 %3840
        %3844 = vset.pattern.permute.xlu0 0
        %3845 = vperm.xlu0 %3844, %v3271
        %v3846 = vpop.permute.xlu0 %3845
        %3849 = vset.pattern.permute.xlu0 0
        %3850 = vperm.xlu0 %3849, %v3272
        %v3851 = vpop.permute.xlu0 %3850
        %3854 = vset.pattern.permute.xlu0 0
        %3855 = vperm.xlu0 %3854, %v3273
        %v3856 = vpop.permute.xlu0 %3855
        %3859 = vset.pattern.permute.xlu0 0
        %3860 = vperm.xlu0 %3859, %v3274
        %v3861 = vpop.permute.xlu0 %3860
        %3864 = vset.pattern.permute.xlu0 0
        %3865 = vperm.xlu0 %3864, %v3275
        %v3866 = vpop.permute.xlu0 %3865
        %3869 = vset.pattern.permute.xlu0 0
        %3870 = vperm.xlu0 %3869, %v3276
        %v3871 = vpop.permute.xlu0 %3870
        %3874 = vset.pattern.permute.xlu0 0
        %3875 = vperm.xlu0 %3874, %v3277
        %v3876 = vpop.permute.xlu0 %3875
        %3879 = vset.pattern.permute.xlu0 0
        %3880 = vperm.xlu0 %3879, %v3278
        %v3881 = vpop.permute.xlu0 %3880
        %3884 = vset.pattern.permute.xlu0 0
        %3885 = vperm.xlu0 %3884, %v3279
        %v3886 = vpop.permute.xlu0 %3885
        %3889 = vset.pattern.permute.xlu0 0
        %3890 = vperm.xlu0 %3889, %v3280
        %v3891 = vpop.permute.xlu0 %3890
        %3894 = vset.pattern.permute.xlu0 0
        %3895 = vperm.xlu0 %3894, %v3281
        %v3896 = vpop.permute.xlu0 %3895
        %3899 = vset.pattern.permute.xlu0 0
        %3900 = vperm.xlu0 %3899, %v3282
        %v3901 = vpop.permute.xlu0 %3900
        %3904 = vset.pattern.permute.xlu0 0
        %3905 = vperm.xlu0 %3904, %v3283
        %v3906 = vpop.permute.xlu0 %3905
        %3909 = vset.pattern.permute.xlu0 0
        %3910 = vperm.xlu0 %3909, %v3284
        %v3911 = vpop.permute.xlu0 %3910
        %3914 = vset.pattern.permute.xlu0 0
        %3915 = vperm.xlu0 %3914, %v3285
        %v3916 = vpop.permute.xlu0 %3915
        %3919 = vset.pattern.permute.xlu0 0
        %3920 = vperm.xlu0 %3919, %v3286
        %v3921 = vpop.permute.xlu0 %3920
        %3924 = vset.pattern.permute.xlu0 0
        %3925 = vperm.xlu0 %3924, %v3287
        %v3926 = vpop.permute.xlu0 %3925
        %v3928 = vadd.f32 %v3032, %v3291
        %v3929 = vadd.f32 %v3033, %v3296
        %v3930 = vadd.f32 %v3034, %v3301
        %v3931 = vadd.f32 %v3035, %v3306
        %v3932 = vadd.f32 %v3036, %v3311
        %v3933 = vadd.f32 %v3037, %v3316
        %v3934 = vadd.f32 %v3038, %v3321
        %v3935 = vadd.f32 %v3039, %v3326
        %v3936 = vadd.f32 %v3040, %v3331
        %v3937 = vadd.f32 %v3041, %v3336
        %v3938 = vadd.f32 %v3042, %v3341
        %v3939 = vadd.f32 %v3043, %v3346
        %v3940 = vadd.f32 %v3044, %v3351
        %v3941 = vadd.f32 %v3045, %v3356
        %v3942 = vadd.f32 %v3046, %v3361
        %v3943 = vadd.f32 %v3047, %v3366
        %v3944 = vadd.f32 %v3048, %v3371
        %v3945 = vadd.f32 %v3049, %v3376
        %v3946 = vadd.f32 %v3050, %v3381
        %v3947 = vadd.f32 %v3051, %v3386
        %v3948 = vadd.f32 %v3052, %v3391
        %v3949 = vadd.f32 %v3053, %v3396
        %v3950 = vadd.f32 %v3054, %v3401
        %v3951 = vadd.f32 %v3055, %v3406
        %v3952 = vadd.f32 %v3056, %v3411
        %v3953 = vadd.f32 %v3057, %v3416
        %v3954 = vadd.f32 %v3058, %v3421
        %v3955 = vadd.f32 %v3059, %v3426
        %v3956 = vadd.f32 %v3060, %v3431
        %v3957 = vadd.f32 %v3061, %v3436
        %v3958 = vadd.f32 %v3062, %v3441
        %v3959 = vadd.f32 %v3063, %v3446
        %v3960 = vadd.f32 %v3064, %v3451
        %v3961 = vadd.f32 %v3065, %v3456
        %v3962 = vadd.f32 %v3066, %v3461
        %v3963 = vadd.f32 %v3067, %v3466
        %v3964 = vadd.f32 %v3068, %v3471
        %v3965 = vadd.f32 %v3069, %v3476
        %v3966 = vadd.f32 %v3070, %v3481
        %v3967 = vadd.f32 %v3071, %v3486
        %v3968 = vadd.f32 %v3072, %v3491
        %v3969 = vadd.f32 %v3073, %v3496
        %v3970 = vadd.f32 %v3074, %v3501
        %v3971 = vadd.f32 %v3075, %v3506
        %v3972 = vadd.f32 %v3076, %v3511
        %v3973 = vadd.f32 %v3077, %v3516
        %v3974 = vadd.f32 %v3078, %v3521
        %v3975 = vadd.f32 %v3079, %v3526
        %v3976 = vadd.f32 %v3080, %v3531
        %v3977 = vadd.f32 %v3081, %v3536
        %v3978 = vadd.f32 %v3082, %v3541
        %v3979 = vadd.f32 %v3083, %v3546
        %v3980 = vadd.f32 %v3084, %v3551
        %v3981 = vadd.f32 %v3085, %v3556
        %v3982 = vadd.f32 %v3086, %v3561
        %v3983 = vadd.f32 %v3087, %v3566
        %v3984 = vadd.f32 %v3088, %v3571
        %v3985 = vadd.f32 %v3089, %v3576
        %v3986 = vadd.f32 %v3090, %v3581
        %v3987 = vadd.f32 %v3091, %v3586
        %v3988 = vadd.f32 %v3092, %v3591
        %v3989 = vadd.f32 %v3093, %v3596
        %v3990 = vadd.f32 %v3094, %v3601
        %v3991 = vadd.f32 %v3095, %v3606
        %v3992 = vadd.f32 %v3096, %v3611
        %v3993 = vadd.f32 %v3097, %v3616
        %v3994 = vadd.f32 %v3098, %v3621
        %v3995 = vadd.f32 %v3099, %v3626
        %v3996 = vadd.f32 %v3100, %v3631
        %v3997 = vadd.f32 %v3101, %v3636
        %v3998 = vadd.f32 %v3102, %v3641
        %v3999 = vadd.f32 %v3103, %v3646
        %v4000 = vadd.f32 %v3104, %v3651
        %v4001 = vadd.f32 %v3105, %v3656
        %v4002 = vadd.f32 %v3106, %v3661
        %v4003 = vadd.f32 %v3107, %v3666
        %v4004 = vadd.f32 %v3108, %v3671
        %v4005 = vadd.f32 %v3109, %v3676
        %v4006 = vadd.f32 %v3110, %v3681
        %v4007 = vadd.f32 %v3111, %v3686
        %v4008 = vadd.f32 %v3112, %v3691
        %v4009 = vadd.f32 %v3113, %v3696
        %v4010 = vadd.f32 %v3114, %v3701
        %v4011 = vadd.f32 %v3115, %v3706
        %v4012 = vadd.f32 %v3116, %v3711
        %v4013 = vadd.f32 %v3117, %v3716
        %v4014 = vadd.f32 %v3118, %v3721
        %v4015 = vadd.f32 %v3119, %v3726
        %v4016 = vadd.f32 %v3120, %v3731
        %v4017 = vadd.f32 %v3121, %v3736
        %v4018 = vadd.f32 %v3122, %v3741
        %v4019 = vadd.f32 %v3123, %v3746
        %v4020 = vadd.f32 %v3124, %v3751
        %v4021 = vadd.f32 %v3125, %v3756
        %v4022 = vadd.f32 %v3126, %v3761
        %v4023 = vadd.f32 %v3127, %v3766
        %v4024 = vadd.f32 %v3128, %v3771
        %v4025 = vadd.f32 %v3129, %v3776
        %v4026 = vadd.f32 %v3130, %v3781
        %v4027 = vadd.f32 %v3131, %v3786
        %v4028 = vadd.f32 %v3132, %v3791
        %v4029 = vadd.f32 %v3133, %v3796
        %v4030 = vadd.f32 %v3134, %v3801
        %v4031 = vadd.f32 %v3135, %v3806
        %v4032 = vadd.f32 %v3136, %v3811
        %v4033 = vadd.f32 %v3137, %v3816
        %v4034 = vadd.f32 %v3138, %v3821
        %v4035 = vadd.f32 %v3139, %v3826
        %v4036 = vadd.f32 %v3140, %v3831
        %v4037 = vadd.f32 %v3141, %v3836
        %v4038 = vadd.f32 %v3142, %v3841
        %v4039 = vadd.f32 %v3143, %v3846
        %v4040 = vadd.f32 %v3144, %v3851
        %v4041 = vadd.f32 %v3145, %v3856
        %v4042 = vadd.f32 %v3146, %v3861
        %v4043 = vadd.f32 %v3147, %v3866
        %v4044 = vadd.f32 %v3148, %v3871
        %v4045 = vadd.f32 %v3149, %v3876
        %v4046 = vadd.f32 %v3150, %v3881
        %v4047 = vadd.f32 %v3151, %v3886
        %v4048 = vadd.f32 %v3152, %v3891
        %v4049 = vadd.f32 %v3153, %v3896
        %v4050 = vadd.f32 %v3154, %v3901
        %v4051 = vadd.f32 %v3155, %v3906
        %v4052 = vadd.f32 %v3156, %v3911
        %v4053 = vadd.f32 %v3157, %v3916
        %v4054 = vadd.f32 %v3158, %v3921
        %v4055 = vadd.f32 %v3159, %v3926
        %v4056 = vmax.f32 %v3928, 0.0
        %v4057 = vmax.f32 %v3929, 0.0
        %v4058 = vmax.f32 %v3930, 0.0
        %v4059 = vmax.f32 %v3931, 0.0
        %v4060 = vmax.f32 %v3932, 0.0
        %v4061 = vmax.f32 %v3933, 0.0
        %v4062 = vmax.f32 %v3934, 0.0
        %v4063 = vmax.f32 %v3935, 0.0
        %v4064 = vmax.f32 %v3936, 0.0
        %v4065 = vmax.f32 %v3937, 0.0
        %v4066 = vmax.f32 %v3938, 0.0
        %v4067 = vmax.f32 %v3939, 0.0
        %v4068 = vmax.f32 %v3940, 0.0
        %v4069 = vmax.f32 %v3941, 0.0
        %v4070 = vmax.f32 %v3942, 0.0
        %v4071 = vmax.f32 %v3943, 0.0
        %v4072 = vmax.f32 %v3944, 0.0
        %v4073 = vmax.f32 %v3945, 0.0
        %v4074 = vmax.f32 %v3946, 0.0
        %v4075 = vmax.f32 %v3947, 0.0
        %v4076 = vmax.f32 %v3948, 0.0
        %v4077 = vmax.f32 %v3949, 0.0
        %v4078 = vmax.f32 %v3950, 0.0
        %v4079 = vmax.f32 %v3951, 0.0
        %v4080 = vmax.f32 %v3952, 0.0
        %v4081 = vmax.f32 %v3953, 0.0
        %v4082 = vmax.f32 %v3954, 0.0
        %v4083 = vmax.f32 %v3955, 0.0
        %v4084 = vmax.f32 %v3956, 0.0
        %v4085 = vmax.f32 %v3957, 0.0
        %v4086 = vmax.f32 %v3958, 0.0
        %v4087 = vmax.f32 %v3959, 0.0
        %v4088 = vmax.f32 %v3960, 0.0
        %v4089 = vmax.f32 %v3961, 0.0
        %v4090 = vmax.f32 %v3962, 0.0
        %v4091 = vmax.f32 %v3963, 0.0
        %v4092 = vmax.f32 %v3964, 0.0
        %v4093 = vmax.f32 %v3965, 0.0
        %v4094 = vmax.f32 %v3966, 0.0
        %v4095 = vmax.f32 %v3967, 0.0
        %v4096 = vmax.f32 %v3968, 0.0
        %v4097 = vmax.f32 %v3969, 0.0
        %v4098 = vmax.f32 %v3970, 0.0
        %v4099 = vmax.f32 %v3971, 0.0
        %v4100 = vmax.f32 %v3972, 0.0
        %v4101 = vmax.f32 %v3973, 0.0
        %v4102 = vmax.f32 %v3974, 0.0
        %v4103 = vmax.f32 %v3975, 0.0
        %v4104 = vmax.f32 %v3976, 0.0
        %v4105 = vmax.f32 %v3977, 0.0
        %v4106 = vmax.f32 %v3978, 0.0
        %v4107 = vmax.f32 %v3979, 0.0
        %v4108 = vmax.f32 %v3980, 0.0
        %v4109 = vmax.f32 %v3981, 0.0
        %v4110 = vmax.f32 %v3982, 0.0
        %v4111 = vmax.f32 %v3983, 0.0
        %v4112 = vmax.f32 %v3984, 0.0
        %v4113 = vmax.f32 %v3985, 0.0
        %v4114 = vmax.f32 %v3986, 0.0
        %v4115 = vmax.f32 %v3987, 0.0
        %v4116 = vmax.f32 %v3988, 0.0
        %v4117 = vmax.f32 %v3989, 0.0
        %v4118 = vmax.f32 %v3990, 0.0
        %v4119 = vmax.f32 %v3991, 0.0
        %v4120 = vmax.f32 %v3992, 0.0
        %v4121 = vmax.f32 %v3993, 0.0
        %v4122 = vmax.f32 %v3994, 0.0
        %v4123 = vmax.f32 %v3995, 0.0
        %v4124 = vmax.f32 %v3996, 0.0
        %v4125 = vmax.f32 %v3997, 0.0
        %v4126 = vmax.f32 %v3998, 0.0
        %v4127 = vmax.f32 %v3999, 0.0
        %v4128 = vmax.f32 %v4000, 0.0
        %v4129 = vmax.f32 %v4001, 0.0
        %v4130 = vmax.f32 %v4002, 0.0
        %v4131 = vmax.f32 %v4003, 0.0
        %v4132 = vmax.f32 %v4004, 0.0
        %v4133 = vmax.f32 %v4005, 0.0
        %v4134 = vmax.f32 %v4006, 0.0
        %v4135 = vmax.f32 %v4007, 0.0
        %v4136 = vmax.f32 %v4008, 0.0
        %v4137 = vmax.f32 %v4009, 0.0
        %v4138 = vmax.f32 %v4010, 0.0
        %v4139 = vmax.f32 %v4011, 0.0
        %v4140 = vmax.f32 %v4012, 0.0
        %v4141 = vmax.f32 %v4013, 0.0
        %v4142 = vmax.f32 %v4014, 0.0
        %v4143 = vmax.f32 %v4015, 0.0
        %v4144 = vmax.f32 %v4016, 0.0
        %v4145 = vmax.f32 %v4017, 0.0
        %v4146 = vmax.f32 %v4018, 0.0
        %v4147 = vmax.f32 %v4019, 0.0
        %v4148 = vmax.f32 %v4020, 0.0
        %v4149 = vmax.f32 %v4021, 0.0
        %v4150 = vmax.f32 %v4022, 0.0
        %v4151 = vmax.f32 %v4023, 0.0
        %v4152 = vmax.f32 %v4024, 0.0
        %v4153 = vmax.f32 %v4025, 0.0
        %v4154 = vmax.f32 %v4026, 0.0
        %v4155 = vmax.f32 %v4027, 0.0
        %v4156 = vmax.f32 %v4028, 0.0
        %v4157 = vmax.f32 %v4029, 0.0
        %v4158 = vmax.f32 %v4030, 0.0
        %v4159 = vmax.f32 %v4031, 0.0
        %v4160 = vmax.f32 %v4032, 0.0
        %v4161 = vmax.f32 %v4033, 0.0
        %v4162 = vmax.f32 %v4034, 0.0
        %v4163 = vmax.f32 %v4035, 0.0
        %v4164 = vmax.f32 %v4036, 0.0
        %v4165 = vmax.f32 %v4037, 0.0
        %v4166 = vmax.f32 %v4038, 0.0
        %v4167 = vmax.f32 %v4039, 0.0
        %v4168 = vmax.f32 %v4040, 0.0
        %v4169 = vmax.f32 %v4041, 0.0
        %v4170 = vmax.f32 %v4042, 0.0
        %v4171 = vmax.f32 %v4043, 0.0
        %v4172 = vmax.f32 %v4044, 0.0
        %v4173 = vmax.f32 %v4045, 0.0
        %v4174 = vmax.f32 %v4046, 0.0
        %v4175 = vmax.f32 %v4047, 0.0
        %v4176 = vmax.f32 %v4048, 0.0
        %v4177 = vmax.f32 %v4049, 0.0
        %v4178 = vmax.f32 %v4050, 0.0
        %v4179 = vmax.f32 %v4051, 0.0
        %v4180 = vmax.f32 %v4052, 0.0
        %v4181 = vmax.f32 %v4053, 0.0
        %v4182 = vmax.f32 %v4054, 0.0
        %v4183 = vmax.f32 %v4055, 0.0
        %v4184 = vld [vmem:[#allocation2] sm:$0xff]
        %v4185 = vld [vmem:[#allocation2 + $0x8] sm:$0xff]
        %v4186 = vld [vmem:[#allocation2 + $0x10] sm:$0xff]
        %v4187 = vld [vmem:[#allocation2 + $0x18] sm:$0xff]
        %v4188 = vld [vmem:[#allocation2 + $0x20] sm:$0xff]
        %v4189 = vld [vmem:[#allocation2 + $0x28] sm:$0xff]
        %v4190 = vld [vmem:[#allocation2 + $0x30] sm:$0xff]
        %v4191 = vld [vmem:[#allocation2 + $0x38] sm:$0xff]
        %v4192 = vld [vmem:[#allocation2 + $0x40] sm:$0xff]
        %v4193 = vld [vmem:[#allocation2 + $0x48] sm:$0xff]
        %v4194 = vld [vmem:[#allocation2 + $0x50] sm:$0xff]
        %v4195 = vld [vmem:[#allocation2 + $0x58] sm:$0xff]
        %v4196 = vld [vmem:[#allocation2 + $0x60] sm:$0xff]
        %v4197 = vld [vmem:[#allocation2 + $0x68] sm:$0xff]
        %v4198 = vld [vmem:[#allocation2 + $0x70] sm:$0xff]
        %v4199 = vld [vmem:[#allocation2 + $0x78] sm:$0xff]
        %v4200 = vld [vmem:[#allocation2 + $0x80] sm:$0xff]
        %v4201 = vld [vmem:[#allocation2 + $0x88] sm:$0xff]
        %v4202 = vld [vmem:[#allocation2 + $0x90] sm:$0xff]
        %v4203 = vld [vmem:[#allocation2 + $0x98] sm:$0xff]
        %v4204 = vld [vmem:[#allocation2 + $0xa0] sm:$0xff]
        %v4205 = vld [vmem:[#allocation2 + $0xa8] sm:$0xff]
        %v4206 = vld [vmem:[#allocation2 + $0xb0] sm:$0xff]
        %v4207 = vld [vmem:[#allocation2 + $0xb8] sm:$0xff]
        %v4208 = vld [vmem:[#allocation2 + $0xc0] sm:$0xff]
        %v4209 = vld [vmem:[#allocation2 + $0xc8] sm:$0xff]
        %v4210 = vld [vmem:[#allocation2 + $0xd0] sm:$0xff]
        %v4211 = vld [vmem:[#allocation2 + $0xd8] sm:$0xff]
        %v4212 = vld [vmem:[#allocation2 + $0xe0] sm:$0xff]
        %v4213 = vld [vmem:[#allocation2 + $0xe8] sm:$0xff]
        %v4214 = vld [vmem:[#allocation2 + $0xf0] sm:$0xff]
        %v4215 = vld [vmem:[#allocation2 + $0xf8] sm:$0xff]
        %v4216 = vld [vmem:[#allocation2 + $0x100] sm:$0xff]
        %v4217 = vld [vmem:[#allocation2 + $0x108] sm:$0xff]
        %v4218 = vld [vmem:[#allocation2 + $0x110] sm:$0xff]
        %v4219 = vld [vmem:[#allocation2 + $0x118] sm:$0xff]
        %v4220 = vld [vmem:[#allocation2 + $0x120] sm:$0xff]
        %v4221 = vld [vmem:[#allocation2 + $0x128] sm:$0xff]
        %v4222 = vld [vmem:[#allocation2 + $0x130] sm:$0xff]
        %v4223 = vld [vmem:[#allocation2 + $0x138] sm:$0xff]
        %v4224 = vld [vmem:[#allocation2 + $0x140] sm:$0xff]
        %v4225 = vld [vmem:[#allocation2 + $0x148] sm:$0xff]
        %v4226 = vld [vmem:[#allocation2 + $0x150] sm:$0xff]
        %v4227 = vld [vmem:[#allocation2 + $0x158] sm:$0xff]
        %v4228 = vld [vmem:[#allocation2 + $0x160] sm:$0xff]
        %v4229 = vld [vmem:[#allocation2 + $0x168] sm:$0xff]
        %v4230 = vld [vmem:[#allocation2 + $0x170] sm:$0xff]
        %v4231 = vld [vmem:[#allocation2 + $0x178] sm:$0xff]
        %v4232 = vld [vmem:[#allocation2 + $0x180] sm:$0xff]
        %v4233 = vld [vmem:[#allocation2 + $0x188] sm:$0xff]
        %v4234 = vld [vmem:[#allocation2 + $0x190] sm:$0xff]
        %v4235 = vld [vmem:[#allocation2 + $0x198] sm:$0xff]
        %v4236 = vld [vmem:[#allocation2 + $0x1a0] sm:$0xff]
        %v4237 = vld [vmem:[#allocation2 + $0x1a8] sm:$0xff]
        %v4238 = vld [vmem:[#allocation2 + $0x1b0] sm:$0xff]
        %v4239 = vld [vmem:[#allocation2 + $0x1b8] sm:$0xff]
        %v4240 = vld [vmem:[#allocation2 + $0x1c0] sm:$0xff]
        %v4241 = vld [vmem:[#allocation2 + $0x1c8] sm:$0xff]
        %v4242 = vld [vmem:[#allocation2 + $0x1d0] sm:$0xff]
        %v4243 = vld [vmem:[#allocation2 + $0x1d8] sm:$0xff]
        %v4244 = vld [vmem:[#allocation2 + $0x1e0] sm:$0xff]
        %v4245 = vld [vmem:[#allocation2 + $0x1e8] sm:$0xff]
        %v4246 = vld [vmem:[#allocation2 + $0x1f0] sm:$0xff]
        %v4247 = vld [vmem:[#allocation2 + $0x1f8] sm:$0xff]
        %v4248 = vld [vmem:[#allocation2 + $0x200] sm:$0xff]
        %v4249 = vld [vmem:[#allocation2 + $0x208] sm:$0xff]
        %v4250 = vld [vmem:[#allocation2 + $0x210] sm:$0xff]
        %v4251 = vld [vmem:[#allocation2 + $0x218] sm:$0xff]
        %v4252 = vld [vmem:[#allocation2 + $0x220] sm:$0xff]
        %v4253 = vld [vmem:[#allocation2 + $0x228] sm:$0xff]
        %v4254 = vld [vmem:[#allocation2 + $0x230] sm:$0xff]
        %v4255 = vld [vmem:[#allocation2 + $0x238] sm:$0xff]
        %v4256 = vld [vmem:[#allocation2 + $0x240] sm:$0xff]
        %v4257 = vld [vmem:[#allocation2 + $0x248] sm:$0xff]
        %v4258 = vld [vmem:[#allocation2 + $0x250] sm:$0xff]
        %v4259 = vld [vmem:[#allocation2 + $0x258] sm:$0xff]
        %v4260 = vld [vmem:[#allocation2 + $0x260] sm:$0xff]
        %v4261 = vld [vmem:[#allocation2 + $0x268] sm:$0xff]
        %v4262 = vld [vmem:[#allocation2 + $0x270] sm:$0xff]
        %v4263 = vld [vmem:[#allocation2 + $0x278] sm:$0xff]
        %v4264 = vld [vmem:[#allocation2 + $0x280] sm:$0xff]
        %v4265 = vld [vmem:[#allocation2 + $0x288] sm:$0xff]
        %v4266 = vld [vmem:[#allocation2 + $0x290] sm:$0xff]
        %v4267 = vld [vmem:[#allocation2 + $0x298] sm:$0xff]
        %v4268 = vld [vmem:[#allocation2 + $0x2a0] sm:$0xff]
        %v4269 = vld [vmem:[#allocation2 + $0x2a8] sm:$0xff]
        %v4270 = vld [vmem:[#allocation2 + $0x2b0] sm:$0xff]
        %v4271 = vld [vmem:[#allocation2 + $0x2b8] sm:$0xff]
        %v4272 = vld [vmem:[#allocation2 + $0x2c0] sm:$0xff]
        %v4273 = vld [vmem:[#allocation2 + $0x2c8] sm:$0xff]
        %v4274 = vld [vmem:[#allocation2 + $0x2d0] sm:$0xff]
        %v4275 = vld [vmem:[#allocation2 + $0x2d8] sm:$0xff]
        %v4276 = vld [vmem:[#allocation2 + $0x2e0] sm:$0xff]
        %v4277 = vld [vmem:[#allocation2 + $0x2e8] sm:$0xff]
        %v4278 = vld [vmem:[#allocation2 + $0x2f0] sm:$0xff]
        %v4279 = vld [vmem:[#allocation2 + $0x2f8] sm:$0xff]
        %v4280 = vld [vmem:[#allocation2 + $0x300] sm:$0xff]
        %v4281 = vld [vmem:[#allocation2 + $0x308] sm:$0xff]
        %v4282 = vld [vmem:[#allocation2 + $0x310] sm:$0xff]
        %v4283 = vld [vmem:[#allocation2 + $0x318] sm:$0xff]
        %v4284 = vld [vmem:[#allocation2 + $0x320] sm:$0xff]
        %v4285 = vld [vmem:[#allocation2 + $0x328] sm:$0xff]
        %v4286 = vld [vmem:[#allocation2 + $0x330] sm:$0xff]
        %v4287 = vld [vmem:[#allocation2 + $0x338] sm:$0xff]
        %v4288 = vld [vmem:[#allocation2 + $0x340] sm:$0xff]
        %v4289 = vld [vmem:[#allocation2 + $0x348] sm:$0xff]
        %v4290 = vld [vmem:[#allocation2 + $0x350] sm:$0xff]
        %v4291 = vld [vmem:[#allocation2 + $0x358] sm:$0xff]
        %v4292 = vld [vmem:[#allocation2 + $0x360] sm:$0xff]
        %v4293 = vld [vmem:[#allocation2 + $0x368] sm:$0xff]
        %v4294 = vld [vmem:[#allocation2 + $0x370] sm:$0xff]
        %v4295 = vld [vmem:[#allocation2 + $0x378] sm:$0xff]
        %v4296 = vld [vmem:[#allocation2 + $0x380] sm:$0xff]
        %v4297 = vld [vmem:[#allocation2 + $0x388] sm:$0xff]
        %v4298 = vld [vmem:[#allocation2 + $0x390] sm:$0xff]
        %v4299 = vld [vmem:[#allocation2 + $0x398] sm:$0xff]
        %v4300 = vld [vmem:[#allocation2 + $0x3a0] sm:$0xff]
        %v4301 = vld [vmem:[#allocation2 + $0x3a8] sm:$0xff]
        %v4302 = vld [vmem:[#allocation2 + $0x3b0] sm:$0xff]
        %v4303 = vld [vmem:[#allocation2 + $0x3b8] sm:$0xff]
        %v4304 = vld [vmem:[#allocation2 + $0x3c0] sm:$0xff]
        %v4305 = vld [vmem:[#allocation2 + $0x3c8] sm:$0xff]
        %v4306 = vld [vmem:[#allocation2 + $0x3d0] sm:$0xff]
        %v4307 = vld [vmem:[#allocation2 + $0x3d8] sm:$0xff]
        %v4308 = vld [vmem:[#allocation2 + $0x3e0] sm:$0xff]
        %v4309 = vld [vmem:[#allocation2 + $0x3e8] sm:$0xff]
        %v4310 = vld [vmem:[#allocation2 + $0x3f0] sm:$0xff]
        %v4311 = vld [vmem:[#allocation2 + $0x3f8] sm:$0xff]
        %4312 = vmax.xlane.f32.xlu0 %v4056
        %v4313 = vpop.xlane.xlu0 %4312
        %4314 = vmax.xlane.f32.xlu0 %v4057
        %v4315 = vpop.xlane.xlu0 %4314
        %4316 = vmax.xlane.f32.xlu0 %v4058
        %v4317 = vpop.xlane.xlu0 %4316
        %4318 = vmax.xlane.f32.xlu0 %v4059
        %v4319 = vpop.xlane.xlu0 %4318
        %4320 = vmax.xlane.f32.xlu0 %v4060
        %v4321 = vpop.xlane.xlu0 %4320
        %4322 = vmax.xlane.f32.xlu0 %v4061
        %v4323 = vpop.xlane.xlu0 %4322
        %4324 = vmax.xlane.f32.xlu0 %v4062
        %v4325 = vpop.xlane.xlu0 %4324
        %4326 = vmax.xlane.f32.xlu0 %v4063
        %v4327 = vpop.xlane.xlu0 %4326
        %4328 = vmax.xlane.f32.xlu0 %v4064
        %v4329 = vpop.xlane.xlu0 %4328
        %4330 = vmax.xlane.f32.xlu0 %v4065
        %v4331 = vpop.xlane.xlu0 %4330
        %4332 = vmax.xlane.f32.xlu0 %v4066
        %v4333 = vpop.xlane.xlu0 %4332
        %4334 = vmax.xlane.f32.xlu0 %v4067
        %v4335 = vpop.xlane.xlu0 %4334
        %4336 = vmax.xlane.f32.xlu0 %v4068
        %v4337 = vpop.xlane.xlu0 %4336
        %4338 = vmax.xlane.f32.xlu0 %v4069
        %v4339 = vpop.xlane.xlu0 %4338
        %4340 = vmax.xlane.f32.xlu0 %v4070
        %v4341 = vpop.xlane.xlu0 %4340
        %4342 = vmax.xlane.f32.xlu0 %v4071
        %v4343 = vpop.xlane.xlu0 %4342
        %4344 = vmax.xlane.f32.xlu0 %v4072
        %v4345 = vpop.xlane.xlu0 %4344
        %4346 = vmax.xlane.f32.xlu0 %v4073
        %v4347 = vpop.xlane.xlu0 %4346
        %4348 = vmax.xlane.f32.xlu0 %v4074
        %v4349 = vpop.xlane.xlu0 %4348
        %4350 = vmax.xlane.f32.xlu0 %v4075
        %v4351 = vpop.xlane.xlu0 %4350
        %4352 = vmax.xlane.f32.xlu0 %v4076
        %v4353 = vpop.xlane.xlu0 %4352
        %4354 = vmax.xlane.f32.xlu0 %v4077
        %v4355 = vpop.xlane.xlu0 %4354
        %4356 = vmax.xlane.f32.xlu0 %v4078
        %v4357 = vpop.xlane.xlu0 %4356
        %4358 = vmax.xlane.f32.xlu0 %v4079
        %v4359 = vpop.xlane.xlu0 %4358
        %4360 = vmax.xlane.f32.xlu0 %v4080
        %v4361 = vpop.xlane.xlu0 %4360
        %4362 = vmax.xlane.f32.xlu0 %v4081
        %v4363 = vpop.xlane.xlu0 %4362
        %4364 = vmax.xlane.f32.xlu0 %v4082
        %v4365 = vpop.xlane.xlu0 %4364
        %4366 = vmax.xlane.f32.xlu0 %v4083
        %v4367 = vpop.xlane.xlu0 %4366
        %4368 = vmax.xlane.f32.xlu0 %v4084
        %v4369 = vpop.xlane.xlu0 %4368
        %4370 = vmax.xlane.f32.xlu0 %v4085
        %v4371 = vpop.xlane.xlu0 %4370
        %4372 = vmax.xlane.f32.xlu0 %v4086
        %v4373 = vpop.xlane.xlu0 %4372
        %4374 = vmax.xlane.f32.xlu0 %v4087
        %v4375 = vpop.xlane.xlu0 %4374
        %4376 = vmax.xlane.f32.xlu0 %v4088
        %v4377 = vpop.xlane.xlu0 %4376
        %4378 = vmax.xlane.f32.xlu0 %v4089
        %v4379 = vpop.xlane.xlu0 %4378
        %4380 = vmax.xlane.f32.xlu0 %v4090
        %v4381 = vpop.xlane.xlu0 %4380
        %4382 = vmax.xlane.f32.xlu0 %v4091
        %v4383 = vpop.xlane.xlu0 %4382
        %4384 = vmax.xlane.f32.xlu0 %v4092
        %v4385 = vpop.xlane.xlu0 %4384
        %4386 = vmax.xlane.f32.xlu0 %v4093
        %v4387 = vpop.xlane.xlu0 %4386
        %4388 = vmax.xlane.f32.xlu0 %v4094
        %v4389 = vpop.xlane.xlu0 %4388
        %4390 = vmax.xlane.f32.xlu0 %v4095
        %v4391 = vpop.xlane.xlu0 %4390
        %4392 = vmax.xlane.f32.xlu0 %v4096
        %v4393 = vpop.xlane.xlu0 %4392
        %4394 = vmax.xlane.f32.xlu0 %v4097
        %v4395 = vpop.xlane.xlu0 %4394
        %4396 = vmax.xlane.f32.xlu0 %v4098
        %v4397 = vpop.xlane.xlu0 %4396
        %4398 = vmax.xlane.f32.xlu0 %v4099
        %v4399 = vpop.xlane.xlu0 %4398
        %4400 = vmax.xlane.f32.xlu0 %v4100
        %v4401 = vpop.xlane.xlu0 %4400
        %4402 = vmax.xlane.f32.xlu0 %v4101
        %v4403 = vpop.xlane.xlu0 %4402
        %4404 = vmax.xlane.f32.xlu0 %v4102
        %v4405 = vpop.xlane.xlu0 %4404
        %4406 = vmax.xlane.f32.xlu0 %v4103
        %v4407 = vpop.xlane.xlu0 %4406
        %4408 = vmax.xlane.f32.xlu0 %v4104
        %v4409 = vpop.xlane.xlu0 %4408
        %4410 = vmax.xlane.f32.xlu0 %v4105
        %v4411 = vpop.xlane.xlu0 %4410
        %4412 = vmax.xlane.f32.xlu0 %v4106
        %v4413 = vpop.xlane.xlu0 %4412
        %4414 = vmax.xlane.f32.xlu0 %v4107
        %v4415 = vpop.xlane.xlu0 %4414
        %4416 = vmax.xlane.f32.xlu0 %v4108
        %v4417 = vpop.xlane.xlu0 %4416
        %4418 = vmax.xlane.f32.xlu0 %v4109
        %v4419 = vpop.xlane.xlu0 %4418
        %4420 = vmax.xlane.f32.xlu0 %v4110
        %v4421 = vpop.xlane.xlu0 %4420
        %4422 = vmax.xlane.f32.xlu0 %v4111
        %v4423 = vpop.xlane.xlu0 %4422
        %4424 = vmax.xlane.f32.xlu0 %v4112
        %v4425 = vpop.xlane.xlu0 %4424
        %4426 = vmax.xlane.f32.xlu0 %v4113
        %v4427 = vpop.xlane.xlu0 %4426
        %4428 = vmax.xlane.f32.xlu0 %v4114
        %v4429 = vpop.xlane.xlu0 %4428
        %4430 = vmax.xlane.f32.xlu0 %v4115
        %v4431 = vpop.xlane.xlu0 %4430
        %4432 = vmax.xlane.f32.xlu0 %v4116
        %v4433 = vpop.xlane.xlu0 %4432
        %4434 = vmax.xlane.f32.xlu0 %v4117
        %v4435 = vpop.xlane.xlu0 %4434
        %4436 = vmax.xlane.f32.xlu0 %v4118
        %v4437 = vpop.xlane.xlu0 %4436
        %4438 = vmax.xlane.f32.xlu0 %v4119
        %v4439 = vpop.xlane.xlu0 %4438
        %4440 = vmax.xlane.f32.xlu0 %v4120
        %v4441 = vpop.xlane.xlu0 %4440
        %4442 = vmax.xlane.f32.xlu0 %v4121
        %v4443 = vpop.xlane.xlu0 %4442
        %4444 = vmax.xlane.f32.xlu0 %v4122
        %v4445 = vpop.xlane.xlu0 %4444
        %4446 = vmax.xlane.f32.xlu0 %v4123
        %v4447 = vpop.xlane.xlu0 %4446
        %4448 = vmax.xlane.f32.xlu0 %v4124
        %v4449 = vpop.xlane.xlu0 %4448
        %4450 = vmax.xlane.f32.xlu0 %v4125
        %v4451 = vpop.xlane.xlu0 %4450
        %4452 = vmax.xlane.f32.xlu0 %v4126
        %v4453 = vpop.xlane.xlu0 %4452
        %4454 = vmax.xlane.f32.xlu0 %v4127
        %v4455 = vpop.xlane.xlu0 %4454
        %4456 = vmax.xlane.f32.xlu0 %v4128
        %v4457 = vpop.xlane.xlu0 %4456
        %4458 = vmax.xlane.f32.xlu0 %v4129
        %v4459 = vpop.xlane.xlu0 %4458
        %4460 = vmax.xlane.f32.xlu0 %v4130
        %v4461 = vpop.xlane.xlu0 %4460
        %4462 = vmax.xlane.f32.xlu0 %v4131
        %v4463 = vpop.xlane.xlu0 %4462
        %4464 = vmax.xlane.f32.xlu0 %v4132
        %v4465 = vpop.xlane.xlu0 %4464
        %4466 = vmax.xlane.f32.xlu0 %v4133
        %v4467 = vpop.xlane.xlu0 %4466
        %4468 = vmax.xlane.f32.xlu0 %v4134
        %v4469 = vpop.xlane.xlu0 %4468
        %4470 = vmax.xlane.f32.xlu0 %v4135
        %v4471 = vpop.xlane.xlu0 %4470
        %4472 = vmax.xlane.f32.xlu0 %v4136
        %v4473 = vpop.xlane.xlu0 %4472
        %4474 = vmax.xlane.f32.xlu0 %v4137
        %v4475 = vpop.xlane.xlu0 %4474
        %4476 = vmax.xlane.f32.xlu0 %v4138
        %v4477 = vpop.xlane.xlu0 %4476
        %4478 = vmax.xlane.f32.xlu0 %v4139
        %v4479 = vpop.xlane.xlu0 %4478
        %4480 = vmax.xlane.f32.xlu0 %v4140
        %v4481 = vpop.xlane.xlu0 %4480
        %4482 = vmax.xlane.f32.xlu0 %v4141
        %v4483 = vpop.xlane.xlu0 %4482
        %4484 = vmax.xlane.f32.xlu0 %v4142
        %v4485 = vpop.xlane.xlu0 %4484
        %4486 = vmax.xlane.f32.xlu0 %v4143
        %v4487 = vpop.xlane.xlu0 %4486
        %4488 = vmax.xlane.f32.xlu0 %v4144
        %v4489 = vpop.xlane.xlu0 %4488
        %4490 = vmax.xlane.f32.xlu0 %v4145
        %v4491 = vpop.xlane.xlu0 %4490
        %4492 = vmax.xlane.f32.xlu0 %v4146
        %v4493 = vpop.xlane.xlu0 %4492
        %4494 = vmax.xlane.f32.xlu0 %v4147
        %v4495 = vpop.xlane.xlu0 %4494
        %4496 = vmax.xlane.f32.xlu0 %v4148
        %v4497 = vpop.xlane.xlu0 %4496
        %4498 = vmax.xlane.f32.xlu0 %v4149
        %v4499 = vpop.xlane.xlu0 %4498
        %4500 = vmax.xlane.f32.xlu0 %v4150
        %v4501 = vpop.xlane.xlu0 %4500
        %4502 = vmax.xlane.f32.xlu0 %v4151
        %v4503 = vpop.xlane.xlu0 %4502
        %4504 = vmax.xlane.f32.xlu0 %v4152
        %v4505 = vpop.xlane.xlu0 %4504
        %4506 = vmax.xlane.f32.xlu0 %v4153
        %v4507 = vpop.xlane.xlu0 %4506
        %4508 = vmax.xlane.f32.xlu0 %v4154
        %v4509 = vpop.xlane.xlu0 %4508
        %4510 = vmax.xlane.f32.xlu0 %v4155
        %v4511 = vpop.xlane.xlu0 %4510
        %4512 = vmax.xlane.f32.xlu0 %v4156
        %v4513 = vpop.xlane.xlu0 %4512
        %4514 = vmax.xlane.f32.xlu0 %v4157
        %v4515 = vpop.xlane.xlu0 %4514
        %4516 = vmax.xlane.f32.xlu0 %v4158
        %v4517 = vpop.xlane.xlu0 %4516
        %4518 = vmax.xlane.f32.xlu0 %v4159
        %v4519 = vpop.xlane.xlu0 %4518
        %4520 = vmax.xlane.f32.xlu0 %v4160
        %v4521 = vpop.xlane.xlu0 %4520
        %4522 = vmax.xlane.f32.xlu0 %v4161
        %v4523 = vpop.xlane.xlu0 %4522
        %4524 = vmax.xlane.f32.xlu0 %v4162
        %v4525 = vpop.xlane.xlu0 %4524
        %4526 = vmax.xlane.f32.xlu0 %v4163
        %v4527 = vpop.xlane.xlu0 %4526
        %4528 = vmax.xlane.f32.xlu0 %v4164
        %v4529 = vpop.xlane.xlu0 %4528
        %4530 = vmax.xlane.f32.xlu0 %v4165
        %v4531 = vpop.xlane.xlu0 %4530
        %4532 = vmax.xlane.f32.xlu0 %v4166
        %v4533 = vpop.xlane.xlu0 %4532
        %4534 = vmax.xlane.f32.xlu0 %v4167
        %v4535 = vpop.xlane.xlu0 %4534
        %4536 = vmax.xlane.f32.xlu0 %v4168
        %v4537 = vpop.xlane.xlu0 %4536
        %4538 = vmax.xlane.f32.xlu0 %v4169
        %v4539 = vpop.xlane.xlu0 %4538
        %4540 = vmax.xlane.f32.xlu0 %v4170
        %v4541 = vpop.xlane.xlu0 %4540
        %4542 = vmax.xlane.f32.xlu0 %v4171
        %v4543 = vpop.xlane.xlu0 %4542
        %4544 = vmax.xlane.f32.xlu0 %v4172
        %v4545 = vpop.xlane.xlu0 %4544
        %4546 = vmax.xlane.f32.xlu0 %v4173
        %v4547 = vpop.xlane.xlu0 %4546
        %4548 = vmax.xlane.f32.xlu0 %v4174
        %v4549 = vpop.xlane.xlu0 %4548
        %4550 = vmax.xlane.f32.xlu0 %v4175
        %v4551 = vpop.xlane.xlu0 %4550
        %4552 = vmax.xlane.f32.xlu0 %v4176
        %v4553 = vpop.xlane.xlu0 %4552
        %4554 = vmax.xlane.f32.xlu0 %v4177
        %v4555 = vpop.xlane.xlu0 %4554
        %4556 = vmax.xlane.f32.xlu0 %v4178
        %v4557 = vpop.xlane.xlu0 %4556
        %4558 = vmax.xlane.f32.xlu0 %v4179
        %v4559 = vpop.xlane.xlu0 %4558
        %4560 = vmax.xlane.f32.xlu0 %v4180
        %v4561 = vpop.xlane.xlu0 %4560
        %4562 = vmax.xlane.f32.xlu0 %v4181
        %v4563 = vpop.xlane.xlu0 %4562
        %4564 = vmax.xlane.f32.xlu0 %v4182
        %v4565 = vpop.xlane.xlu0 %4564
        %4566 = vmax.xlane.f32.xlu0 %v4183
        %v4567 = vpop.xlane.xlu0 %4566
        %v4568 = vmax.f32 %v4184, %v4313
        %v4569 = vmax.f32 %v4185, %v4315
        %v4570 = vmax.f32 %v4186, %v4317
        %v4571 = vmax.f32 %v4187, %v4319
        %v4572 = vmax.f32 %v4188, %v4321
        %v4573 = vmax.f32 %v4189, %v4323
        %v4574 = vmax.f32 %v4190, %v4325
        %v4575 = vmax.f32 %v4191, %v4327
        %v4576 = vmax.f32 %v4192, %v4329
        %v4577 = vmax.f32 %v4193, %v4331
        %v4578 = vmax.f32 %v4194, %v4333
        %v4579 = vmax.f32 %v4195, %v4335
        %v4580 = vmax.f32 %v4196, %v4337
        %v4581 = vmax.f32 %v4197, %v4339
        %v4582 = vmax.f32 %v4198, %v4341
        %v4583 = vmax.f32 %v4199, %v4343
        %v4584 = vmax.f32 %v4200, %v4345
        %v4585 = vmax.f32 %v4201, %v4347
        %v4586 = vmax.f32 %v4202, %v4349
        %v4587 = vmax.f32 %v4203, %v4351
        %v4588 = vmax.f32 %v4204, %v4353
        %v4589 = vmax.f32 %v4205, %v4355
        %v4590 = vmax.f32 %v4206, %v4357
        %v4591 = vmax.f32 %v4207, %v4359
        %v4592 = vmax.f32 %v4208, %v4361
        %v4593 = vmax.f32 %v4209, %v4363
        %v4594 = vmax.f32 %v4210, %v4365
        %v4595 = vmax.f32 %v4211, %v4367
        %v4596 = vmax.f32 %v4212, %v4369
        %v4597 = vmax.f32 %v4213, %v4371
        %v4598 = vmax.f32 %v4214, %v4373
        %v4599 = vmax.f32 %v4215, %v4375
        %v4600 = vmax.f32 %v4216, %v4377
        %v4601 = vmax.f32 %v4217, %v4379
        %v4602 = vmax.f32 %v4218, %v4381
        %v4603 = vmax.f32 %v4219, %v4383
        %v4604 = vmax.f32 %v4220, %v4385
        %v4605 = vmax.f32 %v4221, %v4387
        %v4606 = vmax.f32 %v4222, %v4389
        %v4607 = vmax.f32 %v4223, %v4391
        %v4608 = vmax.f32 %v4224, %v4393
        %v4609 = vmax.f32 %v4225, %v4395
        %v4610 = vmax.f32 %v4226, %v4397
        %v4611 = vmax.f32 %v4227, %v4399
        %v4612 = vmax.f32 %v4228, %v4401
        %v4613 = vmax.f32 %v4229, %v4403
        %v4614 = vmax.f32 %v4230, %v4405
        %v4615 = vmax.f32 %v4231, %v4407
        %v4616 = vmax.f32 %v4232, %v4409
        %v4617 = vmax.f32 %v4233, %v4411
        %v4618 = vmax.f32 %v4234, %v4413
        %v4619 = vmax.f32 %v4235, %v4415
        %v4620 = vmax.f32 %v4236, %v4417
        %v4621 = vmax.f32 %v4237, %v4419
        %v4622 = vmax.f32 %v4238, %v4421
        %v4623 = vmax.f32 %v4239, %v4423
        %v4624 = vmax.f32 %v4240, %v4425
        %v4625 = vmax.f32 %v4241, %v4427
        %v4626 = vmax.f32 %v4242, %v4429
        %v4627 = vmax.f32 %v4243, %v4431
        %v4628 = vmax.f32 %v4244, %v4433
        %v4629 = vmax.f32 %v4245, %v4435
        %v4630 = vmax.f32 %v4246, %v4437
        %v4631 = vmax.f32 %v4247, %v4439
        %v4632 = vmax.f32 %v4248, %v4441
        %v4633 = vmax.f32 %v4249, %v4443
        %v4634 = vmax.f32 %v4250, %v4445
        %v4635 = vmax.f32 %v4251, %v4447
        %v4636 = vmax.f32 %v4252, %v4449
        %v4637 = vmax.f32 %v4253, %v4451
        %v4638 = vmax.f32 %v4254, %v4453
        %v4639 = vmax.f32 %v4255, %v4455
        %v4640 = vmax.f32 %v4256, %v4457
        %v4641 = vmax.f32 %v4257, %v4459
        %v4642 = vmax.f32 %v4258, %v4461
        %v4643 = vmax.f32 %v4259, %v4463
        %v4644 = vmax.f32 %v4260, %v4465
        %v4645 = vmax.f32 %v4261, %v4467
        %v4646 = vmax.f32 %v4262, %v4469
        %v4647 = vmax.f32 %v4263, %v4471
        %v4648 = vmax.f32 %v4264, %v4473
        %v4649 = vmax.f32 %v4265, %v4475
        %v4650 = vmax.f32 %v4266, %v4477
        %v4651 = vmax.f32 %v4267, %v4479
        %v4652 = vmax.f32 %v4268, %v4481
        %v4653 = vmax.f32 %v4269, %v4483
        %v4654 = vmax.f32 %v4270, %v4485
        %v4655 = vmax.f32 %v4271, %v4487
        %v4656 = vmax.f32 %v4272, %v4489
        %v4657 = vmax.f32 %v4273, %v4491
        %v4658 = vmax.f32 %v4274, %v4493
        %v4659 = vmax.f32 %v4275, %v4495
        %v4660 = vmax.f32 %v4276, %v4497
        %v4661 = vmax.f32 %v4277, %v4499
        %v4662 = vmax.f32 %v4278, %v4501
        %v4663 = vmax.f32 %v4279, %v4503
        %v4664 = vmax.f32 %v4280, %v4505
        %v4665 = vmax.f32 %v4281, %v4507
        %v4666 = vmax.f32 %v4282, %v4509
        %v4667 = vmax.f32 %v4283, %v4511
        %v4668 = vmax.f32 %v4284, %v4513
        %v4669 = vmax.f32 %v4285, %v4515
        %v4670 = vmax.f32 %v4286, %v4517
        %v4671 = vmax.f32 %v4287, %v4519
        %v4672 = vmax.f32 %v4288, %v4521
        %v4673 = vmax.f32 %v4289, %v4523
        %v4674 = vmax.f32 %v4290, %v4525
        %v4675 = vmax.f32 %v4291, %v4527
        %v4676 = vmax.f32 %v4292, %v4529
        %v4677 = vmax.f32 %v4293, %v4531
        %v4678 = vmax.f32 %v4294, %v4533
        %v4679 = vmax.f32 %v4295, %v4535
        %v4680 = vmax.f32 %v4296, %v4537
        %v4681 = vmax.f32 %v4297, %v4539
        %v4682 = vmax.f32 %v4298, %v4541
        %v4683 = vmax.f32 %v4299, %v4543
        %v4684 = vmax.f32 %v4300, %v4545
        %v4685 = vmax.f32 %v4301, %v4547
        %v4686 = vmax.f32 %v4302, %v4549
        %v4687 = vmax.f32 %v4303, %v4551
        %v4688 = vmax.f32 %v4304, %v4553
        %v4689 = vmax.f32 %v4305, %v4555
        %v4690 = vmax.f32 %v4306, %v4557
        %v4691 = vmax.f32 %v4307, %v4559
        %v4692 = vmax.f32 %v4308, %v4561
        %v4693 = vmax.f32 %v4309, %v4563
        %v4694 = vmax.f32 %v4310, %v4565
        %v4695 = vmax.f32 %v4311, %v4567
        %vm4696 = vcmask 7168
        %4697 = vst.msk [vmem:[#allocation2] sm:$0xff] %vm4696, %v4568
        %4698 = vst.msk [vmem:[#allocation2 + $0x8] sm:$0xff] %vm4696, %v4569
        %4699 = vst.msk [vmem:[#allocation2 + $0x10] sm:$0xff] %vm4696, %v4570
        %4700 = vst.msk [vmem:[#allocation2 + $0x18] sm:$0xff] %vm4696, %v4571
        %4701 = vst.msk [vmem:[#allocation2 + $0x20] sm:$0xff] %vm4696, %v4572
        %4702 = vst.msk [vmem:[#allocation2 + $0x28] sm:$0xff] %vm4696, %v4573
        %4703 = vst.msk [vmem:[#allocation2 + $0x30] sm:$0xff] %vm4696, %v4574
        %4704 = vst.msk [vmem:[#allocation2 + $0x38] sm:$0xff] %vm4696, %v4575
        %4705 = vst.msk [vmem:[#allocation2 + $0x40] sm:$0xff] %vm4696, %v4576
        %4706 = vst.msk [vmem:[#allocation2 + $0x48] sm:$0xff] %vm4696, %v4577
        %4707 = vst.msk [vmem:[#allocation2 + $0x50] sm:$0xff] %vm4696, %v4578
        %4708 = vst.msk [vmem:[#allocation2 + $0x58] sm:$0xff] %vm4696, %v4579
        %4709 = vst.msk [vmem:[#allocation2 + $0x60] sm:$0xff] %vm4696, %v4580
        %4710 = vst.msk [vmem:[#allocation2 + $0x68] sm:$0xff] %vm4696, %v4581
        %4711 = vst.msk [vmem:[#allocation2 + $0x70] sm:$0xff] %vm4696, %v4582
        %4712 = vst.msk [vmem:[#allocation2 + $0x78] sm:$0xff] %vm4696, %v4583
        %4713 = vst.msk [vmem:[#allocation2 + $0x80] sm:$0xff] %vm4696, %v4584
        %4714 = vst.msk [vmem:[#allocation2 + $0x88] sm:$0xff] %vm4696, %v4585
        %4715 = vst.msk [vmem:[#allocation2 + $0x90] sm:$0xff] %vm4696, %v4586
        %4716 = vst.msk [vmem:[#allocation2 + $0x98] sm:$0xff] %vm4696, %v4587
        %4717 = vst.msk [vmem:[#allocation2 + $0xa0] sm:$0xff] %vm4696, %v4588
        %4718 = vst.msk [vmem:[#allocation2 + $0xa8] sm:$0xff] %vm4696, %v4589
        %4719 = vst.msk [vmem:[#allocation2 + $0xb0] sm:$0xff] %vm4696, %v4590
        %4720 = vst.msk [vmem:[#allocation2 + $0xb8] sm:$0xff] %vm4696, %v4591
        %4721 = vst.msk [vmem:[#allocation2 + $0xc0] sm:$0xff] %vm4696, %v4592
        %4722 = vst.msk [vmem:[#allocation2 + $0xc8] sm:$0xff] %vm4696, %v4593
        %4723 = vst.msk [vmem:[#allocation2 + $0xd0] sm:$0xff] %vm4696, %v4594
        %4724 = vst.msk [vmem:[#allocation2 + $0xd8] sm:$0xff] %vm4696, %v4595
        %4725 = vst.msk [vmem:[#allocation2 + $0xe0] sm:$0xff] %vm4696, %v4596
        %4726 = vst.msk [vmem:[#allocation2 + $0xe8] sm:$0xff] %vm4696, %v4597
        %4727 = vst.msk [vmem:[#allocation2 + $0xf0] sm:$0xff] %vm4696, %v4598
        %4728 = vst.msk [vmem:[#allocation2 + $0xf8] sm:$0xff] %vm4696, %v4599
        %4729 = vst.msk [vmem:[#allocation2 + $0x100] sm:$0xff] %vm4696, %v4600
        %4730 = vst.msk [vmem:[#allocation2 + $0x108] sm:$0xff] %vm4696, %v4601
        %4731 = vst.msk [vmem:[#allocation2 + $0x110] sm:$0xff] %vm4696, %v4602
        %4732 = vst.msk [vmem:[#allocation2 + $0x118] sm:$0xff] %vm4696, %v4603
        %4733 = vst.msk [vmem:[#allocation2 + $0x120] sm:$0xff] %vm4696, %v4604
        %4734 = vst.msk [vmem:[#allocation2 + $0x128] sm:$0xff] %vm4696, %v4605
        %4735 = vst.msk [vmem:[#allocation2 + $0x130] sm:$0xff] %vm4696, %v4606
        %4736 = vst.msk [vmem:[#allocation2 + $0x138] sm:$0xff] %vm4696, %v4607
        %4737 = vst.msk [vmem:[#allocation2 + $0x140] sm:$0xff] %vm4696, %v4608
        %4738 = vst.msk [vmem:[#allocation2 + $0x148] sm:$0xff] %vm4696, %v4609
        %4739 = vst.msk [vmem:[#allocation2 + $0x150] sm:$0xff] %vm4696, %v4610
        %4740 = vst.msk [vmem:[#allocation2 + $0x158] sm:$0xff] %vm4696, %v4611
        %4741 = vst.msk [vmem:[#allocation2 + $0x160] sm:$0xff] %vm4696, %v4612
        %4742 = vst.msk [vmem:[#allocation2 + $0x168] sm:$0xff] %vm4696, %v4613
        %4743 = vst.msk [vmem:[#allocation2 + $0x170] sm:$0xff] %vm4696, %v4614
        %4744 = vst.msk [vmem:[#allocation2 + $0x178] sm:$0xff] %vm4696, %v4615
        %4745 = vst.msk [vmem:[#allocation2 + $0x180] sm:$0xff] %vm4696, %v4616
        %4746 = vst.msk [vmem:[#allocation2 + $0x188] sm:$0xff] %vm4696, %v4617
        %4747 = vst.msk [vmem:[#allocation2 + $0x190] sm:$0xff] %vm4696, %v4618
        %4748 = vst.msk [vmem:[#allocation2 + $0x198] sm:$0xff] %vm4696, %v4619
        %4749 = vst.msk [vmem:[#allocation2 + $0x1a0] sm:$0xff] %vm4696, %v4620
        %4750 = vst.msk [vmem:[#allocation2 + $0x1a8] sm:$0xff] %vm4696, %v4621
        %4751 = vst.msk [vmem:[#allocation2 + $0x1b0] sm:$0xff] %vm4696, %v4622
        %4752 = vst.msk [vmem:[#allocation2 + $0x1b8] sm:$0xff] %vm4696, %v4623
        %4753 = vst.msk [vmem:[#allocation2 + $0x1c0] sm:$0xff] %vm4696, %v4624
        %4754 = vst.msk [vmem:[#allocation2 + $0x1c8] sm:$0xff] %vm4696, %v4625
        %4755 = vst.msk [vmem:[#allocation2 + $0x1d0] sm:$0xff] %vm4696, %v4626
        %4756 = vst.msk [vmem:[#allocation2 + $0x1d8] sm:$0xff] %vm4696, %v4627
        %4757 = vst.msk [vmem:[#allocation2 + $0x1e0] sm:$0xff] %vm4696, %v4628
        %4758 = vst.msk [vmem:[#allocation2 + $0x1e8] sm:$0xff] %vm4696, %v4629
        %4759 = vst.msk [vmem:[#allocation2 + $0x1f0] sm:$0xff] %vm4696, %v4630
        %4760 = vst.msk [vmem:[#allocation2 + $0x1f8] sm:$0xff] %vm4696, %v4631
        %4761 = vst.msk [vmem:[#allocation2 + $0x200] sm:$0xff] %vm4696, %v4632
        %4762 = vst.msk [vmem:[#allocation2 + $0x208] sm:$0xff] %vm4696, %v4633
        %4763 = vst.msk [vmem:[#allocation2 + $0x210] sm:$0xff] %vm4696, %v4634
        %4764 = vst.msk [vmem:[#allocation2 + $0x218] sm:$0xff] %vm4696, %v4635
        %4765 = vst.msk [vmem:[#allocation2 + $0x220] sm:$0xff] %vm4696, %v4636
        %4766 = vst.msk [vmem:[#allocation2 + $0x228] sm:$0xff] %vm4696, %v4637
        %4767 = vst.msk [vmem:[#allocation2 + $0x230] sm:$0xff] %vm4696, %v4638
        %4768 = vst.msk [vmem:[#allocation2 + $0x238] sm:$0xff] %vm4696, %v4639
        %4769 = vst.msk [vmem:[#allocation2 + $0x240] sm:$0xff] %vm4696, %v4640
        %4770 = vst.msk [vmem:[#allocation2 + $0x248] sm:$0xff] %vm4696, %v4641
        %4771 = vst.msk [vmem:[#allocation2 + $0x250] sm:$0xff] %vm4696, %v4642
        %4772 = vst.msk [vmem:[#allocation2 + $0x258] sm:$0xff] %vm4696, %v4643
        %4773 = vst.msk [vmem:[#allocation2 + $0x260] sm:$0xff] %vm4696, %v4644
        %4774 = vst.msk [vmem:[#allocation2 + $0x268] sm:$0xff] %vm4696, %v4645
        %4775 = vst.msk [vmem:[#allocation2 + $0x270] sm:$0xff] %vm4696, %v4646
        %4776 = vst.msk [vmem:[#allocation2 + $0x278] sm:$0xff] %vm4696, %v4647
        %4777 = vst.msk [vmem:[#allocation2 + $0x280] sm:$0xff] %vm4696, %v4648
        %4778 = vst.msk [vmem:[#allocation2 + $0x288] sm:$0xff] %vm4696, %v4649
        %4779 = vst.msk [vmem:[#allocation2 + $0x290] sm:$0xff] %vm4696, %v4650
        %4780 = vst.msk [vmem:[#allocation2 + $0x298] sm:$0xff] %vm4696, %v4651
        %4781 = vst.msk [vmem:[#allocation2 + $0x2a0] sm:$0xff] %vm4696, %v4652
        %4782 = vst.msk [vmem:[#allocation2 + $0x2a8] sm:$0xff] %vm4696, %v4653
        %4783 = vst.msk [vmem:[#allocation2 + $0x2b0] sm:$0xff] %vm4696, %v4654
        %4784 = vst.msk [vmem:[#allocation2 + $0x2b8] sm:$0xff] %vm4696, %v4655
        %4785 = vst.msk [vmem:[#allocation2 + $0x2c0] sm:$0xff] %vm4696, %v4656
        %4786 = vst.msk [vmem:[#allocation2 + $0x2c8] sm:$0xff] %vm4696, %v4657
        %4787 = vst.msk [vmem:[#allocation2 + $0x2d0] sm:$0xff] %vm4696, %v4658
        %4788 = vst.msk [vmem:[#allocation2 + $0x2d8] sm:$0xff] %vm4696, %v4659
        %4789 = vst.msk [vmem:[#allocation2 + $0x2e0] sm:$0xff] %vm4696, %v4660
        %4790 = vst.msk [vmem:[#allocation2 + $0x2e8] sm:$0xff] %vm4696, %v4661
        %4791 = vst.msk [vmem:[#allocation2 + $0x2f0] sm:$0xff] %vm4696, %v4662
        %4792 = vst.msk [vmem:[#allocation2 + $0x2f8] sm:$0xff] %vm4696, %v4663
        %4793 = vst.msk [vmem:[#allocation2 + $0x300] sm:$0xff] %vm4696, %v4664
        %4794 = vst.msk [vmem:[#allocation2 + $0x308] sm:$0xff] %vm4696, %v4665
        %4795 = vst.msk [vmem:[#allocation2 + $0x310] sm:$0xff] %vm4696, %v4666
        %4796 = vst.msk [vmem:[#allocation2 + $0x318] sm:$0xff] %vm4696, %v4667
        %4797 = vst.msk [vmem:[#allocation2 + $0x320] sm:$0xff] %vm4696, %v4668
        %4798 = vst.msk [vmem:[#allocation2 + $0x328] sm:$0xff] %vm4696, %v4669
        %4799 = vst.msk [vmem:[#allocation2 + $0x330] sm:$0xff] %vm4696, %v4670
        %4800 = vst.msk [vmem:[#allocation2 + $0x338] sm:$0xff] %vm4696, %v4671
        %4801 = vst.msk [vmem:[#allocation2 + $0x340] sm:$0xff] %vm4696, %v4672
        %4802 = vst.msk [vmem:[#allocation2 + $0x348] sm:$0xff] %vm4696, %v4673
        %4803 = vst.msk [vmem:[#allocation2 + $0x350] sm:$0xff] %vm4696, %v4674
        %4804 = vst.msk [vmem:[#allocation2 + $0x358] sm:$0xff] %vm4696, %v4675
        %4805 = vst.msk [vmem:[#allocation2 + $0x360] sm:$0xff] %vm4696, %v4676
        %4806 = vst.msk [vmem:[#allocation2 + $0x368] sm:$0xff] %vm4696, %v4677
        %4807 = vst.msk [vmem:[#allocation2 + $0x370] sm:$0xff] %vm4696, %v4678
        %4808 = vst.msk [vmem:[#allocation2 + $0x378] sm:$0xff] %vm4696, %v4679
        %4809 = vst.msk [vmem:[#allocation2 + $0x380] sm:$0xff] %vm4696, %v4680
        %4810 = vst.msk [vmem:[#allocation2 + $0x388] sm:$0xff] %vm4696, %v4681
        %4811 = vst.msk [vmem:[#allocation2 + $0x390] sm:$0xff] %vm4696, %v4682
        %4812 = vst.msk [vmem:[#allocation2 + $0x398] sm:$0xff] %vm4696, %v4683
        %4813 = vst.msk [vmem:[#allocation2 + $0x3a0] sm:$0xff] %vm4696, %v4684
        %4814 = vst.msk [vmem:[#allocation2 + $0x3a8] sm:$0xff] %vm4696, %v4685
        %4815 = vst.msk [vmem:[#allocation2 + $0x3b0] sm:$0xff] %vm4696, %v4686
        %4816 = vst.msk [vmem:[#allocation2 + $0x3b8] sm:$0xff] %vm4696, %v4687
        %4817 = vst.msk [vmem:[#allocation2 + $0x3c0] sm:$0xff] %vm4696, %v4688
        %4818 = vst.msk [vmem:[#allocation2 + $0x3c8] sm:$0xff] %vm4696, %v4689
        %4819 = vst.msk [vmem:[#allocation2 + $0x3d0] sm:$0xff] %vm4696, %v4690
        %4820 = vst.msk [vmem:[#allocation2 + $0x3d8] sm:$0xff] %vm4696, %v4691
        %4821 = vst.msk [vmem:[#allocation2 + $0x3e0] sm:$0xff] %vm4696, %v4692
        %4822 = vst.msk [vmem:[#allocation2 + $0x3e8] sm:$0xff] %vm4696, %v4693
        %4823 = vst.msk [vmem:[#allocation2 + $0x3f0] sm:$0xff] %vm4696, %v4694
        %4824 = vst.msk [vmem:[#allocation2 + $0x3f8] sm:$0xff] %vm4696, %v4695
        %p4825 = scmp.eq.s32.totalorder %s26, 1
        // Predicated region
        $region103: #{tpu_custom_call.1} parent=93 // pred_check
          %p4826 = pneg %p4825
        $region104: #{tpu_custom_call.1} parent=93 // pred_check_branch
          %4828 = sbr.rel (%p4826) target = $region106
        $region105: #{tpu_custom_call.1} parent=93 // pred_region
          %v4829 = vld [vmem:[#allocation2] sm:$0xff]
          %v4830 = vld [vmem:[#allocation2 + $0x8] sm:$0xff]
          %v4831 = vld [vmem:[#allocation2 + $0x10] sm:$0xff]
          %v4832 = vld [vmem:[#allocation2 + $0x18] sm:$0xff]
          %v4833 = vld [vmem:[#allocation2 + $0x20] sm:$0xff]
          %v4834 = vld [vmem:[#allocation2 + $0x28] sm:$0xff]
          %v4835 = vld [vmem:[#allocation2 + $0x30] sm:$0xff]
          %v4836 = vld [vmem:[#allocation2 + $0x38] sm:$0xff]
          %v4837 = vld [vmem:[#allocation2 + $0x40] sm:$0xff]
          %v4838 = vld [vmem:[#allocation2 + $0x48] sm:$0xff]
          %v4839 = vld [vmem:[#allocation2 + $0x50] sm:$0xff]
          %v4840 = vld [vmem:[#allocation2 + $0x58] sm:$0xff]
          %v4841 = vld [vmem:[#allocation2 + $0x60] sm:$0xff]
          %v4842 = vld [vmem:[#allocation2 + $0x68] sm:$0xff]
          %v4843 = vld [vmem:[#allocation2 + $0x70] sm:$0xff]
          %v4844 = vld [vmem:[#allocation2 + $0x78] sm:$0xff]
          %v4845 = vld [vmem:[#allocation2 + $0x80] sm:$0xff]
          %v4846 = vld [vmem:[#allocation2 + $0x88] sm:$0xff]
          %v4847 = vld [vmem:[#allocation2 + $0x90] sm:$0xff]
          %v4848 = vld [vmem:[#allocation2 + $0x98] sm:$0xff]
          %v4849 = vld [vmem:[#allocation2 + $0xa0] sm:$0xff]
          %v4850 = vld [vmem:[#allocation2 + $0xa8] sm:$0xff]
          %v4851 = vld [vmem:[#allocation2 + $0xb0] sm:$0xff]
          %v4852 = vld [vmem:[#allocation2 + $0xb8] sm:$0xff]
          %v4853 = vld [vmem:[#allocation2 + $0xc0] sm:$0xff]
          %v4854 = vld [vmem:[#allocation2 + $0xc8] sm:$0xff]
          %v4855 = vld [vmem:[#allocation2 + $0xd0] sm:$0xff]
          %v4856 = vld [vmem:[#allocation2 + $0xd8] sm:$0xff]
          %v4857 = vld [vmem:[#allocation2 + $0xe0] sm:$0xff]
          %v4858 = vld [vmem:[#allocation2 + $0xe8] sm:$0xff]
          %v4859 = vld [vmem:[#allocation2 + $0xf0] sm:$0xff]
          %v4860 = vld [vmem:[#allocation2 + $0xf8] sm:$0xff]
          %v4861 = vld [vmem:[#allocation2 + $0x100] sm:$0xff]
          %v4862 = vld [vmem:[#allocation2 + $0x108] sm:$0xff]
          %v4863 = vld [vmem:[#allocation2 + $0x110] sm:$0xff]
          %v4864 = vld [vmem:[#allocation2 + $0x118] sm:$0xff]
          %v4865 = vld [vmem:[#allocation2 + $0x120] sm:$0xff]
          %v4866 = vld [vmem:[#allocation2 + $0x128] sm:$0xff]
          %v4867 = vld [vmem:[#allocation2 + $0x130] sm:$0xff]
          %v4868 = vld [vmem:[#allocation2 + $0x138] sm:$0xff]
          %v4869 = vld [vmem:[#allocation2 + $0x140] sm:$0xff]
          %v4870 = vld [vmem:[#allocation2 + $0x148] sm:$0xff]
          %v4871 = vld [vmem:[#allocation2 + $0x150] sm:$0xff]
          %v4872 = vld [vmem:[#allocation2 + $0x158] sm:$0xff]
          %v4873 = vld [vmem:[#allocation2 + $0x160] sm:$0xff]
          %v4874 = vld [vmem:[#allocation2 + $0x168] sm:$0xff]
          %v4875 = vld [vmem:[#allocation2 + $0x170] sm:$0xff]
          %v4876 = vld [vmem:[#allocation2 + $0x178] sm:$0xff]
          %v4877 = vld [vmem:[#allocation2 + $0x180] sm:$0xff]
          %v4878 = vld [vmem:[#allocation2 + $0x188] sm:$0xff]
          %v4879 = vld [vmem:[#allocation2 + $0x190] sm:$0xff]
          %v4880 = vld [vmem:[#allocation2 + $0x198] sm:$0xff]
          %v4881 = vld [vmem:[#allocation2 + $0x1a0] sm:$0xff]
          %v4882 = vld [vmem:[#allocation2 + $0x1a8] sm:$0xff]
          %v4883 = vld [vmem:[#allocation2 + $0x1b0] sm:$0xff]
          %v4884 = vld [vmem:[#allocation2 + $0x1b8] sm:$0xff]
          %v4885 = vld [vmem:[#allocation2 + $0x1c0] sm:$0xff]
          %v4886 = vld [vmem:[#allocation2 + $0x1c8] sm:$0xff]
          %v4887 = vld [vmem:[#allocation2 + $0x1d0] sm:$0xff]
          %v4888 = vld [vmem:[#allocation2 + $0x1d8] sm:$0xff]
          %v4889 = vld [vmem:[#allocation2 + $0x1e0] sm:$0xff]
          %v4890 = vld [vmem:[#allocation2 + $0x1e8] sm:$0xff]
          %v4891 = vld [vmem:[#allocation2 + $0x1f0] sm:$0xff]
          %v4892 = vld [vmem:[#allocation2 + $0x1f8] sm:$0xff]
          %v4893 = vld [vmem:[#allocation2 + $0x200] sm:$0xff]
          %v4894 = vld [vmem:[#allocation2 + $0x208] sm:$0xff]
          %v4895 = vld [vmem:[#allocation2 + $0x210] sm:$0xff]
          %v4896 = vld [vmem:[#allocation2 + $0x218] sm:$0xff]
          %v4897 = vld [vmem:[#allocation2 + $0x220] sm:$0xff]
          %v4898 = vld [vmem:[#allocation2 + $0x228] sm:$0xff]
          %v4899 = vld [vmem:[#allocation2 + $0x230] sm:$0xff]
          %v4900 = vld [vmem:[#allocation2 + $0x238] sm:$0xff]
          %v4901 = vld [vmem:[#allocation2 + $0x240] sm:$0xff]
          %v4902 = vld [vmem:[#allocation2 + $0x248] sm:$0xff]
          %v4903 = vld [vmem:[#allocation2 + $0x250] sm:$0xff]
          %v4904 = vld [vmem:[#allocation2 + $0x258] sm:$0xff]
          %v4905 = vld [vmem:[#allocation2 + $0x260] sm:$0xff]
          %v4906 = vld [vmem:[#allocation2 + $0x268] sm:$0xff]
          %v4907 = vld [vmem:[#allocation2 + $0x270] sm:$0xff]
          %v4908 = vld [vmem:[#allocation2 + $0x278] sm:$0xff]
          %v4909 = vld [vmem:[#allocation2 + $0x280] sm:$0xff]
          %v4910 = vld [vmem:[#allocation2 + $0x288] sm:$0xff]
          %v4911 = vld [vmem:[#allocation2 + $0x290] sm:$0xff]
          %v4912 = vld [vmem:[#allocation2 + $0x298] sm:$0xff]
          %v4913 = vld [vmem:[#allocation2 + $0x2a0] sm:$0xff]
          %v4914 = vld [vmem:[#allocation2 + $0x2a8] sm:$0xff]
          %v4915 = vld [vmem:[#allocation2 + $0x2b0] sm:$0xff]
          %v4916 = vld [vmem:[#allocation2 + $0x2b8] sm:$0xff]
          %v4917 = vld [vmem:[#allocation2 + $0x2c0] sm:$0xff]
          %v4918 = vld [vmem:[#allocation2 + $0x2c8] sm:$0xff]
          %v4919 = vld [vmem:[#allocation2 + $0x2d0] sm:$0xff]
          %v4920 = vld [vmem:[#allocation2 + $0x2d8] sm:$0xff]
          %v4921 = vld [vmem:[#allocation2 + $0x2e0] sm:$0xff]
          %v4922 = vld [vmem:[#allocation2 + $0x2e8] sm:$0xff]
          %v4923 = vld [vmem:[#allocation2 + $0x2f0] sm:$0xff]
          %v4924 = vld [vmem:[#allocation2 + $0x2f8] sm:$0xff]
          %v4925 = vld [vmem:[#allocation2 + $0x300] sm:$0xff]
          %v4926 = vld [vmem:[#allocation2 + $0x308] sm:$0xff]
          %v4927 = vld [vmem:[#allocation2 + $0x310] sm:$0xff]
          %v4928 = vld [vmem:[#allocation2 + $0x318] sm:$0xff]
          %v4929 = vld [vmem:[#allocation2 + $0x320] sm:$0xff]
          %v4930 = vld [vmem:[#allocation2 + $0x328] sm:$0xff]
          %v4931 = vld [vmem:[#allocation2 + $0x330] sm:$0xff]
          %v4932 = vld [vmem:[#allocation2 + $0x338] sm:$0xff]
          %v4933 = vld [vmem:[#allocation2 + $0x340] sm:$0xff]
          %v4934 = vld [vmem:[#allocation2 + $0x348] sm:$0xff]
          %v4935 = vld [vmem:[#allocation2 + $0x350] sm:$0xff]
          %v4936 = vld [vmem:[#allocation2 + $0x358] sm:$0xff]
          %v4937 = vld [vmem:[#allocation2 + $0x360] sm:$0xff]
          %v4938 = vld [vmem:[#allocation2 + $0x368] sm:$0xff]
          %v4939 = vld [vmem:[#allocation2 + $0x370] sm:$0xff]
          %v4940 = vld [vmem:[#allocation2 + $0x378] sm:$0xff]
          %v4941 = vld [vmem:[#allocation2 + $0x380] sm:$0xff]
          %v4942 = vld [vmem:[#allocation2 + $0x388] sm:$0xff]
          %v4943 = vld [vmem:[#allocation2 + $0x390] sm:$0xff]
          %v4944 = vld [vmem:[#allocation2 + $0x398] sm:$0xff]
          %v4945 = vld [vmem:[#allocation2 + $0x3a0] sm:$0xff]
          %v4946 = vld [vmem:[#allocation2 + $0x3a8] sm:$0xff]
          %v4947 = vld [vmem:[#allocation2 + $0x3b0] sm:$0xff]
          %v4948 = vld [vmem:[#allocation2 + $0x3b8] sm:$0xff]
          %v4949 = vld [vmem:[#allocation2 + $0x3c0] sm:$0xff]
          %v4950 = vld [vmem:[#allocation2 + $0x3c8] sm:$0xff]
          %v4951 = vld [vmem:[#allocation2 + $0x3d0] sm:$0xff]
          %v4952 = vld [vmem:[#allocation2 + $0x3d8] sm:$0xff]
          %v4953 = vld [vmem:[#allocation2 + $0x3e0] sm:$0xff]
          %v4954 = vld [vmem:[#allocation2 + $0x3e8] sm:$0xff]
          %v4955 = vld [vmem:[#allocation2 + $0x3f0] sm:$0xff]
          %v4956 = vld [vmem:[#allocation2 + $0x3f8] sm:$0xff]
          %4957 = vst.msk [vmem:[%s413] sm:$0xff] %vm4696, %v4829
          %4958 = vst.msk [vmem:[%s413 + $0x8] sm:$0xff] %vm4696, %v4830
          %4959 = vst.msk [vmem:[%s413 + $0x10] sm:$0xff] %vm4696, %v4831
          %4960 = vst.msk [vmem:[%s413 + $0x18] sm:$0xff] %vm4696, %v4832
          %4961 = vst.msk [vmem:[%s413 + $0x20] sm:$0xff] %vm4696, %v4833
          %4962 = vst.msk [vmem:[%s413 + $0x28] sm:$0xff] %vm4696, %v4834
          %4963 = vst.msk [vmem:[%s413 + $0x30] sm:$0xff] %vm4696, %v4835
          %4964 = vst.msk [vmem:[%s413 + $0x38] sm:$0xff] %vm4696, %v4836
          %4965 = vst.msk [vmem:[%s413 + $0x40] sm:$0xff] %vm4696, %v4837
          %4966 = vst.msk [vmem:[%s413 + $0x48] sm:$0xff] %vm4696, %v4838
          %4967 = vst.msk [vmem:[%s413 + $0x50] sm:$0xff] %vm4696, %v4839
          %4968 = vst.msk [vmem:[%s413 + $0x58] sm:$0xff] %vm4696, %v4840
          %4969 = vst.msk [vmem:[%s413 + $0x60] sm:$0xff] %vm4696, %v4841
          %4970 = vst.msk [vmem:[%s413 + $0x68] sm:$0xff] %vm4696, %v4842
          %4971 = vst.msk [vmem:[%s413 + $0x70] sm:$0xff] %vm4696, %v4843
          %4972 = vst.msk [vmem:[%s413 + $0x78] sm:$0xff] %vm4696, %v4844
          %4973 = vst.msk [vmem:[%s413 + $0x80] sm:$0xff] %vm4696, %v4845
          %4974 = vst.msk [vmem:[%s413 + $0x88] sm:$0xff] %vm4696, %v4846
          %4975 = vst.msk [vmem:[%s413 + $0x90] sm:$0xff] %vm4696, %v4847
          %4976 = vst.msk [vmem:[%s413 + $0x98] sm:$0xff] %vm4696, %v4848
          %4977 = vst.msk [vmem:[%s413 + $0xa0] sm:$0xff] %vm4696, %v4849
          %4978 = vst.msk [vmem:[%s413 + $0xa8] sm:$0xff] %vm4696, %v4850
          %4979 = vst.msk [vmem:[%s413 + $0xb0] sm:$0xff] %vm4696, %v4851
          %4980 = vst.msk [vmem:[%s413 + $0xb8] sm:$0xff] %vm4696, %v4852
          %4981 = vst.msk [vmem:[%s413 + $0xc0] sm:$0xff] %vm4696, %v4853
          %4982 = vst.msk [vmem:[%s413 + $0xc8] sm:$0xff] %vm4696, %v4854
          %4983 = vst.msk [vmem:[%s413 + $0xd0] sm:$0xff] %vm4696, %v4855
          %4984 = vst.msk [vmem:[%s413 + $0xd8] sm:$0xff] %vm4696, %v4856
          %4985 = vst.msk [vmem:[%s413 + $0xe0] sm:$0xff] %vm4696, %v4857
          %4986 = vst.msk [vmem:[%s413 + $0xe8] sm:$0xff] %vm4696, %v4858
          %4987 = vst.msk [vmem:[%s413 + $0xf0] sm:$0xff] %vm4696, %v4859
          %4988 = vst.msk [vmem:[%s413 + $0xf8] sm:$0xff] %vm4696, %v4860
          %4989 = vst.msk [vmem:[%s413 + $0x100] sm:$0xff] %vm4696, %v4861
          %4990 = vst.msk [vmem:[%s413 + $0x108] sm:$0xff] %vm4696, %v4862
          %4991 = vst.msk [vmem:[%s413 + $0x110] sm:$0xff] %vm4696, %v4863
          %4992 = vst.msk [vmem:[%s413 + $0x118] sm:$0xff] %vm4696, %v4864
          %4993 = vst.msk [vmem:[%s413 + $0x120] sm:$0xff] %vm4696, %v4865
          %4994 = vst.msk [vmem:[%s413 + $0x128] sm:$0xff] %vm4696, %v4866
          %4995 = vst.msk [vmem:[%s413 + $0x130] sm:$0xff] %vm4696, %v4867
          %4996 = vst.msk [vmem:[%s413 + $0x138] sm:$0xff] %vm4696, %v4868
          %4997 = vst.msk [vmem:[%s413 + $0x140] sm:$0xff] %vm4696, %v4869
          %4998 = vst.msk [vmem:[%s413 + $0x148] sm:$0xff] %vm4696, %v4870
          %4999 = vst.msk [vmem:[%s413 + $0x150] sm:$0xff] %vm4696, %v4871
          %5000 = vst.msk [vmem:[%s413 + $0x158] sm:$0xff] %vm4696, %v4872
          %5001 = vst.msk [vmem:[%s413 + $0x160] sm:$0xff] %vm4696, %v4873
          %5002 = vst.msk [vmem:[%s413 + $0x168] sm:$0xff] %vm4696, %v4874
          %5003 = vst.msk [vmem:[%s413 + $0x170] sm:$0xff] %vm4696, %v4875
          %5004 = vst.msk [vmem:[%s413 + $0x178] sm:$0xff] %vm4696, %v4876
          %5005 = vst.msk [vmem:[%s413 + $0x180] sm:$0xff] %vm4696, %v4877
          %5006 = vst.msk [vmem:[%s413 + $0x188] sm:$0xff] %vm4696, %v4878
          %5007 = vst.msk [vmem:[%s413 + $0x190] sm:$0xff] %vm4696, %v4879
          %5008 = vst.msk [vmem:[%s413 + $0x198] sm:$0xff] %vm4696, %v4880
          %5009 = vst.msk [vmem:[%s413 + $0x1a0] sm:$0xff] %vm4696, %v4881
          %5010 = vst.msk [vmem:[%s413 + $0x1a8] sm:$0xff] %vm4696, %v4882
          %5011 = vst.msk [vmem:[%s413 + $0x1b0] sm:$0xff] %vm4696, %v4883
          %5012 = vst.msk [vmem:[%s413 + $0x1b8] sm:$0xff] %vm4696, %v4884
          %5013 = vst.msk [vmem:[%s413 + $0x1c0] sm:$0xff] %vm4696, %v4885
          %5014 = vst.msk [vmem:[%s413 + $0x1c8] sm:$0xff] %vm4696, %v4886
          %5015 = vst.msk [vmem:[%s413 + $0x1d0] sm:$0xff] %vm4696, %v4887
          %5016 = vst.msk [vmem:[%s413 + $0x1d8] sm:$0xff] %vm4696, %v4888
          %5017 = vst.msk [vmem:[%s413 + $0x1e0] sm:$0xff] %vm4696, %v4889
          %5018 = vst.msk [vmem:[%s413 + $0x1e8] sm:$0xff] %vm4696, %v4890
          %5019 = vst.msk [vmem:[%s413 + $0x1f0] sm:$0xff] %vm4696, %v4891
          %5020 = vst.msk [vmem:[%s413 + $0x1f8] sm:$0xff] %vm4696, %v4892
          %5021 = vst.msk [vmem:[%s413 + $0x200] sm:$0xff] %vm4696, %v4893
          %5022 = vst.msk [vmem:[%s413 + $0x208] sm:$0xff] %vm4696, %v4894
          %5023 = vst.msk [vmem:[%s413 + $0x210] sm:$0xff] %vm4696, %v4895
          %5024 = vst.msk [vmem:[%s413 + $0x218] sm:$0xff] %vm4696, %v4896
          %5025 = vst.msk [vmem:[%s413 + $0x220] sm:$0xff] %vm4696, %v4897
          %5026 = vst.msk [vmem:[%s413 + $0x228] sm:$0xff] %vm4696, %v4898
          %5027 = vst.msk [vmem:[%s413 + $0x230] sm:$0xff] %vm4696, %v4899
          %5028 = vst.msk [vmem:[%s413 + $0x238] sm:$0xff] %vm4696, %v4900
          %5029 = vst.msk [vmem:[%s413 + $0x240] sm:$0xff] %vm4696, %v4901
          %5030 = vst.msk [vmem:[%s413 + $0x248] sm:$0xff] %vm4696, %v4902
          %5031 = vst.msk [vmem:[%s413 + $0x250] sm:$0xff] %vm4696, %v4903
          %5032 = vst.msk [vmem:[%s413 + $0x258] sm:$0xff] %vm4696, %v4904
          %5033 = vst.msk [vmem:[%s413 + $0x260] sm:$0xff] %vm4696, %v4905
          %5034 = vst.msk [vmem:[%s413 + $0x268] sm:$0xff] %vm4696, %v4906
          %5035 = vst.msk [vmem:[%s413 + $0x270] sm:$0xff] %vm4696, %v4907
          %5036 = vst.msk [vmem:[%s413 + $0x278] sm:$0xff] %vm4696, %v4908
          %5037 = vst.msk [vmem:[%s413 + $0x280] sm:$0xff] %vm4696, %v4909
          %5038 = vst.msk [vmem:[%s413 + $0x288] sm:$0xff] %vm4696, %v4910
          %5039 = vst.msk [vmem:[%s413 + $0x290] sm:$0xff] %vm4696, %v4911
          %5040 = vst.msk [vmem:[%s413 + $0x298] sm:$0xff] %vm4696, %v4912
          %5041 = vst.msk [vmem:[%s413 + $0x2a0] sm:$0xff] %vm4696, %v4913
          %5042 = vst.msk [vmem:[%s413 + $0x2a8] sm:$0xff] %vm4696, %v4914
          %5043 = vst.msk [vmem:[%s413 + $0x2b0] sm:$0xff] %vm4696, %v4915
          %5044 = vst.msk [vmem:[%s413 + $0x2b8] sm:$0xff] %vm4696, %v4916
          %5045 = vst.msk [vmem:[%s413 + $0x2c0] sm:$0xff] %vm4696, %v4917
          %5046 = vst.msk [vmem:[%s413 + $0x2c8] sm:$0xff] %vm4696, %v4918
          %5047 = vst.msk [vmem:[%s413 + $0x2d0] sm:$0xff] %vm4696, %v4919
          %5048 = vst.msk [vmem:[%s413 + $0x2d8] sm:$0xff] %vm4696, %v4920
          %5049 = vst.msk [vmem:[%s413 + $0x2e0] sm:$0xff] %vm4696, %v4921
          %5050 = vst.msk [vmem:[%s413 + $0x2e8] sm:$0xff] %vm4696, %v4922
          %5051 = vst.msk [vmem:[%s413 + $0x2f0] sm:$0xff] %vm4696, %v4923
          %5052 = vst.msk [vmem:[%s413 + $0x2f8] sm:$0xff] %vm4696, %v4924
          %5053 = vst.msk [vmem:[%s413 + $0x300] sm:$0xff] %vm4696, %v4925
          %5054 = vst.msk [vmem:[%s413 + $0x308] sm:$0xff] %vm4696, %v4926
          %5055 = vst.msk [vmem:[%s413 + $0x310] sm:$0xff] %vm4696, %v4927
          %5056 = vst.msk [vmem:[%s413 + $0x318] sm:$0xff] %vm4696, %v4928
          %5057 = vst.msk [vmem:[%s413 + $0x320] sm:$0xff] %vm4696, %v4929
          %5058 = vst.msk [vmem:[%s413 + $0x328] sm:$0xff] %vm4696, %v4930
          %5059 = vst.msk [vmem:[%s413 + $0x330] sm:$0xff] %vm4696, %v4931
          %5060 = vst.msk [vmem:[%s413 + $0x338] sm:$0xff] %vm4696, %v4932
          %5061 = vst.msk [vmem:[%s413 + $0x340] sm:$0xff] %vm4696, %v4933
          %5062 = vst.msk [vmem:[%s413 + $0x348] sm:$0xff] %vm4696, %v4934
          %5063 = vst.msk [vmem:[%s413 + $0x350] sm:$0xff] %vm4696, %v4935
          %5064 = vst.msk [vmem:[%s413 + $0x358] sm:$0xff] %vm4696, %v4936
          %5065 = vst.msk [vmem:[%s413 + $0x360] sm:$0xff] %vm4696, %v4937
          %5066 = vst.msk [vmem:[%s413 + $0x368] sm:$0xff] %vm4696, %v4938
          %5067 = vst.msk [vmem:[%s413 + $0x370] sm:$0xff] %vm4696, %v4939
          %5068 = vst.msk [vmem:[%s413 + $0x378] sm:$0xff] %vm4696, %v4940
          %5069 = vst.msk [vmem:[%s413 + $0x380] sm:$0xff] %vm4696, %v4941
          %5070 = vst.msk [vmem:[%s413 + $0x388] sm:$0xff] %vm4696, %v4942
          %5071 = vst.msk [vmem:[%s413 + $0x390] sm:$0xff] %vm4696, %v4943
          %5072 = vst.msk [vmem:[%s413 + $0x398] sm:$0xff] %vm4696, %v4944
          %5073 = vst.msk [vmem:[%s413 + $0x3a0] sm:$0xff] %vm4696, %v4945
          %5074 = vst.msk [vmem:[%s413 + $0x3a8] sm:$0xff] %vm4696, %v4946
          %5075 = vst.msk [vmem:[%s413 + $0x3b0] sm:$0xff] %vm4696, %v4947
          %5076 = vst.msk [vmem:[%s413 + $0x3b8] sm:$0xff] %vm4696, %v4948
          %5077 = vst.msk [vmem:[%s413 + $0x3c0] sm:$0xff] %vm4696, %v4949
          %5078 = vst.msk [vmem:[%s413 + $0x3c8] sm:$0xff] %vm4696, %v4950
          %5079 = vst.msk [vmem:[%s413 + $0x3d0] sm:$0xff] %vm4696, %v4951
          %5080 = vst.msk [vmem:[%s413 + $0x3d8] sm:$0xff] %vm4696, %v4952
          %5081 = vst.msk [vmem:[%s413 + $0x3e0] sm:$0xff] %vm4696, %v4953
          %5082 = vst.msk [vmem:[%s413 + $0x3e8] sm:$0xff] %vm4696, %v4954
          %5083 = vst.msk [vmem:[%s413 + $0x3f0] sm:$0xff] %vm4696, %v4955
          %5084 = vst.msk [vmem:[%s413 + $0x3f8] sm:$0xff] %vm4696, %v4956
        $region106: #{tpu_custom_call.1} parent=93 // pred_fallthru
          _
        %p5085 = scmp.lt.s32.totalorder %s25, 1
        %s5086 = scalar_select %p5085, %s25, 1
        %s5087 = smul.addr %s5086, 128
        %s5088 = smul.addr %s5087, 8
        %s5089 = scalar_lea.vmem %s10, %s5088
        // Predicated region
        $region107: #{tpu_custom_call.1} parent=93 // pred_check
          %p5090 = pneg %p268
        $region108: #{tpu_custom_call.1} parent=93 // pred_check_branch
          %5092 = sbr.rel (%p5090) target = $region110
        $region109: #{tpu_custom_call.1} parent=93 // pred_region
          _
        $region110: #{tpu_custom_call.1} parent=93 // pred_fallthru
          _
      $region94: #{tpu_custom_call.1} parent=5 // pred_fallthru
        _
      %p5093 = scmp.le.s32.totalorder 2, %s16
      // Predicated region
      $region111: #{tpu_custom_call.1} parent=5 // pred_check
        %p5094 = pneg %p5093
      $region112: #{tpu_custom_call.1} parent=5 // pred_check_branch
        %5096 = sbr.rel (%p5094) target = $region114
      $region113: #{tpu_custom_call.1} parent=5 // pred_region
        %s5097 = ssub.s32 %s16, 2
        // Predicated region
        $region115: #{tpu_custom_call.1} parent=113 // pred_check
          %p5098 = pneg %p274
        $region116: #{tpu_custom_call.1} parent=113 // pred_check_branch
          %5100 = sbr.rel (%p5098) target = $region118
        $region117: #{tpu_custom_call.1} parent=113 // pred_region
          %p5101 = scmp.lt.s32.totalorder %s27, 1
          %s5102 = scalar_select %p5101, %s27, 1
          %s5103 = smul.addr %s5102, 128
          %s5104 = smul.addr %s5103, 8
          %s5105 = scalar_lea.vmem %s10, %s5104
        $region118: #{tpu_custom_call.1} parent=113 // pred_fallthru
          _
      $region114: #{tpu_custom_call.1} parent=5 // pred_fallthru
        _
    $region6: #{tpu_custom_call.1} parent=1 // loop_footer
      %s20 = sadd.s32 1, %s16
    $region7: #{tpu_custom_call.1} parent=1 // loop_footer_branch
      %15 = sbr.rel target = $region3
    $region8: #{tpu_custom_call.1} parent=1 // loop_exit
      _

</llo_original>
